<compile_context>
chip_gen: v7x
topology: tpu7x:2x2x1
jax: 0.10.0
libtpu: 0.0.40
codegen_flags: <defaults>
</compile_context>

<pallas_src>
import math

import jax
import jax.numpy as jnp
from jax.experimental import pallas as pl
from jax.experimental.pallas import tpu as pltpu

EMBED_DIM = 32                    # prompt_encoder.embed_dim
MASK_IN_CHANS = 16                # prompt_encoder.mask_in_chans
IMAGE_EMBEDDING_SIZE = (16, 16)   # (H, W) of image embedding
INPUT_IMAGE_SIZE = (64, 64)       # input image; mask input = 4x embedding size
LN_EPS = 1e-6
_C4 = MASK_IN_CHANS // 4          # channels after the first 2x2/s2 conv
_GELU_C = math.sqrt(2.0 / math.pi)
_TWO_PI = 2.0 * math.pi


# --------------------------------------------------------------------------
# in-kernel math helpers (all VPU/EUP; channel axis = sublanes, spatial = lanes)
# --------------------------------------------------------------------------
def _gelu(x):
    # tanh-approx GELU (|err| vs exact erf GELU < ~3e-4, well inside the test
    # tolerance); tanh runs on the otherwise-idle EUP slot.
    return 0.5 * x * (1.0 + jnp.tanh(_GELU_C * (x + 0.044715 * x * x * x)))


def _ln_channels(y, g, b):
    # LayerNorm2d in (C, S) layout: normalize over the channel (sublane) axis.
    mu = jnp.mean(y, axis=0, keepdims=True)
    var = jnp.mean((y - mu) ** 2, axis=0, keepdims=True)
    return (y - mu) * jax.lax.rsqrt(var + LN_EPS) * g + b


def _vpu_fma_rows(w_cols, rows):
    # sum_k w_cols[:, k:k+1] * rows[k]   (rows[k] is (1, S))
    # Unrolled VPU outer-product FMAs; deliberately NOT jnp.dot -- sub-32-wide
    # matmuls would waste the MXU (multi-pass f32 + MRF/MRB pop overhead).
    acc = None
    for k, r in enumerate(rows):
        term = w_cols[:, k:k + 1] * r
        acc = term if acc is None else acc + term
    return acc


# --------------------------------------------------------------------------
# The fused kernel: sparse embeddings + full mask_downscaling, one batch/block
# --------------------------------------------------------------------------
def _prompt_encoder_kernel(
        x_ref, coords_ref, labels_ref,                   # per-batch inputs
        gauss_ref, emb_ref,                              # sparse-path params
        w1_ref, b1_ref, g1_ref, bt1_ref,                 # conv1 + LN1
        w2_ref, b2_ref, g2_ref, bt2_ref,                 # conv2 + LN2
        w3_ref, b3_ref,                                  # 1x1 conv
        sparse_ref, dense_ref):
    # ---------------- sparse: random-Fourier PE + label embeddings ----------
    c = coords_ref[...] + 0.5                            # (Np, 2), pixel-center shift
    u = c[:, 0:1] * (2.0 / INPUT_IMAGE_SIZE[1]) - 1.0    # x / W -> [-1, 1]
    v = c[:, 1:2] * (2.0 / INPUT_IMAGE_SIZE[0]) - 1.0    # y / H -> [-1, 1]
    g = gauss_ref[...]                                   # (2, C//2)
    proj = _TWO_PI * (u * g[0:1, :] + v * g[1:2, :])     # (Np, C//2)
    pe = jnp.concatenate([jnp.sin(proj), jnp.cos(proj)], axis=-1)   # (Np, C)

    lab = labels_ref[...]                                # (Np, 1) int32
    emb = emb_ref[...]                                   # (5, C) = [not_a_point, p0, p1, box_tl, box_br]
    out = pe * jnp.where(lab >= 0, 1.0, 0.0)             # zero PE at padding points
    for j in range(5):                                   # one-hot FMA: label j-1 -> emb row j
        out = out + jnp.where(lab == j - 1, 1.0, 0.0) * emb[j:j + 1, :]
    sparse_ref[...] = out

    # ---------------- dense: fused mask_downscaling in (C, H*W) layout ------
    xt = x_ref[...]                                      # (16, S): 4x4 space-to-depth taps, t = dh4*4+dw4
    w1 = w1_ref[...]                                     # (c4, 4)  [out_ch, dh*2+dw]
    b1 = b1_ref[...]                                     # (c4, 1)
    g1 = g1_ref[...]
    bt1 = bt1_ref[...]

    # Stage 1 (conv 2x2/s2, 1->c4) computed separately per stage-2 tap parity
    # (kh, kw), so its outputs are already grouped for stage 2.
    a1 = []                                              # 4 groups, each (c4, S)
    for kh in range(2):
        for kw in range(2):
            rows = []
            for dh in range(2):
                for dw in range(2):
                    t = (2 * kh + dh) * 4 + (2 * kw + dw)
                    rows.append(xt[t:t + 1, :])          # (1, S)
            y1 = _vpu_fma_rows(w1, rows) + b1            # (c4, S)
            a1.append(_gelu(_ln_channels(y1, g1, bt1)))

    # Stage 2 (conv 2x2/s2, c4->16): K = 4 taps x c4 channels = 16 FMAs.
    rows2 = [a1[p][ci:ci + 1, :] for p in range(4) for ci in range(_C4)]
    y2 = _vpu_fma_rows(w2_ref[...], rows2) + b2_ref[...]          # (16, S)
    a2 = _gelu(_ln_channels(y2, g2_ref[...], bt2_ref[...]))

    # Stage 3 (conv 1x1, 16->32).
    rows3 = [a2[k:k + 1, :] for k in range(MASK_IN_CHANS)]
    dense_ref[...] = _vpu_fma_rows(w3_ref[...], rows3) + b3_ref[...]   # (32, S)


# --------------------------------------------------------------------------
# wrapper glue
# --------------------------------------------------------------------------
def _prep_taps(masks):
    """(B, 1, 4H, 4W) mask -> (B, 16, H*W) space-to-depth tap slabs (t = dh4*4+dw4)."""
    b = masks.shape[0]
    h, w = IMAGE_EMBEDDING_SIZE
    x = masks.astype(jnp.float32).reshape(b, h, 4, w, 4)   # in-channels == 1
    x = jnp.transpose(x, (0, 2, 4, 1, 3))                  # (B, 4, 4, H, W)
    return x.reshape(b, 16, h * w)


def _fused_prompt_encode(params, taps, coords, labels):
    """One pallas_call for sparse + dense; grid over batch ('parallel' => v7x 2 TCs)."""
    b, n_tap, s = taps.shape
    np_ = coords.shape[1]
    col = lambda a: a.reshape(-1, 1)
    # matmul-layout weights (tiny; constant-folded under jit)
    w1 = params["w1_hwio"].reshape(4, _C4).T                      # (c4, 4)
    w2 = params["w2_hwio"].reshape(4 * _C4, MASK_IN_CHANS).T      # (16, 16)  k = tap*4 + ci
    w3 = params["w3"].T                                           # (32, 16)

    args = (taps, coords.astype(jnp.float32),
            labels.reshape(b, np_, 1).astype(jnp.int32),
            params["pe_gauss"], params["emb_table"],
            w1, col(params["b1"]), col(params["ln1_w"]), col(params["ln1_b"]),
            w2, col(params["b2"]), col(params["ln2_w"]), col(params["ln2_b"]),
            w3, col(params["b3"]))

    def _const2d(a):   # whole-array block, same index every step -> stays resident
        return pl.BlockSpec(a.shape, lambda i: (0, 0))

    in_specs = [pl.BlockSpec((None, n_tap, s), lambda i: (i, 0, 0)),
                pl.BlockSpec((None, np_, 2), lambda i: (i, 0, 0)),
                pl.BlockSpec((None, np_, 1), lambda i: (i, 0, 0))] + \
               [_const2d(a) for a in args[3:]]
    out_specs = (pl.BlockSpec((None, np_, EMBED_DIM), lambda i: (i, 0, 0)),
                 pl.BlockSpec((None, EMBED_DIM, s), lambda i: (i, 0, 0)))
    out_shape = (jax.ShapeDtypeStruct((b, np_, EMBED_DIM), jnp.float32),
                 jax.ShapeDtypeStruct((b, EMBED_DIM, s), jnp.float32))

    return pl.pallas_call(
        _prompt_encoder_kernel,
        grid=(b,),
        in_specs=in_specs,
        out_specs=out_specs,
        out_shape=out_shape,
        compiler_params=pltpu.CompilerParams(
            dimension_semantics=("parallel",),        # batch split across v7x TCs
            vmem_limit_bytes=32 * 1024 * 1024),       # explicit budget (v7x = 64 MiB phys)
    )(*args)


def _sparse_jax(params, coords, labels):
    # Plain-JAX sparse path used only when masks is None (per perf review: a
    # dedicated pallas_call for ~2.5 KiB of output is pure dispatch overhead).
    c = coords.astype(jnp.float32) + 0.5
    u = c[..., 0:1] * (2.0 / INPUT_IMAGE_SIZE[1]) - 1.0
    v = c[..., 1:2] * (2.0 / INPUT_IMAGE_SIZE[0]) - 1.0
    g = params["pe_gauss"]
    proj = _TWO_PI * (u * g[0] + v * g[1])
    pe = jnp.concatenate([jnp.sin(proj), jnp.cos(proj)], axis=-1)
    lab = labels.astype(jnp.int32)[..., None]
    out = pe * jnp.where(lab >= 0, 1.0, 0.0)
    for j in range(5):
        out = out + jnp.where(lab == j - 1, 1.0, 0.0) * params["emb_table"][j]
    return out


def prompt_encoder_forward(params, points=None, boxes=None, masks=None):
    """Mirrors Sam.prompt_encoder(points, boxes, masks) -> (sparse, dense)."""
    if points is not None:
        bs = points[0].shape[0]
    elif boxes is not None:
        bs = boxes.shape[0]
    elif masks is not None:
        bs = masks.shape[0]
    else:
        bs = 1

    pieces_c, pieces_l = [], []
    if points is not None:
        coords, labels = points
        coords = coords.astype(jnp.float32)
        labels = labels.astype(jnp.int32)
        if boxes is None:   # pad with a dummy "not a point"
            coords = jnp.concatenate([coords, jnp.zeros((bs, 1, 2), jnp.float32)], axis=1)
            labels = jnp.concatenate([labels, jnp.full((bs, 1), -1, jnp.int32)], axis=1)
        pieces_c.append(coords)
        pieces_l.append(labels)
    if boxes is not None:
        pieces_c.append(boxes.astype(jnp.float32).reshape(bs, 2, 2))
        pieces_l.append(jnp.broadcast_to(jnp.array([2, 3], jnp.int32), (bs, 2)))

    has_prompts = bool(pieces_c)
    if has_prompts:
        all_c = jnp.concatenate(pieces_c, axis=1)
        all_l = jnp.concatenate(pieces_l, axis=1)
    else:   # dummy prompt row; sliced back to 0 length below
        all_c = jnp.zeros((bs, 1, 2), jnp.float32)
        all_l = jnp.full((bs, 1), -1, jnp.int32)

    if masks is not None:
        taps = _prep_taps(masks)
        sparse, dense_flat = _fused_prompt_encode(params, taps, all_c, all_l)
        dense = dense_flat.reshape(bs, EMBED_DIM, *IMAGE_EMBEDDING_SIZE)  # free: lanes already (h, w)
    else:
        # TODO(synk): masks=None / prompts-only path kept in plain JAX per perf
        # review (dispatch-overhead bound); only the mask path needs Pallas.
        sparse = _sparse_jax(params, all_c, all_l)
        dense = jnp.broadcast_to(
            params["no_mask_embed"].reshape(1, EMBED_DIM, 1, 1),
            (bs, EMBED_DIM, IMAGE_EMBEDDING_SIZE[0], IMAGE_EMBEDDING_SIZE[1]))

    if not has_prompts:
        sparse = sparse[:, :0, :]
    return sparse, dense


# --------------------------------------------------------------------------
# deterministic synthetic parameters (shapes from SAM PromptEncoder __init__)
# --------------------------------------------------------------------------
def init_params(key):
    ks = jax.random.split(key, 13)
    p = {}
    p["pe_gauss"] = jax.random.normal(ks[0], (2, EMBED_DIM // 2), jnp.float32)
    # rows: [not_a_point_embed, point_embeddings[0..3]]
    p["emb_table"] = jax.random.normal(ks[1], (5, EMBED_DIM), jnp.float32)
    p["no_mask_embed"] = jax.random.normal(ks[2], (1, EMBED_DIM), jnp.float32)
    p["w1_hwio"] = 0.5 * jax.random.normal(ks[3], (2, 2, 1, _C4), jnp.float32)
    p["b1"] = 0.1 * jax.random.normal(ks[4], (_C4,), jnp.float32)
    p["ln1_w"] = 1.0 + 0.1 * jax.random.normal(ks[5], (_C4,), jnp.float32)
    p["ln1_b"] = 0.1 * jax.random.normal(ks[6], (_C4,), jnp.float32)
    p["w2_hwio"] = 0.5 * jax.random.normal(ks[7], (2, 2, _C4, MASK_IN_CHANS), jnp.float32)
    p["b2"] = 0.1 * jax.random.normal(ks[8], (MASK_IN_CHANS,), jnp.float32)
    p["ln2_w"] = 1.0 + 0.1 * jax.random.normal(ks[9], (MASK_IN_CHANS,), jnp.float32)
    p["ln2_b"] = 0.1 * jax.random.normal(ks[10], (MASK_IN_CHANS,), jnp.float32)
    p["w3"] = 0.5 * jax.random.normal(ks[11], (MASK_IN_CHANS, EMBED_DIM), jnp.float32)  # 1x1 conv
    p["b3"] = 0.1 * jax.random.normal(ks[12], (EMBED_DIM,), jnp.float32)
    return p


# --------------------------------------------------------------------------
# pure-JAX reference (exact erf GELU / conv_general_dilated), for sanity check
# --------------------------------------------------------------------------
def _ref_pe(params, coords):
    c = coords + 0.5
    c = c / jnp.array([INPUT_IMAGE_SIZE[1], INPUT_IMAGE_SIZE[0]], jnp.float32)
    c = 2.0 * c - 1.0
    g = params["pe_gauss"]
    proj = _TWO_PI * (c[..., 0:1] * g[0] + c[..., 1:2] * g[1])
    return jnp.concatenate([jnp.sin(proj), jnp.cos(proj)], axis=-1)


def ref_sparse(params, coords, labels, boxes):
    emb = params["emb_table"]
    pe = _ref_pe(params, coords)
    pt = pe + jnp.where((labels == 0)[..., None], emb[1], 0.0) \
            + jnp.where((labels == 1)[..., None], emb[2], 0.0)
    box_pe = _ref_pe(params, boxes.reshape(-1, 2, 2))
    box_emb = box_pe + jnp.stack([emb[3], emb[4]])[None]
    return jnp.concatenate([pt, box_emb], axis=1)


def ref_dense(params, masks):
    hi = jax.lax.Precision.HIGHEST

    def conv(x, w_hwio, b, stride):
        w = jnp.transpose(w_hwio, (3, 2, 0, 1))  # OIHW
        y = jax.lax.conv_general_dilated(x, w, (stride, stride), "VALID",
                                         dimension_numbers=("NCHW", "OIHW", "NCHW"),
                                         precision=hi)
        return y + b.reshape(1, -1, 1, 1)

    def ln2d(x, w, b):
        u = x.mean(axis=1, keepdims=True)
        s = ((x - u) ** 2).mean(axis=1, keepdims=True)
        x = (x - u) / jnp.sqrt(s + LN_EPS)
        return x * w.reshape(1, -1, 1, 1) + b.reshape(1, -1, 1, 1)

    x = conv(masks, params["w1_hwio"], params["b1"], 2)
    x = jax.nn.gelu(ln2d(x, params["ln1_w"], params["ln1_b"]), approximate=False)
    x = conv(x, params["w2_hwio"], params["b2"], 2)
    x = jax.nn.gelu(ln2d(x, params["ln2_w"], params["ln2_b"]), approximate=False)
    x = jnp.einsum("bchw,cd->bdhw", x, params["w3"], precision=hi) + params["b3"].reshape(1, -1, 1, 1)
    return x


# --------------------------------------------------------------------------
if __name__ == "__main__":
    key = jax.random.PRNGKey(0)
    kp, kd = jax.random.split(key)
    params = init_params(kp)

    B, NP = 2, 8
    kc, kl, kb, km = jax.random.split(kd, 4)
    point_coords = jax.random.uniform(kc, (B, NP, 2), jnp.float32, 0.0, float(INPUT_IMAGE_SIZE[1]))
    point_labels = jax.random.randint(kl, (B, NP), 0, 2)
    boxes = jax.random.uniform(kb, (B, 4), jnp.float32, 0.0, float(INPUT_IMAGE_SIZE[1]))
    masks = jax.random.normal(
        km, (B, 1, 4 * IMAGE_EMBEDDING_SIZE[0], 4 * IMAGE_EMBEDDING_SIZE[1]), jnp.float32)

    fwd = jax.jit(lambda pc, plab, bx, mk: prompt_encoder_forward(params, (pc, plab), bx, mk))
    sparse, dense = fwd(point_coords, point_labels, boxes, masks)
    jax.block_until_ready((sparse, dense))

    assert sparse.shape == (B, NP + 2, EMBED_DIM)
    assert dense.shape == (B, EMBED_DIM, IMAGE_EMBEDDING_SIZE[0], IMAGE_EMBEDDING_SIZE[1])

    # sanity check vs. pure-JAX reference (loose tol: tanh-GELU approximation)
    ref_s = ref_sparse(params, point_coords, point_labels, boxes)
    ref_d = ref_dense(params, masks)
    assert bool(jnp.allclose(sparse, ref_s, atol=5e-2, rtol=5e-2))
    assert bool(jnp.allclose(dense, ref_d, atol=5e-2, rtol=5e-2))

    # masks=None path (no_mask_embed broadcast; plain-JAX sparse)
    sp2, de2 = prompt_encoder_forward(params, (point_coords, point_labels), None, None)
    assert sp2.shape == (B, NP + 1, EMBED_DIM)
    assert de2.shape == (B, EMBED_DIM, IMAGE_EMBEDDING_SIZE[0], IMAGE_EMBEDDING_SIZE[1])

    print("KERNEL_OK")
</pallas_src>

<mosaic_0001>
module attributes {stable_mosaic.version = 11 : i64} {
  func.func @_prompt_encoder_kernel(%arg0: i32, %arg1: memref<1x16x256xf32, #tpu.memory_space<vmem>>, %arg2: memref<1x10x2xf32, #tpu.memory_space<vmem>>, %arg3: memref<1x10x1xi32, #tpu.memory_space<vmem>>, %arg4: memref<2x16xf32, #tpu.memory_space<vmem>>, %arg5: memref<5x32xf32, #tpu.memory_space<vmem>>, %arg6: memref<4x4xf32, #tpu.memory_space<vmem>>, %arg7: memref<4x1xf32, #tpu.memory_space<vmem>>, %arg8: memref<4x1xf32, #tpu.memory_space<vmem>>, %arg9: memref<4x1xf32, #tpu.memory_space<vmem>>, %arg10: memref<16x16xf32, #tpu.memory_space<vmem>>, %arg11: memref<16x1xf32, #tpu.memory_space<vmem>>, %arg12: memref<16x1xf32, #tpu.memory_space<vmem>>, %arg13: memref<16x1xf32, #tpu.memory_space<vmem>>, %arg14: memref<32x16xf32, #tpu.memory_space<vmem>>, %arg15: memref<32x1xf32, #tpu.memory_space<vmem>>, %arg16: memref<1x10x32xf32, #tpu.memory_space<vmem>>, %arg17: memref<1x32x256xf32, #tpu.memory_space<vmem>>) attributes {dimension_semantics = [#tpu.dimension_semantics<parallel>], iteration_bounds = array<i64: 2>, scalar_prefetch = 0 : i64, scratch_operands = 0 : i64, tpu.core_type = #tpu.core_type<tc>, window_params = [{transform_indices = @transform_0, window_bounds = array<i64: 1, 16, 256>}, {transform_indices = @transform_1, window_bounds = array<i64: 1, 10, 2>}, {transform_indices = @transform_2, window_bounds = array<i64: 1, 10, 1>}, {pipeline_mode = #tpu.pipeline_mode<synchronous>, transform_indices = @transform_3, window_bounds = array<i64: 2, 16>}, {pipeline_mode = #tpu.pipeline_mode<synchronous>, transform_indices = @transform_4, window_bounds = array<i64: 5, 32>}, {pipeline_mode = #tpu.pipeline_mode<synchronous>, transform_indices = @transform_5, window_bounds = array<i64: 4, 4>}, {pipeline_mode = #tpu.pipeline_mode<synchronous>, transform_indices = @transform_6, window_bounds = array<i64: 4, 1>}, {pipeline_mode = #tpu.pipeline_mode<synchronous>, transform_indices = @transform_7, window_bounds = array<i64: 4, 1>}, {pipeline_mode = #tpu.pipeline_mode<synchronous>, transform_indices = @transform_8, window_bounds = array<i64: 4, 1>}, {pipeline_mode = #tpu.pipeline_mode<synchronous>, transform_indices = @transform_9, window_bounds = array<i64: 16, 16>}, {pipeline_mode = #tpu.pipeline_mode<synchronous>, transform_indices = @transform_10, window_bounds = array<i64: 16, 1>}, {pipeline_mode = #tpu.pipeline_mode<synchronous>, transform_indices = @transform_11, window_bounds = array<i64: 16, 1>}, {pipeline_mode = #tpu.pipeline_mode<synchronous>, transform_indices = @transform_12, window_bounds = array<i64: 16, 1>}, {pipeline_mode = #tpu.pipeline_mode<synchronous>, transform_indices = @transform_13, window_bounds = array<i64: 32, 16>}, {pipeline_mode = #tpu.pipeline_mode<synchronous>, transform_indices = @transform_14, window_bounds = array<i64: 32, 1>}, {transform_indices = @transform_15, window_bounds = array<i64: 1, 10, 32>}, {transform_indices = @transform_16, window_bounds = array<i64: 1, 32, 256>}]} {
    %c0 = arith.constant 0 : index
    %c0_0 = arith.constant 0 : index
    %c0_1 = arith.constant 0 : index
    %0 = vector.load %arg2[%c0, %c0_0, %c0_1] : memref<1x10x2xf32, #tpu.memory_space<vmem>>, vector<1x10x2xf32>
    %1 = vector.shape_cast %0 : vector<1x10x2xf32> to vector<10x2xf32>
    %cst = arith.constant 5.000000e-01 : f32
    %2 = vector.broadcast %cst : f32 to vector<10x2xf32>
    %3 = arith.addf %1, %2 : vector<10x2xf32>
    %4 = vector.extract_strided_slice %3 {offsets = [0, 0], sizes = [10, 1], strides = [1, 1]} : vector<10x2xf32> to vector<10x1xf32>
    %cst_2 = arith.constant 3.125000e-02 : f32
    %5 = vector.broadcast %cst_2 : f32 to vector<10x1xf32>
    %6 = arith.mulf %4, %5 : vector<10x1xf32>
    %cst_3 = arith.constant 1.000000e+00 : f32
    %7 = vector.broadcast %cst_3 : f32 to vector<10x1xf32>
    %8 = arith.subf %6, %7 : vector<10x1xf32>
    %9 = vector.extract_strided_slice %3 {offsets = [0, 1], sizes = [10, 1], strides = [1, 1]} : vector<10x2xf32> to vector<10x1xf32>
    %cst_4 = arith.constant 3.125000e-02 : f32
    %10 = vector.broadcast %cst_4 : f32 to vector<10x1xf32>
    %11 = arith.mulf %9, %10 : vector<10x1xf32>
    %cst_5 = arith.constant 1.000000e+00 : f32
    %12 = vector.broadcast %cst_5 : f32 to vector<10x1xf32>
    %13 = arith.subf %11, %12 : vector<10x1xf32>
    %c0_6 = arith.constant 0 : index
    %c0_7 = arith.constant 0 : index
    %14 = vector.load %arg4[%c0_6, %c0_7] : memref<2x16xf32, #tpu.memory_space<vmem>>, vector<2x16xf32>
    %15 = vector.extract_strided_slice %14 {offsets = [0, 0], sizes = [1, 16], strides = [1, 1]} : vector<2x16xf32> to vector<1x16xf32>
    %16 = vector.broadcast %8 : vector<10x1xf32> to vector<10x16xf32>
    %17 = vector.broadcast %15 : vector<1x16xf32> to vector<10x16xf32>
    %18 = arith.mulf %16, %17 : vector<10x16xf32>
    %19 = vector.extract_strided_slice %14 {offsets = [1, 0], sizes = [1, 16], strides = [1, 1]} : vector<2x16xf32> to vector<1x16xf32>
    %20 = vector.broadcast %13 : vector<10x1xf32> to vector<10x16xf32>
    %21 = vector.broadcast %19 : vector<1x16xf32> to vector<10x16xf32>
    %22 = arith.mulf %20, %21 : vector<10x16xf32>
    %23 = arith.addf %18, %22 : vector<10x16xf32>
    %cst_8 = arith.constant 6.28318548 : f32
    %24 = vector.broadcast %cst_8 : f32 to vector<10x16xf32>
    %25 = arith.mulf %24, %23 : vector<10x16xf32>
    %26 = math.sin %25 : vector<10x16xf32>
    %27 = math.cos %25 : vector<10x16xf32>
    %28 = tpu.concatenate %26, %27 in 1 : vector<10x16xf32>, vector<10x16xf32> -> vector<10x32xf32>
    %c0_9 = arith.constant 0 : index
    %c0_10 = arith.constant 0 : index
    %c0_11 = arith.constant 0 : index
    %29 = vector.load %arg3[%c0_9, %c0_10, %c0_11] : memref<1x10x1xi32, #tpu.memory_space<vmem>>, vector<1x10x1xi32>
    %30 = vector.shape_cast %29 : vector<1x10x1xi32> to vector<10x1xi32>
    %c0_12 = arith.constant 0 : index
    %c0_13 = arith.constant 0 : index
    %31 = vector.load %arg5[%c0_12, %c0_13] : memref<5x32xf32, #tpu.memory_space<vmem>>, vector<5x32xf32>
    %c0_i32 = arith.constant 0 : i32
    %32 = vector.broadcast %c0_i32 : i32 to vector<10x1xi32>
    %33 = arith.cmpi sge, %30, %32 : vector<10x1xi32>
    %cst_14 = arith.constant 1.000000e+00 : f32
    %cst_15 = arith.constant 0.000000e+00 : f32
    %34 = vector.broadcast %cst_14 : f32 to vector<10x1xf32>
    %35 = vector.broadcast %cst_15 : f32 to vector<10x1xf32>
    %36 = arith.select %33, %34, %35 : vector<10x1xi1>, vector<10x1xf32>
    %37 = vector.broadcast %36 : vector<10x1xf32> to vector<10x32xf32>
    %38 = arith.mulf %28, %37 : vector<10x32xf32>
    %c-1_i32 = arith.constant -1 : i32
    %39 = vector.broadcast %c-1_i32 : i32 to vector<10x1xi32>
    %40 = arith.cmpi eq, %30, %39 : vector<10x1xi32>
    %cst_16 = arith.constant 1.000000e+00 : f32
    %cst_17 = arith.constant 0.000000e+00 : f32
    %41 = vector.broadcast %cst_16 : f32 to vector<10x1xf32>
    %42 = vector.broadcast %cst_17 : f32 to vector<10x1xf32>
    %43 = arith.select %40, %41, %42 : vector<10x1xi1>, vector<10x1xf32>
    %44 = vector.extract_strided_slice %31 {offsets = [0, 0], sizes = [1, 32], strides = [1, 1]} : vector<5x32xf32> to vector<1x32xf32>
    %45 = vector.broadcast %43 : vector<10x1xf32> to vector<10x32xf32>
    %46 = vector.broadcast %44 : vector<1x32xf32> to vector<10x32xf32>
    %47 = arith.mulf %45, %46 : vector<10x32xf32>
    %48 = arith.addf %38, %47 : vector<10x32xf32>
    %c0_i32_18 = arith.constant 0 : i32
    %49 = vector.broadcast %c0_i32_18 : i32 to vector<10x1xi32>
    %50 = arith.cmpi eq, %30, %49 : vector<10x1xi32>
    %cst_19 = arith.constant 1.000000e+00 : f32
    %cst_20 = arith.constant 0.000000e+00 : f32
    %51 = vector.broadcast %cst_19 : f32 to vector<10x1xf32>
    %52 = vector.broadcast %cst_20 : f32 to vector<10x1xf32>
    %53 = arith.select %50, %51, %52 : vector<10x1xi1>, vector<10x1xf32>
    %54 = vector.extract_strided_slice %31 {offsets = [1, 0], sizes = [1, 32], strides = [1, 1]} : vector<5x32xf32> to vector<1x32xf32>
    %55 = vector.broadcast %53 : vector<10x1xf32> to vector<10x32xf32>
    %56 = vector.broadcast %54 : vector<1x32xf32> to vector<10x32xf32>
    %57 = arith.mulf %55, %56 : vector<10x32xf32>
    %58 = arith.addf %48, %57 : vector<10x32xf32>
    %c1_i32 = arith.constant 1 : i32
    %59 = vector.broadcast %c1_i32 : i32 to vector<10x1xi32>
    %60 = arith.cmpi eq, %30, %59 : vector<10x1xi32>
    %cst_21 = arith.constant 1.000000e+00 : f32
    %cst_22 = arith.constant 0.000000e+00 : f32
    %61 = vector.broadcast %cst_21 : f32 to vector<10x1xf32>
    %62 = vector.broadcast %cst_22 : f32 to vector<10x1xf32>
    %63 = arith.select %60, %61, %62 : vector<10x1xi1>, vector<10x1xf32>
    %64 = vector.extract_strided_slice %31 {offsets = [2, 0], sizes = [1, 32], strides = [1, 1]} : vector<5x32xf32> to vector<1x32xf32>
    %65 = vector.broadcast %63 : vector<10x1xf32> to vector<10x32xf32>
    %66 = vector.broadcast %64 : vector<1x32xf32> to vector<10x32xf32>
    %67 = arith.mulf %65, %66 : vector<10x32xf32>
    %68 = arith.addf %58, %67 : vector<10x32xf32>
    %c2_i32 = arith.constant 2 : i32
    %69 = vector.broadcast %c2_i32 : i32 to vector<10x1xi32>
    %70 = arith.cmpi eq, %30, %69 : vector<10x1xi32>
    %cst_23 = arith.constant 1.000000e+00 : f32
    %cst_24 = arith.constant 0.000000e+00 : f32
    %71 = vector.broadcast %cst_23 : f32 to vector<10x1xf32>
    %72 = vector.broadcast %cst_24 : f32 to vector<10x1xf32>
    %73 = arith.select %70, %71, %72 : vector<10x1xi1>, vector<10x1xf32>
    %74 = vector.extract_strided_slice %31 {offsets = [3, 0], sizes = [1, 32], strides = [1, 1]} : vector<5x32xf32> to vector<1x32xf32>
    %75 = vector.broadcast %73 : vector<10x1xf32> to vector<10x32xf32>
    %76 = vector.broadcast %74 : vector<1x32xf32> to vector<10x32xf32>
    %77 = arith.mulf %75, %76 : vector<10x32xf32>
    %78 = arith.addf %68, %77 : vector<10x32xf32>
    %c3_i32 = arith.constant 3 : i32
    %79 = vector.broadcast %c3_i32 : i32 to vector<10x1xi32>
    %80 = arith.cmpi eq, %30, %79 : vector<10x1xi32>
    %cst_25 = arith.constant 1.000000e+00 : f32
    %cst_26 = arith.constant 0.000000e+00 : f32
    %81 = vector.broadcast %cst_25 : f32 to vector<10x1xf32>
    %82 = vector.broadcast %cst_26 : f32 to vector<10x1xf32>
    %83 = arith.select %80, %81, %82 : vector<10x1xi1>, vector<10x1xf32>
    %84 = vector.extract_strided_slice %31 {offsets = [4, 0], sizes = [1, 32], strides = [1, 1]} : vector<5x32xf32> to vector<1x32xf32>
    %85 = vector.broadcast %83 : vector<10x1xf32> to vector<10x32xf32>
    %86 = vector.broadcast %84 : vector<1x32xf32> to vector<10x32xf32>
    %87 = arith.mulf %85, %86 : vector<10x32xf32>
    %88 = arith.addf %78, %87 : vector<10x32xf32>
    %c0_27 = arith.constant 0 : index
    %c0_28 = arith.constant 0 : index
    %c0_29 = arith.constant 0 : index
    %89 = vector.load %arg16[%c0_27, %c0_28, %c0_29] : memref<1x10x32xf32, #tpu.memory_space<vmem>>, vector<1x10x32xf32>
    %90 = vector.shape_cast %89 : vector<1x10x32xf32> to vector<10x32xf32>
    %91 = vector.shape_cast %88 : vector<10x32xf32> to vector<1x10x32xf32>
    tpu.vector_store %arg16[%c0_27, %c0_28, %c0_29], %91 {strides = array<i32>} : memref<1x10x32xf32, #tpu.memory_space<vmem>>, vector<1x10x32xf32>,
    %c0_30 = arith.constant 0 : index
    %c0_31 = arith.constant 0 : index
    %c0_32 = arith.constant 0 : index
    %92 = vector.load %arg1[%c0_30, %c0_31, %c0_32] : memref<1x16x256xf32, #tpu.memory_space<vmem>>, vector<1x16x256xf32>
    %93 = vector.shape_cast %92 : vector<1x16x256xf32> to vector<16x256xf32>
    %c0_33 = arith.constant 0 : index
    %c0_34 = arith.constant 0 : index
    %94 = vector.load %arg6[%c0_33, %c0_34] : memref<4x4xf32, #tpu.memory_space<vmem>>, vector<4x4xf32>
    %c0_35 = arith.constant 0 : index
    %c0_36 = arith.constant 0 : index
    %95 = vector.load %arg7[%c0_35, %c0_36] : memref<4x1xf32, #tpu.memory_space<vmem>>, vector<4x1xf32>
    %c0_37 = arith.constant 0 : index
    %c0_38 = arith.constant 0 : index
    %96 = vector.load %arg8[%c0_37, %c0_38] : memref<4x1xf32, #tpu.memory_space<vmem>>, vector<4x1xf32>
    %c0_39 = arith.constant 0 : index
    %c0_40 = arith.constant 0 : index
    %97 = vector.load %arg9[%c0_39, %c0_40] : memref<4x1xf32, #tpu.memory_space<vmem>>, vector<4x1xf32>
    %98 = vector.extract_strided_slice %93 {offsets = [0, 0], sizes = [1, 256], strides = [1, 1]} : vector<16x256xf32> to vector<1x256xf32>
    %99 = vector.extract_strided_slice %93 {offsets = [1, 0], sizes = [1, 256], strides = [1, 1]} : vector<16x256xf32> to vector<1x256xf32>
    %100 = vector.extract_strided_slice %93 {offsets = [4, 0], sizes = [1, 256], strides = [1, 1]} : vector<16x256xf32> to vector<1x256xf32>
    %101 = vector.extract_strided_slice %93 {offsets = [5, 0], sizes = [1, 256], strides = [1, 1]} : vector<16x256xf32> to vector<1x256xf32>
    %102 = vector.extract_strided_slice %94 {offsets = [0, 0], sizes = [4, 1], strides = [1, 1]} : vector<4x4xf32> to vector<4x1xf32>
    %103 = vector.broadcast %102 : vector<4x1xf32> to vector<4x256xf32>
    %104 = vector.broadcast %98 : vector<1x256xf32> to vector<4x256xf32>
    %105 = arith.mulf %103, %104 : vector<4x256xf32>
    %106 = vector.extract_strided_slice %94 {offsets = [0, 1], sizes = [4, 1], strides = [1, 1]} : vector<4x4xf32> to vector<4x1xf32>
    %107 = vector.broadcast %106 : vector<4x1xf32> to vector<4x256xf32>
    %108 = vector.broadcast %99 : vector<1x256xf32> to vector<4x256xf32>
    %109 = arith.mulf %107, %108 : vector<4x256xf32>
    %110 = arith.addf %105, %109 : vector<4x256xf32>
    %111 = vector.extract_strided_slice %94 {offsets = [0, 2], sizes = [4, 1], strides = [1, 1]} : vector<4x4xf32> to vector<4x1xf32>
    %112 = vector.broadcast %111 : vector<4x1xf32> to vector<4x256xf32>
    %113 = vector.broadcast %100 : vector<1x256xf32> to vector<4x256xf32>
    %114 = arith.mulf %112, %113 : vector<4x256xf32>
    %115 = arith.addf %110, %114 : vector<4x256xf32>
    %116 = vector.extract_strided_slice %94 {offsets = [0, 3], sizes = [4, 1], strides = [1, 1]} : vector<4x4xf32> to vector<4x1xf32>
    %117 = vector.broadcast %116 : vector<4x1xf32> to vector<4x256xf32>
    %118 = vector.broadcast %101 : vector<1x256xf32> to vector<4x256xf32>
    %119 = arith.mulf %117, %118 : vector<4x256xf32>
    %120 = arith.addf %115, %119 : vector<4x256xf32>
    %121 = vector.broadcast %95 : vector<4x1xf32> to vector<4x256xf32>
    %122 = arith.addf %120, %121 : vector<4x256xf32>
    %cst_41 = arith.constant dense<0.000000e+00> : vector<256xf32>
    %123 = vector.multi_reduction <add>, %122, %cst_41 [0] : vector<4x256xf32> to vector<256xf32>
    %124 = vector.shape_cast %123 : vector<256xf32> to vector<1x256xf32>
    %cst_42 = arith.constant 4.000000e+00 : f32
    %125 = vector.broadcast %cst_42 : f32 to vector<1x256xf32>
    %126 = arith.divf %124, %125 : vector<1x256xf32>
    %127 = vector.broadcast %126 : vector<1x256xf32> to vector<4x256xf32>
    %128 = arith.subf %122, %127 : vector<4x256xf32>
    %129 = arith.mulf %128, %128 : vector<4x256xf32>
    %cst_43 = arith.constant dense<0.000000e+00> : vector<256xf32>
    %130 = vector.multi_reduction <add>, %129, %cst_43 [0] : vector<4x256xf32> to vector<256xf32>
    %131 = vector.shape_cast %130 : vector<256xf32> to vector<1x256xf32>
    %cst_44 = arith.constant 4.000000e+00 : f32
    %132 = vector.broadcast %cst_44 : f32 to vector<1x256xf32>
    %133 = arith.divf %131, %132 : vector<1x256xf32>
    %134 = vector.broadcast %126 : vector<1x256xf32> to vector<4x256xf32>
    %135 = arith.subf %122, %134 : vector<4x256xf32>
    %cst_45 = arith.constant 9.99999997E-7 : f32
    %136 = vector.broadcast %cst_45 : f32 to vector<1x256xf32>
    %137 = arith.addf %133, %136 : vector<1x256xf32>
    %138 = math.rsqrt %137 : vector<1x256xf32>
    %139 = vector.broadcast %138 : vector<1x256xf32> to vector<4x256xf32>
    %140 = arith.mulf %135, %139 : vector<4x256xf32>
    %141 = vector.broadcast %96 : vector<4x1xf32> to vector<4x256xf32>
    %142 = arith.mulf %140, %141 : vector<4x256xf32>
    %143 = vector.broadcast %97 : vector<4x1xf32> to vector<4x256xf32>
    %144 = arith.addf %142, %143 : vector<4x256xf32>
    %cst_46 = arith.constant 5.000000e-01 : f32
    %145 = vector.broadcast %cst_46 : f32 to vector<4x256xf32>
    %146 = arith.mulf %145, %144 : vector<4x256xf32>
    %cst_47 = arith.constant 4.471500e-02 : f32
    %147 = vector.broadcast %cst_47 : f32 to vector<4x256xf32>
    %148 = arith.mulf %147, %144 : vector<4x256xf32>
    %149 = arith.mulf %148, %144 : vector<4x256xf32>
    %150 = arith.mulf %149, %144 : vector<4x256xf32>
    %151 = arith.addf %144, %150 : vector<4x256xf32>
    %cst_48 = arith.constant 0.797884583 : f32
    %152 = vector.broadcast %cst_48 : f32 to vector<4x256xf32>
    %153 = arith.mulf %152, %151 : vector<4x256xf32>
    %154 = math.tanh %153 : vector<4x256xf32>
    %cst_49 = arith.constant 1.000000e+00 : f32
    %155 = vector.broadcast %cst_49 : f32 to vector<4x256xf32>
    %156 = arith.addf %155, %154 : vector<4x256xf32>
    %157 = arith.mulf %146, %156 : vector<4x256xf32>
    %158 = vector.extract_strided_slice %93 {offsets = [2, 0], sizes = [1, 256], strides = [1, 1]} : vector<16x256xf32> to vector<1x256xf32>
    %159 = vector.extract_strided_slice %93 {offsets = [3, 0], sizes = [1, 256], strides = [1, 1]} : vector<16x256xf32> to vector<1x256xf32>
    %160 = vector.extract_strided_slice %93 {offsets = [6, 0], sizes = [1, 256], strides = [1, 1]} : vector<16x256xf32> to vector<1x256xf32>
    %161 = vector.extract_strided_slice %93 {offsets = [7, 0], sizes = [1, 256], strides = [1, 1]} : vector<16x256xf32> to vector<1x256xf32>
    %162 = vector.extract_strided_slice %94 {offsets = [0, 0], sizes = [4, 1], strides = [1, 1]} : vector<4x4xf32> to vector<4x1xf32>
    %163 = vector.broadcast %162 : vector<4x1xf32> to vector<4x256xf32>
    %164 = vector.broadcast %158 : vector<1x256xf32> to vector<4x256xf32>
    %165 = arith.mulf %163, %164 : vector<4x256xf32>
    %166 = vector.extract_strided_slice %94 {offsets = [0, 1], sizes = [4, 1], strides = [1, 1]} : vector<4x4xf32> to vector<4x1xf32>
    %167 = vector.broadcast %166 : vector<4x1xf32> to vector<4x256xf32>
    %168 = vector.broadcast %159 : vector<1x256xf32> to vector<4x256xf32>
    %169 = arith.mulf %167, %168 : vector<4x256xf32>
    %170 = arith.addf %165, %169 : vector<4x256xf32>
    %171 = vector.extract_strided_slice %94 {offsets = [0, 2], sizes = [4, 1], strides = [1, 1]} : vector<4x4xf32> to vector<4x1xf32>
    %172 = vector.broadcast %171 : vector<4x1xf32> to vector<4x256xf32>
    %173 = vector.broadcast %160 : vector<1x256xf32> to vector<4x256xf32>
    %174 = arith.mulf %172, %173 : vector<4x256xf32>
    %175 = arith.addf %170, %174 : vector<4x256xf32>
    %176 = vector.extract_strided_slice %94 {offsets = [0, 3], sizes = [4, 1], strides = [1, 1]} : vector<4x4xf32> to vector<4x1xf32>
    %177 = vector.broadcast %176 : vector<4x1xf32> to vector<4x256xf32>
    %178 = vector.broadcast %161 : vector<1x256xf32> to vector<4x256xf32>
    %179 = arith.mulf %177, %178 : vector<4x256xf32>
    %180 = arith.addf %175, %179 : vector<4x256xf32>
    %181 = vector.broadcast %95 : vector<4x1xf32> to vector<4x256xf32>
    %182 = arith.addf %180, %181 : vector<4x256xf32>
    %cst_50 = arith.constant dense<0.000000e+00> : vector<256xf32>
    %183 = vector.multi_reduction <add>, %182, %cst_50 [0] : vector<4x256xf32> to vector<256xf32>
    %184 = vector.shape_cast %183 : vector<256xf32> to vector<1x256xf32>
    %cst_51 = arith.constant 4.000000e+00 : f32
    %185 = vector.broadcast %cst_51 : f32 to vector<1x256xf32>
    %186 = arith.divf %184, %185 : vector<1x256xf32>
    %187 = vector.broadcast %186 : vector<1x256xf32> to vector<4x256xf32>
    %188 = arith.subf %182, %187 : vector<4x256xf32>
    %189 = arith.mulf %188, %188 : vector<4x256xf32>
    %cst_52 = arith.constant dense<0.000000e+00> : vector<256xf32>
    %190 = vector.multi_reduction <add>, %189, %cst_52 [0] : vector<4x256xf32> to vector<256xf32>
    %191 = vector.shape_cast %190 : vector<256xf32> to vector<1x256xf32>
    %cst_53 = arith.constant 4.000000e+00 : f32
    %192 = vector.broadcast %cst_53 : f32 to vector<1x256xf32>
    %193 = arith.divf %191, %192 : vector<1x256xf32>
    %194 = vector.broadcast %186 : vector<1x256xf32> to vector<4x256xf32>
    %195 = arith.subf %182, %194 : vector<4x256xf32>
    %cst_54 = arith.constant 9.99999997E-7 : f32
    %196 = vector.broadcast %cst_54 : f32 to vector<1x256xf32>
    %197 = arith.addf %193, %196 : vector<1x256xf32>
    %198 = math.rsqrt %197 : vector<1x256xf32>
    %199 = vector.broadcast %198 : vector<1x256xf32> to vector<4x256xf32>
    %200 = arith.mulf %195, %199 : vector<4x256xf32>
    %201 = vector.broadcast %96 : vector<4x1xf32> to vector<4x256xf32>
    %202 = arith.mulf %200, %201 : vector<4x256xf32>
    %203 = vector.broadcast %97 : vector<4x1xf32> to vector<4x256xf32>
    %204 = arith.addf %202, %203 : vector<4x256xf32>
    %cst_55 = arith.constant 5.000000e-01 : f32
    %205 = vector.broadcast %cst_55 : f32 to vector<4x256xf32>
    %206 = arith.mulf %205, %204 : vector<4x256xf32>
    %cst_56 = arith.constant 4.471500e-02 : f32
    %207 = vector.broadcast %cst_56 : f32 to vector<4x256xf32>
    %208 = arith.mulf %207, %204 : vector<4x256xf32>
    %209 = arith.mulf %208, %204 : vector<4x256xf32>
    %210 = arith.mulf %209, %204 : vector<4x256xf32>
    %211 = arith.addf %204, %210 : vector<4x256xf32>
    %cst_57 = arith.constant 0.797884583 : f32
    %212 = vector.broadcast %cst_57 : f32 to vector<4x256xf32>
    %213 = arith.mulf %212, %211 : vector<4x256xf32>
    %214 = math.tanh %213 : vector<4x256xf32>
    %cst_58 = arith.constant 1.000000e+00 : f32
    %215 = vector.broadcast %cst_58 : f32 to vector<4x256xf32>
    %216 = arith.addf %215, %214 : vector<4x256xf32>
    %217 = arith.mulf %206, %216 : vector<4x256xf32>
    %218 = vector.extract_strided_slice %93 {offsets = [8, 0], sizes = [1, 256], strides = [1, 1]} : vector<16x256xf32> to vector<1x256xf32>
    %219 = vector.extract_strided_slice %93 {offsets = [9, 0], sizes = [1, 256], strides = [1, 1]} : vector<16x256xf32> to vector<1x256xf32>
    %220 = vector.extract_strided_slice %93 {offsets = [12, 0], sizes = [1, 256], strides = [1, 1]} : vector<16x256xf32> to vector<1x256xf32>
    %221 = vector.extract_strided_slice %93 {offsets = [13, 0], sizes = [1, 256], strides = [1, 1]} : vector<16x256xf32> to vector<1x256xf32>
    %222 = vector.extract_strided_slice %94 {offsets = [0, 0], sizes = [4, 1], strides = [1, 1]} : vector<4x4xf32> to vector<4x1xf32>
    %223 = vector.broadcast %222 : vector<4x1xf32> to vector<4x256xf32>
    %224 = vector.broadcast %218 : vector<1x256xf32> to vector<4x256xf32>
    %225 = arith.mulf %223, %224 : vector<4x256xf32>
    %226 = vector.extract_strided_slice %94 {offsets = [0, 1], sizes = [4, 1], strides = [1, 1]} : vector<4x4xf32> to vector<4x1xf32>
    %227 = vector.broadcast %226 : vector<4x1xf32> to vector<4x256xf32>
    %228 = vector.broadcast %219 : vector<1x256xf32> to vector<4x256xf32>
    %229 = arith.mulf %227, %228 : vector<4x256xf32>
    %230 = arith.addf %225, %229 : vector<4x256xf32>
    %231 = vector.extract_strided_slice %94 {offsets = [0, 2], sizes = [4, 1], strides = [1, 1]} : vector<4x4xf32> to vector<4x1xf32>
    %232 = vector.broadcast %231 : vector<4x1xf32> to vector<4x256xf32>
    %233 = vector.broadcast %220 : vector<1x256xf32> to vector<4x256xf32>
    %234 = arith.mulf %232, %233 : vector<4x256xf32>
    %235 = arith.addf %230, %234 : vector<4x256xf32>
    %236 = vector.extract_strided_slice %94 {offsets = [0, 3], sizes = [4, 1], strides = [1, 1]} : vector<4x4xf32> to vector<4x1xf32>
    %237 = vector.broadcast %236 : vector<4x1xf32> to vector<4x256xf32>
    %238 = vector.broadcast %221 : vector<1x256xf32> to vector<4x256xf32>
    %239 = arith.mulf %237, %238 : vector<4x256xf32>
    %240 = arith.addf %235, %239 : vector<4x256xf32>
    %241 = vector.broadcast %95 : vector<4x1xf32> to vector<4x256xf32>
    %242 = arith.addf %240, %241 : vector<4x256xf32>
    %cst_59 = arith.constant dense<0.000000e+00> : vector<256xf32>
    %243 = vector.multi_reduction <add>, %242, %cst_59 [0] : vector<4x256xf32> to vector<256xf32>
    %244 = vector.shape_cast %243 : vector<256xf32> to vector<1x256xf32>
    %cst_60 = arith.constant 4.000000e+00 : f32
    %245 = vector.broadcast %cst_60 : f32 to vector<1x256xf32>
    %246 = arith.divf %244, %245 : vector<1x256xf32>
    %247 = vector.broadcast %246 : vector<1x256xf32> to vector<4x256xf32>
    %248 = arith.subf %242, %247 : vector<4x256xf32>
    %249 = arith.mulf %248, %248 : vector<4x256xf32>
    %cst_61 = arith.constant dense<0.000000e+00> : vector<256xf32>
    %250 = vector.multi_reduction <add>, %249, %cst_61 [0] : vector<4x256xf32> to vector<256xf32>
    %251 = vector.shape_cast %250 : vector<256xf32> to vector<1x256xf32>
    %cst_62 = arith.constant 4.000000e+00 : f32
    %252 = vector.broadcast %cst_62 : f32 to vector<1x256xf32>
    %253 = arith.divf %251, %252 : vector<1x256xf32>
    %254 = vector.broadcast %246 : vector<1x256xf32> to vector<4x256xf32>
    %255 = arith.subf %242, %254 : vector<4x256xf32>
    %cst_63 = arith.constant 9.99999997E-7 : f32
    %256 = vector.broadcast %cst_63 : f32 to vector<1x256xf32>
    %257 = arith.addf %253, %256 : vector<1x256xf32>
    %258 = math.rsqrt %257 : vector<1x256xf32>
    %259 = vector.broadcast %258 : vector<1x256xf32> to vector<4x256xf32>
    %260 = arith.mulf %255, %259 : vector<4x256xf32>
    %261 = vector.broadcast %96 : vector<4x1xf32> to vector<4x256xf32>
    %262 = arith.mulf %260, %261 : vector<4x256xf32>
    %263 = vector.broadcast %97 : vector<4x1xf32> to vector<4x256xf32>
    %264 = arith.addf %262, %263 : vector<4x256xf32>
    %cst_64 = arith.constant 5.000000e-01 : f32
    %265 = vector.broadcast %cst_64 : f32 to vector<4x256xf32>
    %266 = arith.mulf %265, %264 : vector<4x256xf32>
    %cst_65 = arith.constant 4.471500e-02 : f32
    %267 = vector.broadcast %cst_65 : f32 to vector<4x256xf32>
    %268 = arith.mulf %267, %264 : vector<4x256xf32>
    %269 = arith.mulf %268, %264 : vector<4x256xf32>
    %270 = arith.mulf %269, %264 : vector<4x256xf32>
    %271 = arith.addf %264, %270 : vector<4x256xf32>
    %cst_66 = arith.constant 0.797884583 : f32
    %272 = vector.broadcast %cst_66 : f32 to vector<4x256xf32>
    %273 = arith.mulf %272, %271 : vector<4x256xf32>
    %274 = math.tanh %273 : vector<4x256xf32>
    %cst_67 = arith.constant 1.000000e+00 : f32
    %275 = vector.broadcast %cst_67 : f32 to vector<4x256xf32>
    %276 = arith.addf %275, %274 : vector<4x256xf32>
    %277 = arith.mulf %266, %276 : vector<4x256xf32>
    %278 = vector.extract_strided_slice %93 {offsets = [10, 0], sizes = [1, 256], strides = [1, 1]} : vector<16x256xf32> to vector<1x256xf32>
    %279 = vector.extract_strided_slice %93 {offsets = [11, 0], sizes = [1, 256], strides = [1, 1]} : vector<16x256xf32> to vector<1x256xf32>
    %280 = vector.extract_strided_slice %93 {offsets = [14, 0], sizes = [1, 256], strides = [1, 1]} : vector<16x256xf32> to vector<1x256xf32>
    %281 = vector.extract_strided_slice %93 {offsets = [15, 0], sizes = [1, 256], strides = [1, 1]} : vector<16x256xf32> to vector<1x256xf32>
    %282 = vector.extract_strided_slice %94 {offsets = [0, 0], sizes = [4, 1], strides = [1, 1]} : vector<4x4xf32> to vector<4x1xf32>
    %283 = vector.broadcast %282 : vector<4x1xf32> to vector<4x256xf32>
    %284 = vector.broadcast %278 : vector<1x256xf32> to vector<4x256xf32>
    %285 = arith.mulf %283, %284 : vector<4x256xf32>
    %286 = vector.extract_strided_slice %94 {offsets = [0, 1], sizes = [4, 1], strides = [1, 1]} : vector<4x4xf32> to vector<4x1xf32>
    %287 = vector.broadcast %286 : vector<4x1xf32> to vector<4x256xf32>
    %288 = vector.broadcast %279 : vector<1x256xf32> to vector<4x256xf32>
    %289 = arith.mulf %287, %288 : vector<4x256xf32>
    %290 = arith.addf %285, %289 : vector<4x256xf32>
    %291 = vector.extract_strided_slice %94 {offsets = [0, 2], sizes = [4, 1], strides = [1, 1]} : vector<4x4xf32> to vector<4x1xf32>
    %292 = vector.broadcast %291 : vector<4x1xf32> to vector<4x256xf32>
    %293 = vector.broadcast %280 : vector<1x256xf32> to vector<4x256xf32>
    %294 = arith.mulf %292, %293 : vector<4x256xf32>
    %295 = arith.addf %290, %294 : vector<4x256xf32>
    %296 = vector.extract_strided_slice %94 {offsets = [0, 3], sizes = [4, 1], strides = [1, 1]} : vector<4x4xf32> to vector<4x1xf32>
    %297 = vector.broadcast %296 : vector<4x1xf32> to vector<4x256xf32>
    %298 = vector.broadcast %281 : vector<1x256xf32> to vector<4x256xf32>
    %299 = arith.mulf %297, %298 : vector<4x256xf32>
    %300 = arith.addf %295, %299 : vector<4x256xf32>
    %301 = vector.broadcast %95 : vector<4x1xf32> to vector<4x256xf32>
    %302 = arith.addf %300, %301 : vector<4x256xf32>
    %cst_68 = arith.constant dense<0.000000e+00> : vector<256xf32>
    %303 = vector.multi_reduction <add>, %302, %cst_68 [0] : vector<4x256xf32> to vector<256xf32>
    %304 = vector.shape_cast %303 : vector<256xf32> to vector<1x256xf32>
    %cst_69 = arith.constant 4.000000e+00 : f32
    %305 = vector.broadcast %cst_69 : f32 to vector<1x256xf32>
    %306 = arith.divf %304, %305 : vector<1x256xf32>
    %307 = vector.broadcast %306 : vector<1x256xf32> to vector<4x256xf32>
    %308 = arith.subf %302, %307 : vector<4x256xf32>
    %309 = arith.mulf %308, %308 : vector<4x256xf32>
    %cst_70 = arith.constant dense<0.000000e+00> : vector<256xf32>
    %310 = vector.multi_reduction <add>, %309, %cst_70 [0] : vector<4x256xf32> to vector<256xf32>
    %311 = vector.shape_cast %310 : vector<256xf32> to vector<1x256xf32>
    %cst_71 = arith.constant 4.000000e+00 : f32
    %312 = vector.broadcast %cst_71 : f32 to vector<1x256xf32>
    %313 = arith.divf %311, %312 : vector<1x256xf32>
    %314 = vector.broadcast %306 : vector<1x256xf32> to vector<4x256xf32>
    %315 = arith.subf %302, %314 : vector<4x256xf32>
    %cst_72 = arith.constant 9.99999997E-7 : f32
    %316 = vector.broadcast %cst_72 : f32 to vector<1x256xf32>
    %317 = arith.addf %313, %316 : vector<1x256xf32>
    %318 = math.rsqrt %317 : vector<1x256xf32>
    %319 = vector.broadcast %318 : vector<1x256xf32> to vector<4x256xf32>
    %320 = arith.mulf %315, %319 : vector<4x256xf32>
    %321 = vector.broadcast %96 : vector<4x1xf32> to vector<4x256xf32>
    %322 = arith.mulf %320, %321 : vector<4x256xf32>
    %323 = vector.broadcast %97 : vector<4x1xf32> to vector<4x256xf32>
    %324 = arith.addf %322, %323 : vector<4x256xf32>
    %cst_73 = arith.constant 5.000000e-01 : f32
    %325 = vector.broadcast %cst_73 : f32 to vector<4x256xf32>
    %326 = arith.mulf %325, %324 : vector<4x256xf32>
    %cst_74 = arith.constant 4.471500e-02 : f32
    %327 = vector.broadcast %cst_74 : f32 to vector<4x256xf32>
    %328 = arith.mulf %327, %324 : vector<4x256xf32>
    %329 = arith.mulf %328, %324 : vector<4x256xf32>
    %330 = arith.mulf %329, %324 : vector<4x256xf32>
    %331 = arith.addf %324, %330 : vector<4x256xf32>
    %cst_75 = arith.constant 0.797884583 : f32
    %332 = vector.broadcast %cst_75 : f32 to vector<4x256xf32>
    %333 = arith.mulf %332, %331 : vector<4x256xf32>
    %334 = math.tanh %333 : vector<4x256xf32>
    %cst_76 = arith.constant 1.000000e+00 : f32
    %335 = vector.broadcast %cst_76 : f32 to vector<4x256xf32>
    %336 = arith.addf %335, %334 : vector<4x256xf32>
    %337 = arith.mulf %326, %336 : vector<4x256xf32>
    %338 = vector.extract_strided_slice %157 {offsets = [0, 0], sizes = [1, 256], strides = [1, 1]} : vector<4x256xf32> to vector<1x256xf32>
    %339 = vector.extract_strided_slice %157 {offsets = [1, 0], sizes = [1, 256], strides = [1, 1]} : vector<4x256xf32> to vector<1x256xf32>
    %340 = vector.extract_strided_slice %157 {offsets = [2, 0], sizes = [1, 256], strides = [1, 1]} : vector<4x256xf32> to vector<1x256xf32>
    %341 = vector.extract_strided_slice %157 {offsets = [3, 0], sizes = [1, 256], strides = [1, 1]} : vector<4x256xf32> to vector<1x256xf32>
    %342 = vector.extract_strided_slice %217 {offsets = [0, 0], sizes = [1, 256], strides = [1, 1]} : vector<4x256xf32> to vector<1x256xf32>
    %343 = vector.extract_strided_slice %217 {offsets = [1, 0], sizes = [1, 256], strides = [1, 1]} : vector<4x256xf32> to vector<1x256xf32>
    %344 = vector.extract_strided_slice %217 {offsets = [2, 0], sizes = [1, 256], strides = [1, 1]} : vector<4x256xf32> to vector<1x256xf32>
    %345 = vector.extract_strided_slice %217 {offsets = [3, 0], sizes = [1, 256], strides = [1, 1]} : vector<4x256xf32> to vector<1x256xf32>
    %346 = vector.extract_strided_slice %277 {offsets = [0, 0], sizes = [1, 256], strides = [1, 1]} : vector<4x256xf32> to vector<1x256xf32>
    %347 = vector.extract_strided_slice %277 {offsets = [1, 0], sizes = [1, 256], strides = [1, 1]} : vector<4x256xf32> to vector<1x256xf32>
    %348 = vector.extract_strided_slice %277 {offsets = [2, 0], sizes = [1, 256], strides = [1, 1]} : vector<4x256xf32> to vector<1x256xf32>
    %349 = vector.extract_strided_slice %277 {offsets = [3, 0], sizes = [1, 256], strides = [1, 1]} : vector<4x256xf32> to vector<1x256xf32>
    %350 = vector.extract_strided_slice %337 {offsets = [0, 0], sizes = [1, 256], strides = [1, 1]} : vector<4x256xf32> to vector<1x256xf32>
    %351 = vector.extract_strided_slice %337 {offsets = [1, 0], sizes = [1, 256], strides = [1, 1]} : vector<4x256xf32> to vector<1x256xf32>
    %352 = vector.extract_strided_slice %337 {offsets = [2, 0], sizes = [1, 256], strides = [1, 1]} : vector<4x256xf32> to vector<1x256xf32>
    %353 = vector.extract_strided_slice %337 {offsets = [3, 0], sizes = [1, 256], strides = [1, 1]} : vector<4x256xf32> to vector<1x256xf32>
    %c0_77 = arith.constant 0 : index
    %c0_78 = arith.constant 0 : index
    %354 = vector.load %arg10[%c0_77, %c0_78] : memref<16x16xf32, #tpu.memory_space<vmem>>, vector<16x16xf32>
    %355 = vector.extract_strided_slice %354 {offsets = [0, 0], sizes = [16, 1], strides = [1, 1]} : vector<16x16xf32> to vector<16x1xf32>
    %356 = vector.broadcast %355 : vector<16x1xf32> to vector<16x256xf32>
    %357 = vector.broadcast %338 : vector<1x256xf32> to vector<16x256xf32>
    %358 = arith.mulf %356, %357 : vector<16x256xf32>
    %359 = vector.extract_strided_slice %354 {offsets = [0, 1], sizes = [16, 1], strides = [1, 1]} : vector<16x16xf32> to vector<16x1xf32>
    %360 = vector.broadcast %359 : vector<16x1xf32> to vector<16x256xf32>
    %361 = vector.broadcast %339 : vector<1x256xf32> to vector<16x256xf32>
    %362 = arith.mulf %360, %361 : vector<16x256xf32>
    %363 = arith.addf %358, %362 : vector<16x256xf32>
    %364 = vector.extract_strided_slice %354 {offsets = [0, 2], sizes = [16, 1], strides = [1, 1]} : vector<16x16xf32> to vector<16x1xf32>
    %365 = vector.broadcast %364 : vector<16x1xf32> to vector<16x256xf32>
    %366 = vector.broadcast %340 : vector<1x256xf32> to vector<16x256xf32>
    %367 = arith.mulf %365, %366 : vector<16x256xf32>
    %368 = arith.addf %363, %367 : vector<16x256xf32>
    %369 = vector.extract_strided_slice %354 {offsets = [0, 3], sizes = [16, 1], strides = [1, 1]} : vector<16x16xf32> to vector<16x1xf32>
    %370 = vector.broadcast %369 : vector<16x1xf32> to vector<16x256xf32>
    %371 = vector.broadcast %341 : vector<1x256xf32> to vector<16x256xf32>
    %372 = arith.mulf %370, %371 : vector<16x256xf32>
    %373 = arith.addf %368, %372 : vector<16x256xf32>
    %374 = vector.extract_strided_slice %354 {offsets = [0, 4], sizes = [16, 1], strides = [1, 1]} : vector<16x16xf32> to vector<16x1xf32>
    %375 = vector.broadcast %374 : vector<16x1xf32> to vector<16x256xf32>
    %376 = vector.broadcast %342 : vector<1x256xf32> to vector<16x256xf32>
    %377 = arith.mulf %375, %376 : vector<16x256xf32>
    %378 = arith.addf %373, %377 : vector<16x256xf32>
    %379 = vector.extract_strided_slice %354 {offsets = [0, 5], sizes = [16, 1], strides = [1, 1]} : vector<16x16xf32> to vector<16x1xf32>
    %380 = vector.broadcast %379 : vector<16x1xf32> to vector<16x256xf32>
    %381 = vector.broadcast %343 : vector<1x256xf32> to vector<16x256xf32>
    %382 = arith.mulf %380, %381 : vector<16x256xf32>
    %383 = arith.addf %378, %382 : vector<16x256xf32>
    %384 = vector.extract_strided_slice %354 {offsets = [0, 6], sizes = [16, 1], strides = [1, 1]} : vector<16x16xf32> to vector<16x1xf32>
    %385 = vector.broadcast %384 : vector<16x1xf32> to vector<16x256xf32>
    %386 = vector.broadcast %344 : vector<1x256xf32> to vector<16x256xf32>
    %387 = arith.mulf %385, %386 : vector<16x256xf32>
    %388 = arith.addf %383, %387 : vector<16x256xf32>
    %389 = vector.extract_strided_slice %354 {offsets = [0, 7], sizes = [16, 1], strides = [1, 1]} : vector<16x16xf32> to vector<16x1xf32>
    %390 = vector.broadcast %389 : vector<16x1xf32> to vector<16x256xf32>
    %391 = vector.broadcast %345 : vector<1x256xf32> to vector<16x256xf32>
    %392 = arith.mulf %390, %391 : vector<16x256xf32>
    %393 = arith.addf %388, %392 : vector<16x256xf32>
    %394 = vector.extract_strided_slice %354 {offsets = [0, 8], sizes = [16, 1], strides = [1, 1]} : vector<16x16xf32> to vector<16x1xf32>
    %395 = vector.broadcast %394 : vector<16x1xf32> to vector<16x256xf32>
    %396 = vector.broadcast %346 : vector<1x256xf32> to vector<16x256xf32>
    %397 = arith.mulf %395, %396 : vector<16x256xf32>
    %398 = arith.addf %393, %397 : vector<16x256xf32>
    %399 = vector.extract_strided_slice %354 {offsets = [0, 9], sizes = [16, 1], strides = [1, 1]} : vector<16x16xf32> to vector<16x1xf32>
    %400 = vector.broadcast %399 : vector<16x1xf32> to vector<16x256xf32>
    %401 = vector.broadcast %347 : vector<1x256xf32> to vector<16x256xf32>
    %402 = arith.mulf %400, %401 : vector<16x256xf32>
    %403 = arith.addf %398, %402 : vector<16x256xf32>
    %404 = vector.extract_strided_slice %354 {offsets = [0, 10], sizes = [16, 1], strides = [1, 1]} : vector<16x16xf32> to vector<16x1xf32>
    %405 = vector.broadcast %404 : vector<16x1xf32> to vector<16x256xf32>
    %406 = vector.broadcast %348 : vector<1x256xf32> to vector<16x256xf32>
    %407 = arith.mulf %405, %406 : vector<16x256xf32>
    %408 = arith.addf %403, %407 : vector<16x256xf32>
    %409 = vector.extract_strided_slice %354 {offsets = [0, 11], sizes = [16, 1], strides = [1, 1]} : vector<16x16xf32> to vector<16x1xf32>
    %410 = vector.broadcast %409 : vector<16x1xf32> to vector<16x256xf32>
    %411 = vector.broadcast %349 : vector<1x256xf32> to vector<16x256xf32>
    %412 = arith.mulf %410, %411 : vector<16x256xf32>
    %413 = arith.addf %408, %412 : vector<16x256xf32>
    %414 = vector.extract_strided_slice %354 {offsets = [0, 12], sizes = [16, 1], strides = [1, 1]} : vector<16x16xf32> to vector<16x1xf32>
    %415 = vector.broadcast %414 : vector<16x1xf32> to vector<16x256xf32>
    %416 = vector.broadcast %350 : vector<1x256xf32> to vector<16x256xf32>
    %417 = arith.mulf %415, %416 : vector<16x256xf32>
    %418 = arith.addf %413, %417 : vector<16x256xf32>
    %419 = vector.extract_strided_slice %354 {offsets = [0, 13], sizes = [16, 1], strides = [1, 1]} : vector<16x16xf32> to vector<16x1xf32>
    %420 = vector.broadcast %419 : vector<16x1xf32> to vector<16x256xf32>
    %421 = vector.broadcast %351 : vector<1x256xf32> to vector<16x256xf32>
    %422 = arith.mulf %420, %421 : vector<16x256xf32>
    %423 = arith.addf %418, %422 : vector<16x256xf32>
    %424 = vector.extract_strided_slice %354 {offsets = [0, 14], sizes = [16, 1], strides = [1, 1]} : vector<16x16xf32> to vector<16x1xf32>
    %425 = vector.broadcast %424 : vector<16x1xf32> to vector<16x256xf32>
    %426 = vector.broadcast %352 : vector<1x256xf32> to vector<16x256xf32>
    %427 = arith.mulf %425, %426 : vector<16x256xf32>
    %428 = arith.addf %423, %427 : vector<16x256xf32>
    %429 = vector.extract_strided_slice %354 {offsets = [0, 15], sizes = [16, 1], strides = [1, 1]} : vector<16x16xf32> to vector<16x1xf32>
    %430 = vector.broadcast %429 : vector<16x1xf32> to vector<16x256xf32>
    %431 = vector.broadcast %353 : vector<1x256xf32> to vector<16x256xf32>
    %432 = arith.mulf %430, %431 : vector<16x256xf32>
    %433 = arith.addf %428, %432 : vector<16x256xf32>
    %c0_79 = arith.constant 0 : index
    %c0_80 = arith.constant 0 : index
    %434 = vector.load %arg11[%c0_79, %c0_80] : memref<16x1xf32, #tpu.memory_space<vmem>>, vector<16x1xf32>
    %435 = vector.broadcast %434 : vector<16x1xf32> to vector<16x256xf32>
    %436 = arith.addf %433, %435 : vector<16x256xf32>
    %c0_81 = arith.constant 0 : index
    %c0_82 = arith.constant 0 : index
    %437 = vector.load %arg12[%c0_81, %c0_82] : memref<16x1xf32, #tpu.memory_space<vmem>>, vector<16x1xf32>
    %c0_83 = arith.constant 0 : index
    %c0_84 = arith.constant 0 : index
    %438 = vector.load %arg13[%c0_83, %c0_84] : memref<16x1xf32, #tpu.memory_space<vmem>>, vector<16x1xf32>
    %cst_85 = arith.constant dense<0.000000e+00> : vector<256xf32>
    %439 = vector.multi_reduction <add>, %436, %cst_85 [0] : vector<16x256xf32> to vector<256xf32>
    %440 = vector.shape_cast %439 : vector<256xf32> to vector<1x256xf32>
    %cst_86 = arith.constant 1.600000e+01 : f32
    %441 = vector.broadcast %cst_86 : f32 to vector<1x256xf32>
    %442 = arith.divf %440, %441 : vector<1x256xf32>
    %443 = vector.broadcast %442 : vector<1x256xf32> to vector<16x256xf32>
    %444 = arith.subf %436, %443 : vector<16x256xf32>
    %445 = arith.mulf %444, %444 : vector<16x256xf32>
    %cst_87 = arith.constant dense<0.000000e+00> : vector<256xf32>
    %446 = vector.multi_reduction <add>, %445, %cst_87 [0] : vector<16x256xf32> to vector<256xf32>
    %447 = vector.shape_cast %446 : vector<256xf32> to vector<1x256xf32>
    %cst_88 = arith.constant 1.600000e+01 : f32
    %448 = vector.broadcast %cst_88 : f32 to vector<1x256xf32>
    %449 = arith.divf %447, %448 : vector<1x256xf32>
    %450 = vector.broadcast %442 : vector<1x256xf32> to vector<16x256xf32>
    %451 = arith.subf %436, %450 : vector<16x256xf32>
    %cst_89 = arith.constant 9.99999997E-7 : f32
    %452 = vector.broadcast %cst_89 : f32 to vector<1x256xf32>
    %453 = arith.addf %449, %452 : vector<1x256xf32>
    %454 = math.rsqrt %453 : vector<1x256xf32>
    %455 = vector.broadcast %454 : vector<1x256xf32> to vector<16x256xf32>
    %456 = arith.mulf %451, %455 : vector<16x256xf32>
    %457 = vector.broadcast %437 : vector<16x1xf32> to vector<16x256xf32>
    %458 = arith.mulf %456, %457 : vector<16x256xf32>
    %459 = vector.broadcast %438 : vector<16x1xf32> to vector<16x256xf32>
    %460 = arith.addf %458, %459 : vector<16x256xf32>
    %cst_90 = arith.constant 5.000000e-01 : f32
    %461 = vector.broadcast %cst_90 : f32 to vector<16x256xf32>
    %462 = arith.mulf %461, %460 : vector<16x256xf32>
    %cst_91 = arith.constant 4.471500e-02 : f32
    %463 = vector.broadcast %cst_91 : f32 to vector<16x256xf32>
    %464 = arith.mulf %463, %460 : vector<16x256xf32>
    %465 = arith.mulf %464, %460 : vector<16x256xf32>
    %466 = arith.mulf %465, %460 : vector<16x256xf32>
    %467 = arith.addf %460, %466 : vector<16x256xf32>
    %cst_92 = arith.constant 0.797884583 : f32
    %468 = vector.broadcast %cst_92 : f32 to vector<16x256xf32>
    %469 = arith.mulf %468, %467 : vector<16x256xf32>
    %470 = math.tanh %469 : vector<16x256xf32>
    %cst_93 = arith.constant 1.000000e+00 : f32
    %471 = vector.broadcast %cst_93 : f32 to vector<16x256xf32>
    %472 = arith.addf %471, %470 : vector<16x256xf32>
    %473 = arith.mulf %462, %472 : vector<16x256xf32>
    %474 = vector.extract_strided_slice %473 {offsets = [0, 0], sizes = [1, 256], strides = [1, 1]} : vector<16x256xf32> to vector<1x256xf32>
    %475 = vector.extract_strided_slice %473 {offsets = [1, 0], sizes = [1, 256], strides = [1, 1]} : vector<16x256xf32> to vector<1x256xf32>
    %476 = vector.extract_strided_slice %473 {offsets = [2, 0], sizes = [1, 256], strides = [1, 1]} : vector<16x256xf32> to vector<1x256xf32>
    %477 = vector.extract_strided_slice %473 {offsets = [3, 0], sizes = [1, 256], strides = [1, 1]} : vector<16x256xf32> to vector<1x256xf32>
    %478 = vector.extract_strided_slice %473 {offsets = [4, 0], sizes = [1, 256], strides = [1, 1]} : vector<16x256xf32> to vector<1x256xf32>
    %479 = vector.extract_strided_slice %473 {offsets = [5, 0], sizes = [1, 256], strides = [1, 1]} : vector<16x256xf32> to vector<1x256xf32>
    %480 = vector.extract_strided_slice %473 {offsets = [6, 0], sizes = [1, 256], strides = [1, 1]} : vector<16x256xf32> to vector<1x256xf32>
    %481 = vector.extract_strided_slice %473 {offsets = [7, 0], sizes = [1, 256], strides = [1, 1]} : vector<16x256xf32> to vector<1x256xf32>
    %482 = vector.extract_strided_slice %473 {offsets = [8, 0], sizes = [1, 256], strides = [1, 1]} : vector<16x256xf32> to vector<1x256xf32>
    %483 = vector.extract_strided_slice %473 {offsets = [9, 0], sizes = [1, 256], strides = [1, 1]} : vector<16x256xf32> to vector<1x256xf32>
    %484 = vector.extract_strided_slice %473 {offsets = [10, 0], sizes = [1, 256], strides = [1, 1]} : vector<16x256xf32> to vector<1x256xf32>
    %485 = vector.extract_strided_slice %473 {offsets = [11, 0], sizes = [1, 256], strides = [1, 1]} : vector<16x256xf32> to vector<1x256xf32>
    %486 = vector.extract_strided_slice %473 {offsets = [12, 0], sizes = [1, 256], strides = [1, 1]} : vector<16x256xf32> to vector<1x256xf32>
    %487 = vector.extract_strided_slice %473 {offsets = [13, 0], sizes = [1, 256], strides = [1, 1]} : vector<16x256xf32> to vector<1x256xf32>
    %488 = vector.extract_strided_slice %473 {offsets = [14, 0], sizes = [1, 256], strides = [1, 1]} : vector<16x256xf32> to vector<1x256xf32>
    %489 = vector.extract_strided_slice %473 {offsets = [15, 0], sizes = [1, 256], strides = [1, 1]} : vector<16x256xf32> to vector<1x256xf32>
    %c0_94 = arith.constant 0 : index
    %c0_95 = arith.constant 0 : index
    %490 = vector.load %arg14[%c0_94, %c0_95] : memref<32x16xf32, #tpu.memory_space<vmem>>, vector<32x16xf32>
    %491 = vector.extract_strided_slice %490 {offsets = [0, 0], sizes = [32, 1], strides = [1, 1]} : vector<32x16xf32> to vector<32x1xf32>
    %492 = vector.broadcast %491 : vector<32x1xf32> to vector<32x256xf32>
    %493 = vector.broadcast %474 : vector<1x256xf32> to vector<32x256xf32>
    %494 = arith.mulf %492, %493 : vector<32x256xf32>
    %495 = vector.extract_strided_slice %490 {offsets = [0, 1], sizes = [32, 1], strides = [1, 1]} : vector<32x16xf32> to vector<32x1xf32>
    %496 = vector.broadcast %495 : vector<32x1xf32> to vector<32x256xf32>
    %497 = vector.broadcast %475 : vector<1x256xf32> to vector<32x256xf32>
    %498 = arith.mulf %496, %497 : vector<32x256xf32>
    %499 = arith.addf %494, %498 : vector<32x256xf32>
    %500 = vector.extract_strided_slice %490 {offsets = [0, 2], sizes = [32, 1], strides = [1, 1]} : vector<32x16xf32> to vector<32x1xf32>
    %501 = vector.broadcast %500 : vector<32x1xf32> to vector<32x256xf32>
    %502 = vector.broadcast %476 : vector<1x256xf32> to vector<32x256xf32>
    %503 = arith.mulf %501, %502 : vector<32x256xf32>
    %504 = arith.addf %499, %503 : vector<32x256xf32>
    %505 = vector.extract_strided_slice %490 {offsets = [0, 3], sizes = [32, 1], strides = [1, 1]} : vector<32x16xf32> to vector<32x1xf32>
    %506 = vector.broadcast %505 : vector<32x1xf32> to vector<32x256xf32>
    %507 = vector.broadcast %477 : vector<1x256xf32> to vector<32x256xf32>
    %508 = arith.mulf %506, %507 : vector<32x256xf32>
    %509 = arith.addf %504, %508 : vector<32x256xf32>
    %510 = vector.extract_strided_slice %490 {offsets = [0, 4], sizes = [32, 1], strides = [1, 1]} : vector<32x16xf32> to vector<32x1xf32>
    %511 = vector.broadcast %510 : vector<32x1xf32> to vector<32x256xf32>
    %512 = vector.broadcast %478 : vector<1x256xf32> to vector<32x256xf32>
    %513 = arith.mulf %511, %512 : vector<32x256xf32>
    %514 = arith.addf %509, %513 : vector<32x256xf32>
    %515 = vector.extract_strided_slice %490 {offsets = [0, 5], sizes = [32, 1], strides = [1, 1]} : vector<32x16xf32> to vector<32x1xf32>
    %516 = vector.broadcast %515 : vector<32x1xf32> to vector<32x256xf32>
    %517 = vector.broadcast %479 : vector<1x256xf32> to vector<32x256xf32>
    %518 = arith.mulf %516, %517 : vector<32x256xf32>
    %519 = arith.addf %514, %518 : vector<32x256xf32>
    %520 = vector.extract_strided_slice %490 {offsets = [0, 6], sizes = [32, 1], strides = [1, 1]} : vector<32x16xf32> to vector<32x1xf32>
    %521 = vector.broadcast %520 : vector<32x1xf32> to vector<32x256xf32>
    %522 = vector.broadcast %480 : vector<1x256xf32> to vector<32x256xf32>
    %523 = arith.mulf %521, %522 : vector<32x256xf32>
    %524 = arith.addf %519, %523 : vector<32x256xf32>
    %525 = vector.extract_strided_slice %490 {offsets = [0, 7], sizes = [32, 1], strides = [1, 1]} : vector<32x16xf32> to vector<32x1xf32>
    %526 = vector.broadcast %525 : vector<32x1xf32> to vector<32x256xf32>
    %527 = vector.broadcast %481 : vector<1x256xf32> to vector<32x256xf32>
    %528 = arith.mulf %526, %527 : vector<32x256xf32>
    %529 = arith.addf %524, %528 : vector<32x256xf32>
    %530 = vector.extract_strided_slice %490 {offsets = [0, 8], sizes = [32, 1], strides = [1, 1]} : vector<32x16xf32> to vector<32x1xf32>
    %531 = vector.broadcast %530 : vector<32x1xf32> to vector<32x256xf32>
    %532 = vector.broadcast %482 : vector<1x256xf32> to vector<32x256xf32>
    %533 = arith.mulf %531, %532 : vector<32x256xf32>
    %534 = arith.addf %529, %533 : vector<32x256xf32>
    %535 = vector.extract_strided_slice %490 {offsets = [0, 9], sizes = [32, 1], strides = [1, 1]} : vector<32x16xf32> to vector<32x1xf32>
    %536 = vector.broadcast %535 : vector<32x1xf32> to vector<32x256xf32>
    %537 = vector.broadcast %483 : vector<1x256xf32> to vector<32x256xf32>
    %538 = arith.mulf %536, %537 : vector<32x256xf32>
    %539 = arith.addf %534, %538 : vector<32x256xf32>
    %540 = vector.extract_strided_slice %490 {offsets = [0, 10], sizes = [32, 1], strides = [1, 1]} : vector<32x16xf32> to vector<32x1xf32>
    %541 = vector.broadcast %540 : vector<32x1xf32> to vector<32x256xf32>
    %542 = vector.broadcast %484 : vector<1x256xf32> to vector<32x256xf32>
    %543 = arith.mulf %541, %542 : vector<32x256xf32>
    %544 = arith.addf %539, %543 : vector<32x256xf32>
    %545 = vector.extract_strided_slice %490 {offsets = [0, 11], sizes = [32, 1], strides = [1, 1]} : vector<32x16xf32> to vector<32x1xf32>
    %546 = vector.broadcast %545 : vector<32x1xf32> to vector<32x256xf32>
    %547 = vector.broadcast %485 : vector<1x256xf32> to vector<32x256xf32>
    %548 = arith.mulf %546, %547 : vector<32x256xf32>
    %549 = arith.addf %544, %548 : vector<32x256xf32>
    %550 = vector.extract_strided_slice %490 {offsets = [0, 12], sizes = [32, 1], strides = [1, 1]} : vector<32x16xf32> to vector<32x1xf32>
    %551 = vector.broadcast %550 : vector<32x1xf32> to vector<32x256xf32>
    %552 = vector.broadcast %486 : vector<1x256xf32> to vector<32x256xf32>
    %553 = arith.mulf %551, %552 : vector<32x256xf32>
    %554 = arith.addf %549, %553 : vector<32x256xf32>
    %555 = vector.extract_strided_slice %490 {offsets = [0, 13], sizes = [32, 1], strides = [1, 1]} : vector<32x16xf32> to vector<32x1xf32>
    %556 = vector.broadcast %555 : vector<32x1xf32> to vector<32x256xf32>
    %557 = vector.broadcast %487 : vector<1x256xf32> to vector<32x256xf32>
    %558 = arith.mulf %556, %557 : vector<32x256xf32>
    %559 = arith.addf %554, %558 : vector<32x256xf32>
    %560 = vector.extract_strided_slice %490 {offsets = [0, 14], sizes = [32, 1], strides = [1, 1]} : vector<32x16xf32> to vector<32x1xf32>
    %561 = vector.broadcast %560 : vector<32x1xf32> to vector<32x256xf32>
    %562 = vector.broadcast %488 : vector<1x256xf32> to vector<32x256xf32>
    %563 = arith.mulf %561, %562 : vector<32x256xf32>
    %564 = arith.addf %559, %563 : vector<32x256xf32>
    %565 = vector.extract_strided_slice %490 {offsets = [0, 15], sizes = [32, 1], strides = [1, 1]} : vector<32x16xf32> to vector<32x1xf32>
    %566 = vector.broadcast %565 : vector<32x1xf32> to vector<32x256xf32>
    %567 = vector.broadcast %489 : vector<1x256xf32> to vector<32x256xf32>
    %568 = arith.mulf %566, %567 : vector<32x256xf32>
    %569 = arith.addf %564, %568 : vector<32x256xf32>
    %c0_96 = arith.constant 0 : index
    %c0_97 = arith.constant 0 : index
    %570 = vector.load %arg15[%c0_96, %c0_97] : memref<32x1xf32, #tpu.memory_space<vmem>>, vector<32x1xf32>
    %571 = vector.broadcast %570 : vector<32x1xf32> to vector<32x256xf32>
    %572 = arith.addf %569, %571 : vector<32x256xf32>
    %c0_98 = arith.constant 0 : index
    %c0_99 = arith.constant 0 : index
    %c0_100 = arith.constant 0 : index
    %573 = vector.load %arg17[%c0_98, %c0_99, %c0_100] : memref<1x32x256xf32, #tpu.memory_space<vmem>>, vector<1x32x256xf32>
    %574 = vector.shape_cast %573 : vector<1x32x256xf32> to vector<32x256xf32>
    %575 = vector.shape_cast %572 : vector<32x256xf32> to vector<1x32x256xf32>
    tpu.vector_store %arg17[%c0_98, %c0_99, %c0_100], %575 {strides = array<i32>} : memref<1x32x256xf32, #tpu.memory_space<vmem>>, vector<1x32x256xf32>,
    return
  }
  func.func @transform_0(%arg0: i32) -> (i32, i32, i32) {
    %c0_i32 = arith.constant 0 : i32
    %c0_i32_0 = arith.constant 0 : i32
    %c0_i32_1 = arith.constant 0 : i32
    return %arg0, %c0_i32, %c0_i32_0 : i32, i32, i32
  }
  func.func @transform_1(%arg0: i32) -> (i32, i32, i32) {
    %c0_i32 = arith.constant 0 : i32
    %c0_i32_0 = arith.constant 0 : i32
    %c0_i32_1 = arith.constant 0 : i32
    return %arg0, %c0_i32, %c0_i32_0 : i32, i32, i32
  }
  func.func @transform_2(%arg0: i32) -> (i32, i32, i32) {
    %c0_i32 = arith.constant 0 : i32
    %c0_i32_0 = arith.constant 0 : i32
    %c0_i32_1 = arith.constant 0 : i32
    return %arg0, %c0_i32, %c0_i32_0 : i32, i32, i32
  }
  func.func @transform_3(%arg0: i32) -> (i32, i32) {
    %c0_i32 = arith.constant 0 : i32
    %c0_i32_0 = arith.constant 0 : i32
    %c0_i32_1 = arith.constant 0 : i32
    return %c0_i32, %c0_i32_0 : i32, i32
  }
  func.func @transform_4(%arg0: i32) -> (i32, i32) {
    %c0_i32 = arith.constant 0 : i32
    %c0_i32_0 = arith.constant 0 : i32
    %c0_i32_1 = arith.constant 0 : i32
    return %c0_i32, %c0_i32_0 : i32, i32
  }
  func.func @transform_5(%arg0: i32) -> (i32, i32) {
    %c0_i32 = arith.constant 0 : i32
    %c0_i32_0 = arith.constant 0 : i32
    %c0_i32_1 = arith.constant 0 : i32
    return %c0_i32, %c0_i32_0 : i32, i32
  }
  func.func @transform_6(%arg0: i32) -> (i32, i32) {
    %c0_i32 = arith.constant 0 : i32
    %c0_i32_0 = arith.constant 0 : i32
    %c0_i32_1 = arith.constant 0 : i32
    return %c0_i32, %c0_i32_0 : i32, i32
  }
  func.func @transform_7(%arg0: i32) -> (i32, i32) {
    %c0_i32 = arith.constant 0 : i32
    %c0_i32_0 = arith.constant 0 : i32
    %c0_i32_1 = arith.constant 0 : i32
    return %c0_i32, %c0_i32_0 : i32, i32
  }
  func.func @transform_8(%arg0: i32) -> (i32, i32) {
    %c0_i32 = arith.constant 0 : i32
    %c0_i32_0 = arith.constant 0 : i32
    %c0_i32_1 = arith.constant 0 : i32
    return %c0_i32, %c0_i32_0 : i32, i32
  }
  func.func @transform_9(%arg0: i32) -> (i32, i32) {
    %c0_i32 = arith.constant 0 : i32
    %c0_i32_0 = arith.constant 0 : i32
    %c0_i32_1 = arith.constant 0 : i32
    return %c0_i32, %c0_i32_0 : i32, i32
  }
  func.func @transform_10(%arg0: i32) -> (i32, i32) {
    %c0_i32 = arith.constant 0 : i32
    %c0_i32_0 = arith.constant 0 : i32
    %c0_i32_1 = arith.constant 0 : i32
    return %c0_i32, %c0_i32_0 : i32, i32
  }
  func.func @transform_11(%arg0: i32) -> (i32, i32) {
    %c0_i32 = arith.constant 0 : i32
    %c0_i32_0 = arith.constant 0 : i32
    %c0_i32_1 = arith.constant 0 : i32
    return %c0_i32, %c0_i32_0 : i32, i32
  }
  func.func @transform_12(%arg0: i32) -> (i32, i32) {
    %c0_i32 = arith.constant 0 : i32
    %c0_i32_0 = arith.constant 0 : i32
    %c0_i32_1 = arith.constant 0 : i32
    return %c0_i32, %c0_i32_0 : i32, i32
  }
  func.func @transform_13(%arg0: i32) -> (i32, i32) {
    %c0_i32 = arith.constant 0 : i32
    %c0_i32_0 = arith.constant 0 : i32
    %c0_i32_1 = arith.constant 0 : i32
    return %c0_i32, %c0_i32_0 : i32, i32
  }
  func.func @transform_14(%arg0: i32) -> (i32, i32) {
    %c0_i32 = arith.constant 0 : i32
    %c0_i32_0 = arith.constant 0 : i32
    %c0_i32_1 = arith.constant 0 : i32
    return %c0_i32, %c0_i32_0 : i32, i32
  }
  func.func @transform_15(%arg0: i32) -> (i32, i32, i32) {
    %c0_i32 = arith.constant 0 : i32
    %c0_i32_0 = arith.constant 0 : i32
    %c0_i32_1 = arith.constant 0 : i32
    return %arg0, %c0_i32, %c0_i32_0 : i32, i32, i32
  }
  func.func @transform_16(%arg0: i32) -> (i32, i32, i32) {
    %c0_i32 = arith.constant 0 : i32
    %c0_i32_0 = arith.constant 0 : i32
    %c0_i32_1 = arith.constant 0 : i32
    return %arg0, %c0_i32, %c0_i32_0 : i32, i32, i32
  }
}

</mosaic_0001>

<llo_original>
// kernel: _lambda_.1
$region0: #{_lambda_.1}
  #allocation0 [shape = 'u32[]', space=smem, size = 0x4, offset = 0x4, fixed_abs, tag = 'smem constant byte address 0x4 - core index']
  #allocation1 [shape = 'u32[144,128]{1,0:T(1,128)}', space=vmem, size = 0x12000, scoped, tag = 'internal scratch']
  %s0 = inlined_call_operand.vmem [shape: f32[2,16,256], index: 0, kind: input, shape index: {}]
  %s1 = inlined_call_operand.vmem [shape: f32[2,10,2], index: 1, kind: input, shape index: {}]
  %s2 = inlined_call_operand.vmem [shape: s32[2,10,1], index: 2, kind: input, shape index: {}]
  %s3 = inlined_call_operand.vmem [shape: f32[2,16], index: 3, kind: input, shape index: {}]
  %s4 = inlined_call_operand.vmem [shape: f32[5,32], index: 4, kind: input, shape index: {}]
  %s5 = inlined_call_operand.vmem [shape: f32[4,4], index: 5, kind: input, shape index: {}]
  %s6 = inlined_call_operand.vmem [shape: f32[4,1], index: 6, kind: input, shape index: {}]
  %s7 = inlined_call_operand.vmem [shape: f32[4,1], index: 7, kind: input, shape index: {}]
  %s8 = inlined_call_operand.vmem [shape: f32[4,1], index: 8, kind: input, shape index: {}]
  %s9 = inlined_call_operand.vmem [shape: f32[16,16], index: 9, kind: input, shape index: {}]
  %s10 = inlined_call_operand.vmem [shape: f32[16,1], index: 10, kind: input, shape index: {}]
  %s11 = inlined_call_operand.vmem [shape: f32[16,1], index: 11, kind: input, shape index: {}]
  %s12 = inlined_call_operand.vmem [shape: f32[16,1], index: 12, kind: input, shape index: {}]
  %s13 = inlined_call_operand.vmem [shape: f32[32,16], index: 13, kind: input, shape index: {}]
  %s14 = inlined_call_operand.vmem [shape: f32[32,1], index: 14, kind: input, shape index: {}]
  %s15 = inlined_call_operand.vmem [shape: f32[2,10,32], index: 15, kind: output, shape index: {0}]
  %s16 = inlined_call_operand.vmem [shape: f32[2,32,256], index: 16, kind: output, shape index: {1}]
  %17 = xla_tuple %s15, %s16
  %s18 = sld [smem:[#allocation0]]
  $region101: #{_lambda_.1} parent=0
    _
  %s20 = ssub.s32 1, %s18
  %s21 = scalar_select 0, %s20, %s18
  loop: start=0, step=1, limit=4
  $region2: #{_lambda_.1} parent=0 // loop_pre_header
    _
  $region3: #{_lambda_.1} parent=0 // loop_header
    %s23 = sphi 0, %s27
    %p24 = scmp.ge.s32.totalorder %s23, 4
    %s33 = sphi 0, %s35
    %s36 = sphi 0, %s33
    %s37 = sphi 0, %s36
    %s53 = sphi 0, %s37
    %s59 = sphi 0, %s61
    %s62 = sphi 0, %s59
    %s63 = sphi 0, %s62
    %s79 = sphi 0, %s63
    %s85 = sphi 0, %s87
    %s88 = sphi 0, %s85
    %s89 = sphi 0, %s88
    %s105 = sphi 0, %s89
    %s109 = sphi 0, %s109
    %s111 = sphi 0, %s109
    %s112 = sphi 0, %s111
    %s126 = sphi 0, %s112
    %s130 = sphi 0, %s130
    %s132 = sphi 0, %s130
    %s133 = sphi 0, %s132
    %s147 = sphi 0, %s133
    %s151 = sphi 0, %s151
    %s153 = sphi 0, %s151
    %s154 = sphi 0, %s153
    %s168 = sphi 0, %s154
    %s172 = sphi 0, %s172
    %s174 = sphi 0, %s172
    %s175 = sphi 0, %s174
    %s189 = sphi 0, %s175
    %s193 = sphi 0, %s193
    %s195 = sphi 0, %s193
    %s196 = sphi 0, %s195
    %s210 = sphi 0, %s196
    %s214 = sphi 0, %s214
    %s216 = sphi 0, %s214
    %s217 = sphi 0, %s216
    %s231 = sphi 0, %s217
    %s235 = sphi 0, %s235
    %s237 = sphi 0, %s235
    %s238 = sphi 0, %s237
    %s252 = sphi 0, %s238
    %s256 = sphi 0, %s256
    %s258 = sphi 0, %s256
    %s259 = sphi 0, %s258
    %s273 = sphi 0, %s259
    %s277 = sphi 0, %s277
    %s279 = sphi 0, %s277
    %s280 = sphi 0, %s279
    %s294 = sphi 0, %s280
    %s298 = sphi 0, %s298
    %s300 = sphi 0, %s298
    %s301 = sphi 0, %s300
    %s315 = sphi 0, %s301
    %s319 = sphi 0, %s319
    %s321 = sphi 0, %s319
    %s322 = sphi 0, %s321
    %s336 = sphi 0, %s322
    %s340 = sphi 0, %s340
    %s342 = sphi 0, %s340
    %s343 = sphi 0, %s342
    %s357 = sphi 0, %s343
    %s363 = sphi 0, %s365
    %s366 = sphi 0, %s363
    %s367 = sphi 0, %s366
    %s383 = sphi 0, %s367
    %s389 = sphi 0, %s391
    %s392 = sphi 0, %s389
    %s393 = sphi 0, %s392
    %s409 = sphi 0, %s393
  $region4: #{_lambda_.1} parent=0 // loop_header_branch
    %26 = sbr.rel (%p24) target = $region8
  $region5: #{_lambda_.1} parent=0 // loop_body
    %s28 = ssub.s32 %s23, 1
    %s29 = ssub.s32 %s23, 2
    %s30 = sadd.s32 %s23, 1
    %s31 = ssub.s32 %s23, %s30
    %p32 = scmp.eq.s32.totalorder %s31, 0
    %s34 = sadd.s32 %s33, 1
    %s35 = scalar_select %p32, %s33, %s34
    %p38 = pneg %p32
    %p39 = scmp.eq.s32.totalorder %s23, 1
    %p40 = por %p38, %p39
    %p41 = scmp.ne.s32.totalorder %s33, %s36
    %p42 = scmp.eq.s32.totalorder %s23, 0
    %p43 = por %p41, %p42
    %p44 = scmp.ne.s32.totalorder %s33, %s36
    %p45 = scmp.eq.s32.totalorder %s28, 1
    %p46 = por %p44, %p45
    %p47 = scmp.ne.s32.totalorder %s36, %s37
    %p48 = scmp.eq.s32.totalorder %s28, 0
    %p49 = por %p47, %p48
    %p50 = scmp.ne.s32.totalorder %s36, %s37
    %p51 = scmp.eq.s32.totalorder %s29, 1
    %p52 = por %p50, %p51
    %p54 = scmp.ne.s32.totalorder %s37, %s53
    %p55 = scmp.eq.s32.totalorder %s29, 0
    %p56 = por %p54, %p55
    %s57 = ssub.s32 %s23, %s30
    %p58 = scmp.eq.s32.totalorder %s57, 0
    %s60 = sadd.s32 %s59, 1
    %s61 = scalar_select %p58, %s59, %s60
    %p64 = pneg %p58
    %p65 = scmp.eq.s32.totalorder %s23, 1
    %p66 = por %p64, %p65
    %p67 = scmp.ne.s32.totalorder %s59, %s62
    %p68 = scmp.eq.s32.totalorder %s23, 0
    %p69 = por %p67, %p68
    %p70 = scmp.ne.s32.totalorder %s59, %s62
    %p71 = scmp.eq.s32.totalorder %s28, 1
    %p72 = por %p70, %p71
    %p73 = scmp.ne.s32.totalorder %s62, %s63
    %p74 = scmp.eq.s32.totalorder %s28, 0
    %p75 = por %p73, %p74
    %p76 = scmp.ne.s32.totalorder %s62, %s63
    %p77 = scmp.eq.s32.totalorder %s29, 1
    %p78 = por %p76, %p77
    %p80 = scmp.ne.s32.totalorder %s63, %s79
    %p81 = scmp.eq.s32.totalorder %s29, 0
    %p82 = por %p80, %p81
    %s83 = ssub.s32 %s23, %s30
    %p84 = scmp.eq.s32.totalorder %s83, 0
    %s86 = sadd.s32 %s85, 1
    %s87 = scalar_select %p84, %s85, %s86
    %p90 = pneg %p84
    %p91 = scmp.eq.s32.totalorder %s23, 1
    %p92 = por %p90, %p91
    %p93 = scmp.ne.s32.totalorder %s85, %s88
    %p94 = scmp.eq.s32.totalorder %s23, 0
    %p95 = por %p93, %p94
    %p96 = scmp.ne.s32.totalorder %s85, %s88
    %p97 = scmp.eq.s32.totalorder %s28, 1
    %p98 = por %p96, %p97
    %p99 = scmp.ne.s32.totalorder %s88, %s89
    %p100 = scmp.eq.s32.totalorder %s28, 0
    %p101 = por %p99, %p100
    %p102 = scmp.ne.s32.totalorder %s88, %s89
    %p103 = scmp.eq.s32.totalorder %s29, 1
    %p104 = por %p102, %p103
    %p106 = scmp.ne.s32.totalorder %s89, %s105
    %p107 = scmp.eq.s32.totalorder %s29, 0
    %p108 = por %p106, %p107
    %s110 = sadd.s32 %s109, 1
    %p113 = scmp.eq.s32.totalorder %s23, 1
    %p114 = scmp.ne.s32.totalorder %s109, %s111
    %p115 = scmp.eq.s32.totalorder %s23, 0
    %p116 = por %p114, %p115
    %p117 = scmp.ne.s32.totalorder %s109, %s111
    %p118 = scmp.eq.s32.totalorder %s28, 1
    %p119 = por %p117, %p118
    %p120 = scmp.ne.s32.totalorder %s111, %s112
    %p121 = scmp.eq.s32.totalorder %s28, 0
    %p122 = por %p120, %p121
    %p123 = scmp.ne.s32.totalorder %s111, %s112
    %p124 = scmp.eq.s32.totalorder %s29, 1
    %p125 = por %p123, %p124
    %p127 = scmp.ne.s32.totalorder %s112, %s126
    %p128 = scmp.eq.s32.totalorder %s29, 0
    %p129 = por %p127, %p128
    %s131 = sadd.s32 %s130, 1
    %p134 = scmp.eq.s32.totalorder %s23, 1
    %p135 = scmp.ne.s32.totalorder %s130, %s132
    %p136 = scmp.eq.s32.totalorder %s23, 0
    %p137 = por %p135, %p136
    %p138 = scmp.ne.s32.totalorder %s130, %s132
    %p139 = scmp.eq.s32.totalorder %s28, 1
    %p140 = por %p138, %p139
    %p141 = scmp.ne.s32.totalorder %s132, %s133
    %p142 = scmp.eq.s32.totalorder %s28, 0
    %p143 = por %p141, %p142
    %p144 = scmp.ne.s32.totalorder %s132, %s133
    %p145 = scmp.eq.s32.totalorder %s29, 1
    %p146 = por %p144, %p145
    %p148 = scmp.ne.s32.totalorder %s133, %s147
    %p149 = scmp.eq.s32.totalorder %s29, 0
    %p150 = por %p148, %p149
    %s152 = sadd.s32 %s151, 1
    %p155 = scmp.eq.s32.totalorder %s23, 1
    %p156 = scmp.ne.s32.totalorder %s151, %s153
    %p157 = scmp.eq.s32.totalorder %s23, 0
    %p158 = por %p156, %p157
    %p159 = scmp.ne.s32.totalorder %s151, %s153
    %p160 = scmp.eq.s32.totalorder %s28, 1
    %p161 = por %p159, %p160
    %p162 = scmp.ne.s32.totalorder %s153, %s154
    %p163 = scmp.eq.s32.totalorder %s28, 0
    %p164 = por %p162, %p163
    %p165 = scmp.ne.s32.totalorder %s153, %s154
    %p166 = scmp.eq.s32.totalorder %s29, 1
    %p167 = por %p165, %p166
    %p169 = scmp.ne.s32.totalorder %s154, %s168
    %p170 = scmp.eq.s32.totalorder %s29, 0
    %p171 = por %p169, %p170
    %s173 = sadd.s32 %s172, 1
    %p176 = scmp.eq.s32.totalorder %s23, 1
    %p177 = scmp.ne.s32.totalorder %s172, %s174
    %p178 = scmp.eq.s32.totalorder %s23, 0
    %p179 = por %p177, %p178
    %p180 = scmp.ne.s32.totalorder %s172, %s174
    %p181 = scmp.eq.s32.totalorder %s28, 1
    %p182 = por %p180, %p181
    %p183 = scmp.ne.s32.totalorder %s174, %s175
    %p184 = scmp.eq.s32.totalorder %s28, 0
    %p185 = por %p183, %p184
    %p186 = scmp.ne.s32.totalorder %s174, %s175
    %p187 = scmp.eq.s32.totalorder %s29, 1
    %p188 = por %p186, %p187
    %p190 = scmp.ne.s32.totalorder %s175, %s189
    %p191 = scmp.eq.s32.totalorder %s29, 0
    %p192 = por %p190, %p191
    %s194 = sadd.s32 %s193, 1
    %p197 = scmp.eq.s32.totalorder %s23, 1
    %p198 = scmp.ne.s32.totalorder %s193, %s195
    %p199 = scmp.eq.s32.totalorder %s23, 0
    %p200 = por %p198, %p199
    %p201 = scmp.ne.s32.totalorder %s193, %s195
    %p202 = scmp.eq.s32.totalorder %s28, 1
    %p203 = por %p201, %p202
    %p204 = scmp.ne.s32.totalorder %s195, %s196
    %p205 = scmp.eq.s32.totalorder %s28, 0
    %p206 = por %p204, %p205
    %p207 = scmp.ne.s32.totalorder %s195, %s196
    %p208 = scmp.eq.s32.totalorder %s29, 1
    %p209 = por %p207, %p208
    %p211 = scmp.ne.s32.totalorder %s196, %s210
    %p212 = scmp.eq.s32.totalorder %s29, 0
    %p213 = por %p211, %p212
    %s215 = sadd.s32 %s214, 1
    %p218 = scmp.eq.s32.totalorder %s23, 1
    %p219 = scmp.ne.s32.totalorder %s214, %s216
    %p220 = scmp.eq.s32.totalorder %s23, 0
    %p221 = por %p219, %p220
    %p222 = scmp.ne.s32.totalorder %s214, %s216
    %p223 = scmp.eq.s32.totalorder %s28, 1
    %p224 = por %p222, %p223
    %p225 = scmp.ne.s32.totalorder %s216, %s217
    %p226 = scmp.eq.s32.totalorder %s28, 0
    %p227 = por %p225, %p226
    %p228 = scmp.ne.s32.totalorder %s216, %s217
    %p229 = scmp.eq.s32.totalorder %s29, 1
    %p230 = por %p228, %p229
    %p232 = scmp.ne.s32.totalorder %s217, %s231
    %p233 = scmp.eq.s32.totalorder %s29, 0
    %p234 = por %p232, %p233
    %s236 = sadd.s32 %s235, 1
    %p239 = scmp.eq.s32.totalorder %s23, 1
    %p240 = scmp.ne.s32.totalorder %s235, %s237
    %p241 = scmp.eq.s32.totalorder %s23, 0
    %p242 = por %p240, %p241
    %p243 = scmp.ne.s32.totalorder %s235, %s237
    %p244 = scmp.eq.s32.totalorder %s28, 1
    %p245 = por %p243, %p244
    %p246 = scmp.ne.s32.totalorder %s237, %s238
    %p247 = scmp.eq.s32.totalorder %s28, 0
    %p248 = por %p246, %p247
    %p249 = scmp.ne.s32.totalorder %s237, %s238
    %p250 = scmp.eq.s32.totalorder %s29, 1
    %p251 = por %p249, %p250
    %p253 = scmp.ne.s32.totalorder %s238, %s252
    %p254 = scmp.eq.s32.totalorder %s29, 0
    %p255 = por %p253, %p254
    %s257 = sadd.s32 %s256, 1
    %p260 = scmp.eq.s32.totalorder %s23, 1
    %p261 = scmp.ne.s32.totalorder %s256, %s258
    %p262 = scmp.eq.s32.totalorder %s23, 0
    %p263 = por %p261, %p262
    %p264 = scmp.ne.s32.totalorder %s256, %s258
    %p265 = scmp.eq.s32.totalorder %s28, 1
    %p266 = por %p264, %p265
    %p267 = scmp.ne.s32.totalorder %s258, %s259
    %p268 = scmp.eq.s32.totalorder %s28, 0
    %p269 = por %p267, %p268
    %p270 = scmp.ne.s32.totalorder %s258, %s259
    %p271 = scmp.eq.s32.totalorder %s29, 1
    %p272 = por %p270, %p271
    %p274 = scmp.ne.s32.totalorder %s259, %s273
    %p275 = scmp.eq.s32.totalorder %s29, 0
    %p276 = por %p274, %p275
    %s278 = sadd.s32 %s277, 1
    %p281 = scmp.eq.s32.totalorder %s23, 1
    %p282 = scmp.ne.s32.totalorder %s277, %s279
    %p283 = scmp.eq.s32.totalorder %s23, 0
    %p284 = por %p282, %p283
    %p285 = scmp.ne.s32.totalorder %s277, %s279
    %p286 = scmp.eq.s32.totalorder %s28, 1
    %p287 = por %p285, %p286
    %p288 = scmp.ne.s32.totalorder %s279, %s280
    %p289 = scmp.eq.s32.totalorder %s28, 0
    %p290 = por %p288, %p289
    %p291 = scmp.ne.s32.totalorder %s279, %s280
    %p292 = scmp.eq.s32.totalorder %s29, 1
    %p293 = por %p291, %p292
    %p295 = scmp.ne.s32.totalorder %s280, %s294
    %p296 = scmp.eq.s32.totalorder %s29, 0
    %p297 = por %p295, %p296
    %s299 = sadd.s32 %s298, 1
    %p302 = scmp.eq.s32.totalorder %s23, 1
    %p303 = scmp.ne.s32.totalorder %s298, %s300
    %p304 = scmp.eq.s32.totalorder %s23, 0
    %p305 = por %p303, %p304
    %p306 = scmp.ne.s32.totalorder %s298, %s300
    %p307 = scmp.eq.s32.totalorder %s28, 1
    %p308 = por %p306, %p307
    %p309 = scmp.ne.s32.totalorder %s300, %s301
    %p310 = scmp.eq.s32.totalorder %s28, 0
    %p311 = por %p309, %p310
    %p312 = scmp.ne.s32.totalorder %s300, %s301
    %p313 = scmp.eq.s32.totalorder %s29, 1
    %p314 = por %p312, %p313
    %p316 = scmp.ne.s32.totalorder %s301, %s315
    %p317 = scmp.eq.s32.totalorder %s29, 0
    %p318 = por %p316, %p317
    %s320 = sadd.s32 %s319, 1
    %p323 = scmp.eq.s32.totalorder %s23, 1
    %p324 = scmp.ne.s32.totalorder %s319, %s321
    %p325 = scmp.eq.s32.totalorder %s23, 0
    %p326 = por %p324, %p325
    %p327 = scmp.ne.s32.totalorder %s319, %s321
    %p328 = scmp.eq.s32.totalorder %s28, 1
    %p329 = por %p327, %p328
    %p330 = scmp.ne.s32.totalorder %s321, %s322
    %p331 = scmp.eq.s32.totalorder %s28, 0
    %p332 = por %p330, %p331
    %p333 = scmp.ne.s32.totalorder %s321, %s322
    %p334 = scmp.eq.s32.totalorder %s29, 1
    %p335 = por %p333, %p334
    %p337 = scmp.ne.s32.totalorder %s322, %s336
    %p338 = scmp.eq.s32.totalorder %s29, 0
    %p339 = por %p337, %p338
    %s341 = sadd.s32 %s340, 1
    %p344 = scmp.eq.s32.totalorder %s23, 1
    %p345 = scmp.ne.s32.totalorder %s340, %s342
    %p346 = scmp.eq.s32.totalorder %s23, 0
    %p347 = por %p345, %p346
    %p348 = scmp.ne.s32.totalorder %s340, %s342
    %p349 = scmp.eq.s32.totalorder %s28, 1
    %p350 = por %p348, %p349
    %p351 = scmp.ne.s32.totalorder %s342, %s343
    %p352 = scmp.eq.s32.totalorder %s28, 0
    %p353 = por %p351, %p352
    %p354 = scmp.ne.s32.totalorder %s342, %s343
    %p355 = scmp.eq.s32.totalorder %s29, 1
    %p356 = por %p354, %p355
    %p358 = scmp.ne.s32.totalorder %s343, %s357
    %p359 = scmp.eq.s32.totalorder %s29, 0
    %p360 = por %p358, %p359
    %s361 = ssub.s32 %s23, %s30
    %p362 = scmp.eq.s32.totalorder %s361, 0
    %s364 = sadd.s32 %s363, 1
    %s365 = scalar_select %p362, %s363, %s364
    %p368 = pneg %p362
    %p369 = scmp.eq.s32.totalorder %s23, 1
    %p370 = por %p368, %p369
    %p371 = scmp.ne.s32.totalorder %s363, %s366
    %p372 = scmp.eq.s32.totalorder %s23, 0
    %p373 = por %p371, %p372
    %p374 = scmp.ne.s32.totalorder %s363, %s366
    %p375 = scmp.eq.s32.totalorder %s28, 1
    %p376 = por %p374, %p375
    %p377 = scmp.ne.s32.totalorder %s366, %s367
    %p378 = scmp.eq.s32.totalorder %s28, 0
    %p379 = por %p377, %p378
    %p380 = scmp.ne.s32.totalorder %s366, %s367
    %p381 = scmp.eq.s32.totalorder %s29, 1
    %p382 = por %p380, %p381
    %p384 = scmp.ne.s32.totalorder %s367, %s383
    %p385 = scmp.eq.s32.totalorder %s29, 0
    %p386 = por %p384, %p385
    %s387 = ssub.s32 %s23, %s30
    %p388 = scmp.eq.s32.totalorder %s387, 0
    %s390 = sadd.s32 %s389, 1
    %s391 = scalar_select %p388, %s389, %s390
    %p394 = pneg %p388
    %p395 = scmp.eq.s32.totalorder %s23, 1
    %p396 = por %p394, %p395
    %p397 = scmp.ne.s32.totalorder %s389, %s392
    %p398 = scmp.eq.s32.totalorder %s23, 0
    %p399 = por %p397, %p398
    %p400 = scmp.ne.s32.totalorder %s389, %s392
    %p401 = scmp.eq.s32.totalorder %s28, 1
    %p402 = por %p400, %p401
    %p403 = scmp.ne.s32.totalorder %s392, %s393
    %p404 = scmp.eq.s32.totalorder %s28, 0
    %p405 = por %p403, %p404
    %p406 = scmp.ne.s32.totalorder %s392, %s393
    %p407 = scmp.eq.s32.totalorder %s29, 1
    %p408 = por %p406, %p407
    %p410 = scmp.ne.s32.totalorder %s393, %s409
    %p411 = scmp.eq.s32.totalorder %s29, 0
    %p412 = por %p410, %p411
    %p413 = scmp.le.s32.totalorder 1, %s23
    %p414 = scmp.lt.s32.totalorder %s23, 3
    %p415 = pnand %p413, %p414
    %p416 = pneg %p415
    // Predicated region
    $region9: #{_lambda_.1} parent=5 // pred_check
      _
    $region10: #{_lambda_.1} parent=5 // pred_check_branch
      %418 = sbr.rel (%p415) target = $region12
    $region11: #{_lambda_.1} parent=5 // pred_region
      %s419 = ssub.s32 %s23, 1
      // Predicated region
      $region13: #{_lambda_.1} parent=11 // pred_check
        %p420 = pneg %p122
      $region14: #{_lambda_.1} parent=11 // pred_check_branch
        %422 = sbr.rel (%p420) target = $region16
      $region15: #{_lambda_.1} parent=11 // pred_region
        _
      $region16: #{_lambda_.1} parent=11 // pred_fallthru
        _
      // Predicated region
      $region17: #{_lambda_.1} parent=11 // pred_check
        %p423 = pneg %p143
      $region18: #{_lambda_.1} parent=11 // pred_check_branch
        %425 = sbr.rel (%p423) target = $region20
      $region19: #{_lambda_.1} parent=11 // pred_region
        _
      $region20: #{_lambda_.1} parent=11 // pred_fallthru
        _
      // Predicated region
      $region21: #{_lambda_.1} parent=11 // pred_check
        %p426 = pneg %p164
      $region22: #{_lambda_.1} parent=11 // pred_check_branch
        %428 = sbr.rel (%p426) target = $region24
      $region23: #{_lambda_.1} parent=11 // pred_region
        _
      $region24: #{_lambda_.1} parent=11 // pred_fallthru
        _
      // Predicated region
      $region25: #{_lambda_.1} parent=11 // pred_check
        %p429 = pneg %p185
      $region26: #{_lambda_.1} parent=11 // pred_check_branch
        %431 = sbr.rel (%p429) target = $region28
      $region27: #{_lambda_.1} parent=11 // pred_region
        _
      $region28: #{_lambda_.1} parent=11 // pred_fallthru
        _
      // Predicated region
      $region29: #{_lambda_.1} parent=11 // pred_check
        %p432 = pneg %p206
      $region30: #{_lambda_.1} parent=11 // pred_check_branch
        %434 = sbr.rel (%p432) target = $region32
      $region31: #{_lambda_.1} parent=11 // pred_region
        _
      $region32: #{_lambda_.1} parent=11 // pred_fallthru
        _
      // Predicated region
      $region33: #{_lambda_.1} parent=11 // pred_check
        %p435 = pneg %p227
      $region34: #{_lambda_.1} parent=11 // pred_check_branch
        %437 = sbr.rel (%p435) target = $region36
      $region35: #{_lambda_.1} parent=11 // pred_region
        _
      $region36: #{_lambda_.1} parent=11 // pred_fallthru
        _
      // Predicated region
      $region37: #{_lambda_.1} parent=11 // pred_check
        %p438 = pneg %p248
      $region38: #{_lambda_.1} parent=11 // pred_check_branch
        %440 = sbr.rel (%p438) target = $region40
      $region39: #{_lambda_.1} parent=11 // pred_region
        _
      $region40: #{_lambda_.1} parent=11 // pred_fallthru
        _
      // Predicated region
      $region41: #{_lambda_.1} parent=11 // pred_check
        %p441 = pneg %p269
      $region42: #{_lambda_.1} parent=11 // pred_check_branch
        %443 = sbr.rel (%p441) target = $region44
      $region43: #{_lambda_.1} parent=11 // pred_region
        _
      $region44: #{_lambda_.1} parent=11 // pred_fallthru
        _
      // Predicated region
      $region45: #{_lambda_.1} parent=11 // pred_check
        %p444 = pneg %p290
      $region46: #{_lambda_.1} parent=11 // pred_check_branch
        %446 = sbr.rel (%p444) target = $region48
      $region47: #{_lambda_.1} parent=11 // pred_region
        _
      $region48: #{_lambda_.1} parent=11 // pred_fallthru
        _
      // Predicated region
      $region49: #{_lambda_.1} parent=11 // pred_check
        %p447 = pneg %p311
      $region50: #{_lambda_.1} parent=11 // pred_check_branch
        %449 = sbr.rel (%p447) target = $region52
      $region51: #{_lambda_.1} parent=11 // pred_region
        _
      $region52: #{_lambda_.1} parent=11 // pred_fallthru
        _
      // Predicated region
      $region53: #{_lambda_.1} parent=11 // pred_check
        %p450 = pneg %p332
      $region54: #{_lambda_.1} parent=11 // pred_check_branch
        %452 = sbr.rel (%p450) target = $region56
      $region55: #{_lambda_.1} parent=11 // pred_region
        _
      $region56: #{_lambda_.1} parent=11 // pred_fallthru
        _
      // Predicated region
      $region57: #{_lambda_.1} parent=11 // pred_check
        %p453 = pneg %p353
      $region58: #{_lambda_.1} parent=11 // pred_check_branch
        %455 = sbr.rel (%p453) target = $region60
      $region59: #{_lambda_.1} parent=11 // pred_region
        _
      $region60: #{_lambda_.1} parent=11 // pred_fallthru
        _
    $region12: #{_lambda_.1} parent=5 // pred_fallthru
      _
    %p456 = scmp.lt.s32.totalorder %s23, 2
    // Predicated region
    $region61: #{_lambda_.1} parent=5 // pred_check
      %p457 = pneg %p456
    $region62: #{_lambda_.1} parent=5 // pred_check_branch
      %459 = sbr.rel (%p457) target = $region64
    $region63: #{_lambda_.1} parent=5 // pred_region
      // Predicated region
      $region65: #{_lambda_.1} parent=63 // pred_check
        %p460 = pneg %p43
      $region66: #{_lambda_.1} parent=63 // pred_check_branch
        %462 = sbr.rel (%p460) target = $region68
      $region67: #{_lambda_.1} parent=63 // pred_region
        %p463 = scmp.lt.s32.totalorder %s23, 1
        %s464 = scalar_select %p463, %s23, 1
        %s465 = smul.addr %s464, 4
        %s466 = smul.addr %s465, 8
        %s467 = scalar_lea.vmem %s0, %s466
      $region68: #{_lambda_.1} parent=63 // pred_fallthru
        _
      // Predicated region
      $region69: #{_lambda_.1} parent=63 // pred_check
        %p468 = pneg %p69
      $region70: #{_lambda_.1} parent=63 // pred_check_branch
        %470 = sbr.rel (%p468) target = $region72
      $region71: #{_lambda_.1} parent=63 // pred_region
        %p471 = scmp.lt.s32.totalorder %s23, 1
        %s472 = scalar_select %p471, %s23, 1
        %s473 = smul.addr %s472, 2
        %s474 = smul.addr %s473, 8
        %s475 = scalar_lea.vmem %s1, %s474
      $region72: #{_lambda_.1} parent=63 // pred_fallthru
        _
      // Predicated region
      $region73: #{_lambda_.1} parent=63 // pred_check
        %p476 = pneg %p95
      $region74: #{_lambda_.1} parent=63 // pred_check_branch
        %478 = sbr.rel (%p476) target = $region76
      $region75: #{_lambda_.1} parent=63 // pred_region
        %p479 = scmp.lt.s32.totalorder %s23, 1
        %s480 = scalar_select %p479, %s23, 1
        %s481 = smul.addr %s480, 2
        %s482 = smul.addr %s481, 8
        %s483 = scalar_lea.vmem %s2, %s482
      $region76: #{_lambda_.1} parent=63 // pred_fallthru
        _
    $region64: #{_lambda_.1} parent=5 // pred_fallthru
      _
    %p484 = scmp.le.s32.totalorder 1, %s23
    %p485 = scmp.lt.s32.totalorder %s23, 3
    %p486 = pnand %p484, %p485
    %p487 = pneg %p486
    // Predicated region
    $region77: #{_lambda_.1} parent=5 // pred_check
      _
    $region78: #{_lambda_.1} parent=5 // pred_check_branch
      %489 = sbr.rel (%p486) target = $region80
    $region79: #{_lambda_.1} parent=5 // pred_region
      %s490 = ssub.s32 %s23, 1
      %p491 = scmp.lt.s32.totalorder %s28, 1
      %s492 = scalar_select %p491, %s28, 1
      %s493 = smul.addr %s492, 4
      %s494 = smul.addr %s493, 8
      %s495 = scalar_lea.vmem %s0, %s494
      %p496 = pneg %p49
      %p497 = pneg %p46
      %p498 = scmp.lt.s32.totalorder %s28, 1
      %s499 = scalar_select %p498, %s28, 1
      %s500 = smul.addr %s499, 2
      %s501 = smul.addr %s500, 8
      %s502 = scalar_lea.vmem %s1, %s501
      %p503 = pneg %p75
      %p504 = pneg %p72
      %p505 = scmp.lt.s32.totalorder %s28, 1
      %s506 = scalar_select %p505, %s28, 1
      %s507 = smul.addr %s506, 2
      %s508 = smul.addr %s507, 8
      %s509 = scalar_lea.vmem %s2, %s508
      %p510 = pneg %p101
      %p511 = pneg %p98
      %p512 = pneg %p122
      %p513 = pneg %p119
      %p514 = pneg %p143
      %p515 = pneg %p140
      %p516 = pneg %p164
      %p517 = pneg %p161
      %p518 = pneg %p185
      %p519 = pneg %p182
      %p520 = pneg %p206
      %p521 = pneg %p203
      %p522 = pneg %p227
      %p523 = pneg %p224
      %p524 = pneg %p248
      %p525 = pneg %p245
      %p526 = pneg %p269
      %p527 = pneg %p266
      %p528 = pneg %p290
      %p529 = pneg %p287
      %p530 = pneg %p311
      %p531 = pneg %p308
      %p532 = pneg %p332
      %p533 = pneg %p329
      %p534 = pneg %p353
      %p535 = pneg %p350
      %p536 = pneg %p379
      %p537 = pneg %p376
      %p538 = scmp.lt.s32.totalorder %s28, 1
      %s539 = scalar_select %p538, %s28, 1
      %s540 = smul.addr %s539, 2
      %s541 = smul.addr %s540, 8
      %s542 = scalar_lea.vmem %s15, %s541
      %p543 = pneg %p405
      %p544 = pneg %p402
      %p545 = scmp.lt.s32.totalorder %s28, 1
      %s546 = scalar_select %p545, %s28, 1
      %s547 = smul.addr %s546, 8
      %s548 = smul.addr %s547, 8
      %s549 = scalar_lea.vmem %s16, %s548
      %p550 = scmp.lt.s32.totalorder %s28, 1
      %s551 = scalar_select %p550, %s28, 1
      %s552 = smul.addr %s551, 4
      %s553 = smul.addr %s552, 8
      %s554 = scalar_lea.vmem %s0, %s553
      %p555 = scmp.lt.s32.totalorder %s28, 1
      %s556 = scalar_select %p555, %s28, 1
      %s557 = smul.addr %s556, 2
      %s558 = smul.addr %s557, 8
      %s559 = scalar_lea.vmem %s1, %s558
      %p560 = scmp.lt.s32.totalorder %s28, 1
      %s561 = scalar_select %p560, %s28, 1
      %s562 = smul.addr %s561, 2
      %s563 = smul.addr %s562, 8
      %s564 = scalar_lea.vmem %s2, %s563
      %p565 = scmp.lt.s32.totalorder %s28, 1
      %s566 = scalar_select %p565, %s28, 1
      %s567 = smul.addr %s566, 2
      %s568 = smul.addr %s567, 8
      %s569 = scalar_lea.vmem %s15, %s568
      %p570 = scmp.lt.s32.totalorder %s28, 1
      %s571 = scalar_select %p570, %s28, 1
      %s572 = smul.addr %s571, 8
      %s573 = smul.addr %s572, 8
      %s574 = scalar_lea.vmem %s16, %s573
      %v575 = vld [vmem:[%s559] sm:$0xff]
      %v576 = vld [vmem:[%s559 + $0x8] sm:$0x3]
      %v577 = vadd.f32 %v575, 0.5
      %v578 = vadd.f32 %v576, 0.5
      %v579 = vmul.f32 %v577, 0.03125
      %v580 = vmul.f32 %v578, 0.03125
      %v581 = vsub.f32 %v579, 1.0
      %v582 = vsub.f32 %v580, 1.0
      %v583 = vld [vmem:[%s3] sm:$0x3]
      %585 = vset.pattern.permute.xlu0 0
      %586 = vperm.xlu0 %585, %v581
      %v587 = vpop.permute.xlu0 %586
      %590 = vset.pattern.permute.xlu0 0
      %591 = vperm.xlu0 %590, %v582
      %v592 = vpop.permute.xlu0 %591
      %v594 = vlaneseq
      %v595 = vshrl.u32 %v594, 7
      %v596 = vsub.s32 0, %v595
      %v597 = vrot.slane %v583, %v596
      %v598 = vmul.f32 %v587, %v597
      %v599 = vmul.f32 %v592, %v597
      %600 = vset.pattern.permute.xlu0 1
      %601 = vperm.xlu0 %600, %v581
      %v602 = vpop.permute.xlu0 %601
      %604 = vset.pattern.permute.xlu0 1
      %605 = vperm.xlu0 %604, %v582
      %v606 = vpop.permute.xlu0 %605
      %v608 = vlaneseq
      %v609 = vshrl.u32 %v608, 7
      %v610 = vsub.s32 1, %v609
      %v611 = vrot.slane %v583, %v610
      %v612 = vmul.f32 %v602, %v611
      %v613 = vmul.f32 %v606, %v611
      %v614 = vadd.f32 %v598, %v612
      %v615 = vadd.f32 %v599, %v613
      %v616 = vmul.f32 %v614, 6.2831855
      %v617 = vmul.f32 %v615, 6.2831855
      %v618 = vand.u32 2147483647, %v616
      %vm619 = vcmp.le.f32.partialorder %v618, 0.7853982
      %vm620 = vcmp.lt.s32.totalorder %v616, 0
      %v621 = vand.u32 %v616, 2139095040
      %v622 = vshrl.u32 %v621, 23
      %v623 = vsub.s32 %v622, 127
      %v624 = vand.u32 2147483647, %v616
      %v625 = vand.u32 %v624, 8388607
      %v626 = vor.u32 %v625, 8388608
      %v627 = vsub.s32 0, %v626
      %v628 = vadd.s32 %v623, 1
      %vm629 = vcmp.gt.s32.totalorder %v628, 0
      %v630 = vsel %vm629, %v628, 0
      %v631 = vshrl.u32 %v630, 5
      %v632 = vand.u32 %v630, 31
      %v633 = vsub.s32 32, %v632
      %v634 = vshrl.u32 683565275, %v633
      %v635 = vshll.u32 683565275, %v632
      %v636 = vshrl.u32 2475754826, %v633
      %v637 = vor.u32 %v635, %v636
      %v638 = vshll.u32 2475754826, %v632
      %v639 = vshrl.u32 2131351028, %v633
      %v640 = vor.u32 %v638, %v639
      %v641 = vshll.u32 2131351028, %v632
      %v642 = vshrl.u32 2102212464, %v633
      %v643 = vor.u32 %v641, %v642
      %v644 = vshll.u32 2102212464, %v632
      %v645 = vshrl.u32 920167782, %v633
      %v646 = vor.u32 %v644, %v645
      %v647 = vshll.u32 920167782, %v632
      %v648 = vshrl.u32 1326507024, %v633
      %v649 = vor.u32 %v647, %v648
      %vm650 = vcmp.lt.s32.totalorder %v631, 1
      %vm651 = vcmp.lt.s32.totalorder %v631, 2
      %vm652 = vcmp.lt.s32.totalorder %v631, 3
      %vm653 = vcmp.lt.s32.totalorder %v631, 4
      %v654 = vsel %vm650, %v634, %v637
      %v655 = vsel %vm653, %v643, 2102212464
      %v656 = vsel %vm652, %v640, %v655
      %v657 = vsel %vm651, %v654, %v656
      %v658 = vsel %vm650, %v637, %v640
      %v659 = vsel %vm653, %v646, 920167782
      %v660 = vsel %vm652, %v643, %v659
      %v661 = vsel %vm651, %v658, %v660
      %v662 = vsel %vm650, %v640, %v643
      %v663 = vsel %vm653, %v649, 1326507024
      %v664 = vsel %vm652, %v646, %v663
      %v665 = vsel %vm651, %v662, %v664
      %v666 = vshll.u32 %v626, 8
      %v667 = vmul.u32.u64.compose %v666, %v665
      %v668 = vextract.low.u32 %v667
      %v669 = vextract.high.u32 %v667
      %v670 = vmul.u32.u64.compose %v666, %v661
      %v671 = vextract.low.u32 %v670
      %v672 = vextract.high.u32 %v670
      %v673 = vmul.u32 %v666, %v657
      %v674 = vadd.s32 %v669, %v671
      %vm675 = vc.u32 %v669, %v671
      %v676 = vadd.s32 %v672, 1
      %v677 = vsel %vm675, %v676, %v672
      %v678 = vadd.s32 %v673, %v677
      %v679 = vadd.s32 %v678, 536870912
      %v680 = vshrl.u32 %v679, 30
      %v681 = vshll.u32 %v680, 30
      %v682 = vsub.s32 %v678, %v681
      %vm683 = vcmp.lt.s32.totalorder %v682, 0
      %v684 = vsub.s32 0, %v682
      %v685 = vsel %vm683, %v684, %v682
      %v686 = vclz %v685
      %v687 = vsub.s32 %v686, 2
      %vm688 = vcmp.gt.s32.totalorder 0, %v687
      %v689 = vsel %vm688, 0, %v687
      %v690 = vsub.s32 32, %v689
      %v691 = vshll.u32 %v682, %v689
      %v692 = vshrl.u32 %v674, %v690
      %v693 = vor.u32 %v691, %v692
      %v694 = vsub.s32 4294967266, %v689
      %v695 = vadd.s32 %v694, 127
      %v696 = vshll.u32 %v695, 23
      %v697 = vor.u32 4788187, %v696
      %v698 = vand.u32 2147483647, %v697
      %v700 = vcvt.s32.f32 %v693
      %v701 = vmul.f32 %v700, %v698
      %v702 = vxor.u32 %v701, 2147483648
      %v703 = vsel %vm620, %v702, %v701
      %v704 = vsub.s32 4, %v680
      %v705 = vsel %vm620, %v704, %v680
      %v706 = vsel %vm619, %v616, %v703
      %v707 = vsel %vm619, 0, %v705
      %v708 = vcosq.f32.pop %v706
      %v709 = vsinq.f32.pop %v706
      %vm710 = vweird.f32 %v616
      %v711 = vadd.s32 %v707, 3
      %v712 = vand.u32 %v711, 3
      %vm713 = vcmp.lt.s32.totalorder %v712, 2
      %vm714 = vcmp.eq.s32.totalorder %v712, 0
      %v715 = vxor.u32 %v709, 2147483648
      %v716 = vsel %vm714, %v708, %v715
      %vm717 = vcmp.eq.s32.totalorder %v712, 2
      %v718 = vxor.u32 %v708, 2147483648
      %v719 = vsel %vm717, %v718, %v709
      %v720 = vsel %vm713, %v716, %v719
      %v721 = vsel %vm710, nan, %v720
      %v722 = vand.u32 2147483647, %v617
      %vm723 = vcmp.le.f32.partialorder %v722, 0.7853982
      %vm724 = vcmp.lt.s32.totalorder %v617, 0
      %v725 = vand.u32 %v617, 2139095040
      %v726 = vshrl.u32 %v725, 23
      %v727 = vsub.s32 %v726, 127
      %v728 = vand.u32 2147483647, %v617
      %v729 = vand.u32 %v728, 8388607
      %v730 = vor.u32 %v729, 8388608
      %v731 = vsub.s32 0, %v730
      %v732 = vadd.s32 %v727, 1
      %vm733 = vcmp.gt.s32.totalorder %v732, 0
      %v734 = vsel %vm733, %v732, 0
      %v735 = vshrl.u32 %v734, 5
      %v736 = vand.u32 %v734, 31
      %v737 = vsub.s32 32, %v736
      %v738 = vshrl.u32 683565275, %v737
      %v739 = vshll.u32 683565275, %v736
      %v740 = vshrl.u32 2475754826, %v737
      %v741 = vor.u32 %v739, %v740
      %v742 = vshll.u32 2475754826, %v736
      %v743 = vshrl.u32 2131351028, %v737
      %v744 = vor.u32 %v742, %v743
      %v745 = vshll.u32 2131351028, %v736
      %v746 = vshrl.u32 2102212464, %v737
      %v747 = vor.u32 %v745, %v746
      %v748 = vshll.u32 2102212464, %v736
      %v749 = vshrl.u32 920167782, %v737
      %v750 = vor.u32 %v748, %v749
      %v751 = vshll.u32 920167782, %v736
      %v752 = vshrl.u32 1326507024, %v737
      %v753 = vor.u32 %v751, %v752
      %vm754 = vcmp.lt.s32.totalorder %v735, 1
      %vm755 = vcmp.lt.s32.totalorder %v735, 2
      %vm756 = vcmp.lt.s32.totalorder %v735, 3
      %vm757 = vcmp.lt.s32.totalorder %v735, 4
      %v758 = vsel %vm754, %v738, %v741
      %v759 = vsel %vm757, %v747, 2102212464
      %v760 = vsel %vm756, %v744, %v759
      %v761 = vsel %vm755, %v758, %v760
      %v762 = vsel %vm754, %v741, %v744
      %v763 = vsel %vm757, %v750, 920167782
      %v764 = vsel %vm756, %v747, %v763
      %v765 = vsel %vm755, %v762, %v764
      %v766 = vsel %vm754, %v744, %v747
      %v767 = vsel %vm757, %v753, 1326507024
      %v768 = vsel %vm756, %v750, %v767
      %v769 = vsel %vm755, %v766, %v768
      %v770 = vshll.u32 %v730, 8
      %v771 = vmul.u32.u64.compose %v770, %v769
      %v772 = vextract.low.u32 %v771
      %v773 = vextract.high.u32 %v771
      %v774 = vmul.u32.u64.compose %v770, %v765
      %v775 = vextract.low.u32 %v774
      %v776 = vextract.high.u32 %v774
      %v777 = vmul.u32 %v770, %v761
      %v778 = vadd.s32 %v773, %v775
      %vm779 = vc.u32 %v773, %v775
      %v780 = vadd.s32 %v776, 1
      %v781 = vsel %vm779, %v780, %v776
      %v782 = vadd.s32 %v777, %v781
      %v783 = vadd.s32 %v782, 536870912
      %v784 = vshrl.u32 %v783, 30
      %v785 = vshll.u32 %v784, 30
      %v786 = vsub.s32 %v782, %v785
      %vm787 = vcmp.lt.s32.totalorder %v786, 0
      %v788 = vsub.s32 0, %v786
      %v789 = vsel %vm787, %v788, %v786
      %v790 = vclz %v789
      %v791 = vsub.s32 %v790, 2
      %vm792 = vcmp.gt.s32.totalorder 0, %v791
      %v793 = vsel %vm792, 0, %v791
      %v794 = vsub.s32 32, %v793
      %v795 = vshll.u32 %v786, %v793
      %v796 = vshrl.u32 %v778, %v794
      %v797 = vor.u32 %v795, %v796
      %v798 = vsub.s32 4294967266, %v793
      %v799 = vadd.s32 %v798, 127
      %v800 = vshll.u32 %v799, 23
      %v801 = vor.u32 4788187, %v800
      %v802 = vand.u32 2147483647, %v801
      %v804 = vcvt.s32.f32 %v797
      %v805 = vmul.f32 %v804, %v802
      %v806 = vxor.u32 %v805, 2147483648
      %v807 = vsel %vm724, %v806, %v805
      %v808 = vsub.s32 4, %v784
      %v809 = vsel %vm724, %v808, %v784
      %v810 = vsel %vm723, %v617, %v807
      %v811 = vsel %vm723, 0, %v809
      %v812 = vcosq.f32.pop %v810
      %v813 = vsinq.f32.pop %v810
      %vm814 = vweird.f32 %v617
      %v815 = vadd.s32 %v811, 3
      %v816 = vand.u32 %v815, 3
      %vm817 = vcmp.lt.s32.totalorder %v816, 2
      %vm818 = vcmp.eq.s32.totalorder %v816, 0
      %v819 = vxor.u32 %v813, 2147483648
      %v820 = vsel %vm818, %v812, %v819
      %vm821 = vcmp.eq.s32.totalorder %v816, 2
      %v822 = vxor.u32 %v812, 2147483648
      %v823 = vsel %vm821, %v822, %v813
      %v824 = vsel %vm817, %v820, %v823
      %v825 = vsel %vm814, nan, %v824
      %v826 = vand.u32 2147483647, %v616
      %vm827 = vcmp.le.f32.partialorder %v826, 0.7853982
      %vm828 = vcmp.lt.s32.totalorder %v616, 0
      %v829 = vand.u32 %v616, 2139095040
      %v830 = vshrl.u32 %v829, 23
      %v831 = vsub.s32 %v830, 127
      %v832 = vand.u32 2147483647, %v616
      %v833 = vand.u32 %v832, 8388607
      %v834 = vor.u32 %v833, 8388608
      %v835 = vsub.s32 0, %v834
      %v836 = vadd.s32 %v831, 1
      %vm837 = vcmp.gt.s32.totalorder %v836, 0
      %v838 = vsel %vm837, %v836, 0
      %v839 = vshrl.u32 %v838, 5
      %v840 = vand.u32 %v838, 31
      %v841 = vsub.s32 32, %v840
      %v842 = vshrl.u32 683565275, %v841
      %v843 = vshll.u32 683565275, %v840
      %v844 = vshrl.u32 2475754826, %v841
      %v845 = vor.u32 %v843, %v844
      %v846 = vshll.u32 2475754826, %v840
      %v847 = vshrl.u32 2131351028, %v841
      %v848 = vor.u32 %v846, %v847
      %v849 = vshll.u32 2131351028, %v840
      %v850 = vshrl.u32 2102212464, %v841
      %v851 = vor.u32 %v849, %v850
      %v852 = vshll.u32 2102212464, %v840
      %v853 = vshrl.u32 920167782, %v841
      %v854 = vor.u32 %v852, %v853
      %v855 = vshll.u32 920167782, %v840
      %v856 = vshrl.u32 1326507024, %v841
      %v857 = vor.u32 %v855, %v856
      %vm858 = vcmp.lt.s32.totalorder %v839, 1
      %vm859 = vcmp.lt.s32.totalorder %v839, 2
      %vm860 = vcmp.lt.s32.totalorder %v839, 3
      %vm861 = vcmp.lt.s32.totalorder %v839, 4
      %v862 = vsel %vm858, %v842, %v845
      %v863 = vsel %vm861, %v851, 2102212464
      %v864 = vsel %vm860, %v848, %v863
      %v865 = vsel %vm859, %v862, %v864
      %v866 = vsel %vm858, %v845, %v848
      %v867 = vsel %vm861, %v854, 920167782
      %v868 = vsel %vm860, %v851, %v867
      %v869 = vsel %vm859, %v866, %v868
      %v870 = vsel %vm858, %v848, %v851
      %v871 = vsel %vm861, %v857, 1326507024
      %v872 = vsel %vm860, %v854, %v871
      %v873 = vsel %vm859, %v870, %v872
      %v874 = vshll.u32 %v834, 8
      %v875 = vmul.u32.u64.compose %v874, %v873
      %v876 = vextract.low.u32 %v875
      %v877 = vextract.high.u32 %v875
      %v878 = vmul.u32.u64.compose %v874, %v869
      %v879 = vextract.low.u32 %v878
      %v880 = vextract.high.u32 %v878
      %v881 = vmul.u32 %v874, %v865
      %v882 = vadd.s32 %v877, %v879
      %vm883 = vc.u32 %v877, %v879
      %v884 = vadd.s32 %v880, 1
      %v885 = vsel %vm883, %v884, %v880
      %v886 = vadd.s32 %v881, %v885
      %v887 = vadd.s32 %v886, 536870912
      %v888 = vshrl.u32 %v887, 30
      %v889 = vshll.u32 %v888, 30
      %v890 = vsub.s32 %v886, %v889
      %vm891 = vcmp.lt.s32.totalorder %v890, 0
      %v892 = vsub.s32 0, %v890
      %v893 = vsel %vm891, %v892, %v890
      %v894 = vclz %v893
      %v895 = vsub.s32 %v894, 2
      %vm896 = vcmp.gt.s32.totalorder 0, %v895
      %v897 = vsel %vm896, 0, %v895
      %v898 = vsub.s32 32, %v897
      %v899 = vshll.u32 %v890, %v897
      %v900 = vshrl.u32 %v882, %v898
      %v901 = vor.u32 %v899, %v900
      %v902 = vsub.s32 4294967266, %v897
      %v903 = vadd.s32 %v902, 127
      %v904 = vshll.u32 %v903, 23
      %v905 = vor.u32 4788187, %v904
      %v906 = vand.u32 2147483647, %v905
      %v908 = vcvt.s32.f32 %v901
      %v909 = vmul.f32 %v908, %v906
      %v910 = vxor.u32 %v909, 2147483648
      %v911 = vsel %vm828, %v910, %v909
      %v912 = vsub.s32 4, %v888
      %v913 = vsel %vm828, %v912, %v888
      %v914 = vsel %vm827, %v616, %v911
      %v915 = vsel %vm827, 0, %v913
      %v916 = vcosq.f32.pop %v914
      %v917 = vsinq.f32.pop %v914
      %vm918 = vweird.f32 %v616
      %v919 = vand.u32 %v915, 3
      %vm920 = vcmp.lt.s32.totalorder %v919, 2
      %vm921 = vcmp.eq.s32.totalorder %v919, 0
      %v922 = vxor.u32 %v917, 2147483648
      %v923 = vsel %vm921, %v916, %v922
      %vm924 = vcmp.eq.s32.totalorder %v919, 2
      %v925 = vxor.u32 %v916, 2147483648
      %v926 = vsel %vm924, %v925, %v917
      %v927 = vsel %vm920, %v923, %v926
      %v928 = vsel %vm918, nan, %v927
      %v929 = vand.u32 2147483647, %v617
      %vm930 = vcmp.le.f32.partialorder %v929, 0.7853982
      %vm931 = vcmp.lt.s32.totalorder %v617, 0
      %v932 = vand.u32 %v617, 2139095040
      %v933 = vshrl.u32 %v932, 23
      %v934 = vsub.s32 %v933, 127
      %v935 = vand.u32 2147483647, %v617
      %v936 = vand.u32 %v935, 8388607
      %v937 = vor.u32 %v936, 8388608
      %v938 = vsub.s32 0, %v937
      %v939 = vadd.s32 %v934, 1
      %vm940 = vcmp.gt.s32.totalorder %v939, 0
      %v941 = vsel %vm940, %v939, 0
      %v942 = vshrl.u32 %v941, 5
      %v943 = vand.u32 %v941, 31
      %v944 = vsub.s32 32, %v943
      %v945 = vshrl.u32 683565275, %v944
      %v946 = vshll.u32 683565275, %v943
      %v947 = vshrl.u32 2475754826, %v944
      %v948 = vor.u32 %v946, %v947
      %v949 = vshll.u32 2475754826, %v943
      %v950 = vshrl.u32 2131351028, %v944
      %v951 = vor.u32 %v949, %v950
      %v952 = vshll.u32 2131351028, %v943
      %v953 = vshrl.u32 2102212464, %v944
      %v954 = vor.u32 %v952, %v953
      %v955 = vshll.u32 2102212464, %v943
      %v956 = vshrl.u32 920167782, %v944
      %v957 = vor.u32 %v955, %v956
      %v958 = vshll.u32 920167782, %v943
      %v959 = vshrl.u32 1326507024, %v944
      %v960 = vor.u32 %v958, %v959
      %vm961 = vcmp.lt.s32.totalorder %v942, 1
      %vm962 = vcmp.lt.s32.totalorder %v942, 2
      %vm963 = vcmp.lt.s32.totalorder %v942, 3
      %vm964 = vcmp.lt.s32.totalorder %v942, 4
      %v965 = vsel %vm961, %v945, %v948
      %v966 = vsel %vm964, %v954, 2102212464
      %v967 = vsel %vm963, %v951, %v966
      %v968 = vsel %vm962, %v965, %v967
      %v969 = vsel %vm961, %v948, %v951
      %v970 = vsel %vm964, %v957, 920167782
      %v971 = vsel %vm963, %v954, %v970
      %v972 = vsel %vm962, %v969, %v971
      %v973 = vsel %vm961, %v951, %v954
      %v974 = vsel %vm964, %v960, 1326507024
      %v975 = vsel %vm963, %v957, %v974
      %v976 = vsel %vm962, %v973, %v975
      %v977 = vshll.u32 %v937, 8
      %v978 = vmul.u32.u64.compose %v977, %v976
      %v979 = vextract.low.u32 %v978
      %v980 = vextract.high.u32 %v978
      %v981 = vmul.u32.u64.compose %v977, %v972
      %v982 = vextract.low.u32 %v981
      %v983 = vextract.high.u32 %v981
      %v984 = vmul.u32 %v977, %v968
      %v985 = vadd.s32 %v980, %v982
      %vm986 = vc.u32 %v980, %v982
      %v987 = vadd.s32 %v983, 1
      %v988 = vsel %vm986, %v987, %v983
      %v989 = vadd.s32 %v984, %v988
      %v990 = vadd.s32 %v989, 536870912
      %v991 = vshrl.u32 %v990, 30
      %v992 = vshll.u32 %v991, 30
      %v993 = vsub.s32 %v989, %v992
      %vm994 = vcmp.lt.s32.totalorder %v993, 0
      %v995 = vsub.s32 0, %v993
      %v996 = vsel %vm994, %v995, %v993
      %v997 = vclz %v996
      %v998 = vsub.s32 %v997, 2
      %vm999 = vcmp.gt.s32.totalorder 0, %v998
      %v1000 = vsel %vm999, 0, %v998
      %v1001 = vsub.s32 32, %v1000
      %v1002 = vshll.u32 %v993, %v1000
      %v1003 = vshrl.u32 %v985, %v1001
      %v1004 = vor.u32 %v1002, %v1003
      %v1005 = vsub.s32 4294967266, %v1000
      %v1006 = vadd.s32 %v1005, 127
      %v1007 = vshll.u32 %v1006, 23
      %v1008 = vor.u32 4788187, %v1007
      %v1009 = vand.u32 2147483647, %v1008
      %v1011 = vcvt.s32.f32 %v1004
      %v1012 = vmul.f32 %v1011, %v1009
      %v1013 = vxor.u32 %v1012, 2147483648
      %v1014 = vsel %vm931, %v1013, %v1012
      %v1015 = vsub.s32 4, %v991
      %v1016 = vsel %vm931, %v1015, %v991
      %v1017 = vsel %vm930, %v617, %v1014
      %v1018 = vsel %vm930, 0, %v1016
      %v1019 = vcosq.f32.pop %v1017
      %v1020 = vsinq.f32.pop %v1017
      %vm1021 = vweird.f32 %v617
      %v1022 = vand.u32 %v1018, 3
      %vm1023 = vcmp.lt.s32.totalorder %v1022, 2
      %vm1024 = vcmp.eq.s32.totalorder %v1022, 0
      %v1025 = vxor.u32 %v1020, 2147483648
      %v1026 = vsel %vm1024, %v1019, %v1025
      %vm1027 = vcmp.eq.s32.totalorder %v1022, 2
      %v1028 = vxor.u32 %v1019, 2147483648
      %v1029 = vsel %vm1027, %v1028, %v1020
      %v1030 = vsel %vm1023, %v1026, %v1029
      %v1031 = vsel %vm1021, nan, %v1030
      %1034 = vrot.lane.b32.xlu0 %v928, 16
      %v1035 = vpop.permute.xlu0 %1034
      %1036 = vrot.lane.b32.xlu0 %v1031, 16
      %v1037 = vpop.permute.xlu0 %1036
      %vm1040 = vcmask 130048
      %v1041 = vsel %vm1040, %v721, %v1035
      %v1042 = vsel %vm1040, %v825, %v1037
      %v1043 = vld [vmem:[%s564] sm:$0xff]
      %v1044 = vld [vmem:[%s564 + $0x8] sm:$0x3]
      %v1045 = vld [vmem:[%s4] sm:$0x1f]
      %vm1046 = vcmp.ge.s32.totalorder %v1043, 0
      %vm1047 = vcmp.ge.s32.totalorder %v1044, 0
      %v1048 = vsel %vm1046, 1.0, 0.0
      %v1049 = vsel %vm1047, 1.0, 0.0
      %1051 = vset.pattern.permute.xlu0 0
      %1052 = vperm.xlu0 %1051, %v1048
      %v1053 = vpop.permute.xlu0 %1052
      %1056 = vset.pattern.permute.xlu0 0
      %1057 = vperm.xlu0 %1056, %v1049
      %v1058 = vpop.permute.xlu0 %1057
      %v1060 = vmul.f32 %v1041, %v1053
      %v1061 = vmul.f32 %v1042, %v1058
      %vm1062 = vcmp.eq.s32.totalorder %v1043, 4294967295
      %vm1063 = vcmp.eq.s32.totalorder %v1044, 4294967295
      %v1064 = vsel %vm1062, 1.0, 0.0
      %v1065 = vsel %vm1063, 1.0, 0.0
      %1067 = vset.pattern.permute.xlu0 0
      %1068 = vperm.xlu0 %1067, %v1064
      %v1069 = vpop.permute.xlu0 %1068
      %1072 = vset.pattern.permute.xlu0 0
      %1073 = vperm.xlu0 %1072, %v1065
      %v1074 = vpop.permute.xlu0 %1073
      %v1076 = vlaneseq
      %v1077 = vshrl.u32 %v1076, 7
      %v1078 = vsub.s32 0, %v1077
      %v1079 = vrot.slane %v1045, %v1078
      %v1080 = vmul.f32 %v1069, %v1079
      %v1081 = vmul.f32 %v1074, %v1079
      %v1082 = vadd.f32 %v1060, %v1080
      %v1083 = vadd.f32 %v1061, %v1081
      %vm1084 = vcmp.eq.s32.totalorder %v1043, 0
      %vm1085 = vcmp.eq.s32.totalorder %v1044, 0
      %v1086 = vsel %vm1084, 1.0, 0.0
      %v1087 = vsel %vm1085, 1.0, 0.0
      %1089 = vset.pattern.permute.xlu0 0
      %1090 = vperm.xlu0 %1089, %v1086
      %v1091 = vpop.permute.xlu0 %1090
      %1094 = vset.pattern.permute.xlu0 0
      %1095 = vperm.xlu0 %1094, %v1087
      %v1096 = vpop.permute.xlu0 %1095
      %v1098 = vlaneseq
      %v1099 = vshrl.u32 %v1098, 7
      %v1100 = vsub.s32 1, %v1099
      %v1101 = vrot.slane %v1045, %v1100
      %v1102 = vmul.f32 %v1091, %v1101
      %v1103 = vmul.f32 %v1096, %v1101
      %v1104 = vadd.f32 %v1082, %v1102
      %v1105 = vadd.f32 %v1083, %v1103
      %vm1106 = vcmp.eq.s32.totalorder %v1043, 1
      %vm1107 = vcmp.eq.s32.totalorder %v1044, 1
      %v1108 = vsel %vm1106, 1.0, 0.0
      %v1109 = vsel %vm1107, 1.0, 0.0
      %1111 = vset.pattern.permute.xlu0 0
      %1112 = vperm.xlu0 %1111, %v1108
      %v1113 = vpop.permute.xlu0 %1112
      %1116 = vset.pattern.permute.xlu0 0
      %1117 = vperm.xlu0 %1116, %v1109
      %v1118 = vpop.permute.xlu0 %1117
      %v1120 = vlaneseq
      %v1121 = vshrl.u32 %v1120, 7
      %v1122 = vsub.s32 2, %v1121
      %v1123 = vrot.slane %v1045, %v1122
      %v1124 = vmul.f32 %v1113, %v1123
      %v1125 = vmul.f32 %v1118, %v1123
      %v1126 = vadd.f32 %v1104, %v1124
      %v1127 = vadd.f32 %v1105, %v1125
      %vm1128 = vcmp.eq.s32.totalorder %v1043, 2
      %vm1129 = vcmp.eq.s32.totalorder %v1044, 2
      %v1130 = vsel %vm1128, 1.0, 0.0
      %v1131 = vsel %vm1129, 1.0, 0.0
      %1133 = vset.pattern.permute.xlu0 0
      %1134 = vperm.xlu0 %1133, %v1130
      %v1135 = vpop.permute.xlu0 %1134
      %1138 = vset.pattern.permute.xlu0 0
      %1139 = vperm.xlu0 %1138, %v1131
      %v1140 = vpop.permute.xlu0 %1139
      %v1142 = vlaneseq
      %v1143 = vshrl.u32 %v1142, 7
      %v1144 = vsub.s32 3, %v1143
      %v1145 = vrot.slane %v1045, %v1144
      %v1146 = vmul.f32 %v1135, %v1145
      %v1147 = vmul.f32 %v1140, %v1145
      %v1148 = vadd.f32 %v1126, %v1146
      %v1149 = vadd.f32 %v1127, %v1147
      %vm1150 = vcmp.eq.s32.totalorder %v1043, 3
      %vm1151 = vcmp.eq.s32.totalorder %v1044, 3
      %v1152 = vsel %vm1150, 1.0, 0.0
      %v1153 = vsel %vm1151, 1.0, 0.0
      %1155 = vset.pattern.permute.xlu0 0
      %1156 = vperm.xlu0 %1155, %v1152
      %v1157 = vpop.permute.xlu0 %1156
      %1160 = vset.pattern.permute.xlu0 0
      %1161 = vperm.xlu0 %1160, %v1153
      %v1162 = vpop.permute.xlu0 %1161
      %v1164 = vlaneseq
      %v1165 = vshrl.u32 %v1164, 7
      %v1166 = vsub.s32 4, %v1165
      %v1167 = vrot.slane %v1045, %v1166
      %v1168 = vmul.f32 %v1157, %v1167
      %v1169 = vmul.f32 %v1162, %v1167
      %v1170 = vadd.f32 %v1148, %v1168
      %v1171 = vadd.f32 %v1149, %v1169
      %vm1172 = vcmask 261120
      %1173 = vst.msk [vmem:[%s569] sm:$0xff] %vm1172, %v1170
      %vm1174 = vcmask 254976
      %1175 = vst.msk [vmem:[%s569 + $0x8] sm:$0x3] %vm1174, %v1171
      %v1176 = vld [vmem:[%s554] sm:$0xff]
      %v1177 = vld [vmem:[%s554 + $0x8] sm:$0xff]
      %v1178 = vld [vmem:[%s554 + $0x10] sm:$0xff]
      %v1179 = vld [vmem:[%s554 + $0x18] sm:$0xff]
      %v1180 = vld [vmem:[%s5] sm:$0xf]
      %v1181 = vld [vmem:[%s6] sm:$0xf]
      %v1182 = vld [vmem:[%s7] sm:$0xf]
      %v1183 = vld [vmem:[%s8] sm:$0xf]
      %1185 = vset.pattern.permute.xlu0 0
      %1186 = vperm.xlu0 %1185, %v1180
      %v1187 = vpop.permute.xlu0 %1186
      %v1189 = vlaneseq
      %v1190 = vshrl.u32 %v1189, 7
      %v1191 = vsub.s32 0, %v1190
      %v1192 = vrot.slane %v1176, %v1191
      %v1193 = vlaneseq
      %v1194 = vshrl.u32 %v1193, 7
      %v1195 = vsub.s32 0, %v1194
      %v1196 = vrot.slane %v1177, %v1195
      %v1197 = vmul.f32 %v1187, %v1192
      %v1198 = vmul.f32 %v1187, %v1196
      %1199 = vset.pattern.permute.xlu0 1
      %1200 = vperm.xlu0 %1199, %v1180
      %v1201 = vpop.permute.xlu0 %1200
      %v1203 = vlaneseq
      %v1204 = vshrl.u32 %v1203, 7
      %v1205 = vsub.s32 1, %v1204
      %v1206 = vrot.slane %v1176, %v1205
      %v1207 = vlaneseq
      %v1208 = vshrl.u32 %v1207, 7
      %v1209 = vsub.s32 1, %v1208
      %v1210 = vrot.slane %v1177, %v1209
      %v1211 = vmul.f32 %v1201, %v1206
      %v1212 = vmul.f32 %v1201, %v1210
      %v1213 = vadd.f32 %v1197, %v1211
      %v1214 = vadd.f32 %v1198, %v1212
      %1215 = vset.pattern.permute.xlu0 2
      %1216 = vperm.xlu0 %1215, %v1180
      %v1217 = vpop.permute.xlu0 %1216
      %v1219 = vlaneseq
      %v1220 = vshrl.u32 %v1219, 7
      %v1221 = vsub.s32 4, %v1220
      %v1222 = vrot.slane %v1176, %v1221
      %v1223 = vlaneseq
      %v1224 = vshrl.u32 %v1223, 7
      %v1225 = vsub.s32 4, %v1224
      %v1226 = vrot.slane %v1177, %v1225
      %v1227 = vmul.f32 %v1217, %v1222
      %v1228 = vmul.f32 %v1217, %v1226
      %v1229 = vadd.f32 %v1213, %v1227
      %v1230 = vadd.f32 %v1214, %v1228
      %1231 = vset.pattern.permute.xlu0 3
      %1232 = vperm.xlu0 %1231, %v1180
      %v1233 = vpop.permute.xlu0 %1232
      %v1235 = vlaneseq
      %v1236 = vshrl.u32 %v1235, 7
      %v1237 = vsub.s32 5, %v1236
      %v1238 = vrot.slane %v1176, %v1237
      %v1239 = vlaneseq
      %v1240 = vshrl.u32 %v1239, 7
      %v1241 = vsub.s32 5, %v1240
      %v1242 = vrot.slane %v1177, %v1241
      %v1243 = vmul.f32 %v1233, %v1238
      %v1244 = vmul.f32 %v1233, %v1242
      %v1245 = vadd.f32 %v1229, %v1243
      %v1246 = vadd.f32 %v1230, %v1244
      %1248 = vset.pattern.permute.xlu0 0
      %1249 = vperm.xlu0 %1248, %v1181
      %v1250 = vpop.permute.xlu0 %1249
      %v1252 = vadd.f32 %v1245, %v1250
      %v1253 = vadd.f32 %v1246, %v1250
      %vm1254 = vcmask 1043456
      %v1255 = vsel %vm1254, %v1252, 0.0
      %v1256 = vrot.slane %v1255, 4
      %v1257 = vadd.f32 %v1255, %v1256
      %v1258 = vrot.slane %v1257, 2
      %v1259 = vadd.f32 %v1257, %v1258
      %v1260 = vrot.slane %v1259, 1
      %v1261 = vadd.f32 %v1259, %v1260
      %v1262 = vsel %vm1254, %v1253, 0.0
      %v1263 = vrot.slane %v1262, 4
      %v1264 = vadd.f32 %v1262, %v1263
      %v1265 = vrot.slane %v1264, 2
      %v1266 = vadd.f32 %v1264, %v1265
      %v1267 = vrot.slane %v1266, 1
      %v1268 = vadd.f32 %v1266, %v1267
      %v1269 = vrcp.pop 4.0
      %v1270 = vmul.f32 %v1261, %v1269
      %v1271 = vmul.f32 %v1268, %v1269
      %v1272 = vsub.f32 %v1252, %v1270
      %v1273 = vsub.f32 %v1253, %v1271
      %v1274 = vmul.f32 %v1272, %v1272
      %v1275 = vmul.f32 %v1273, %v1273
      %v1276 = vsel %vm1254, %v1274, 0.0
      %v1277 = vrot.slane %v1276, 4
      %v1278 = vadd.f32 %v1276, %v1277
      %v1279 = vrot.slane %v1278, 2
      %v1280 = vadd.f32 %v1278, %v1279
      %v1281 = vrot.slane %v1280, 1
      %v1282 = vadd.f32 %v1280, %v1281
      %v1283 = vsel %vm1254, %v1275, 0.0
      %v1284 = vrot.slane %v1283, 4
      %v1285 = vadd.f32 %v1283, %v1284
      %v1286 = vrot.slane %v1285, 2
      %v1287 = vadd.f32 %v1285, %v1286
      %v1288 = vrot.slane %v1287, 1
      %v1289 = vadd.f32 %v1287, %v1288
      %v1290 = vmul.f32 %v1282, %v1269
      %v1291 = vmul.f32 %v1289, %v1269
      %v1292 = vadd.f32 %v1290, 1e-06
      %v1293 = vadd.f32 %v1291, 1e-06
      %v1294 = vrsqrt.pop %v1292
      %v1295 = vrsqrt.pop %v1293
      %v1296 = vmul.f32 %v1272, %v1294
      %v1297 = vmul.f32 %v1273, %v1295
      %1299 = vset.pattern.permute.xlu0 0
      %1300 = vperm.xlu0 %1299, %v1182
      %v1301 = vpop.permute.xlu0 %1300
      %v1303 = vmul.f32 %v1296, %v1301
      %v1304 = vmul.f32 %v1297, %v1301
      %1306 = vset.pattern.permute.xlu0 0
      %1307 = vperm.xlu0 %1306, %v1183
      %v1308 = vpop.permute.xlu0 %1307
      %v1310 = vadd.f32 %v1303, %v1308
      %v1311 = vadd.f32 %v1304, %v1308
      %v1312 = vmul.f32 %v1310, 0.5
      %v1313 = vmul.f32 %v1311, 0.5
      %v1314 = vmul.f32 %v1310, 0.044715
      %v1315 = vmul.f32 %v1311, 0.044715
      %v1316 = vmul.f32 %v1314, %v1310
      %v1317 = vmul.f32 %v1315, %v1311
      %v1318 = vmul.f32 %v1316, %v1310
      %v1319 = vmul.f32 %v1317, %v1311
      %v1320 = vadd.f32 %v1310, %v1318
      %v1321 = vadd.f32 %v1311, %v1319
      %v1322 = vmul.f32 %v1320, 0.7978846
      %v1323 = vmul.f32 %v1321, 0.7978846
      %v1324 = vtanh.pop %v1322
      %v1325 = vtanh.pop %v1323
      %v1326 = vadd.f32 %v1324, 1.0
      %v1327 = vadd.f32 %v1325, 1.0
      %v1328 = vmul.f32 %v1312, %v1326
      %v1329 = vmul.f32 %v1313, %v1327
      %v1330 = vlaneseq
      %v1331 = vshrl.u32 %v1330, 7
      %v1332 = vsub.s32 2, %v1331
      %v1333 = vrot.slane %v1176, %v1332
      %v1334 = vlaneseq
      %v1335 = vshrl.u32 %v1334, 7
      %v1336 = vsub.s32 2, %v1335
      %v1337 = vrot.slane %v1177, %v1336
      %v1338 = vmul.f32 %v1187, %v1333
      %v1339 = vmul.f32 %v1187, %v1337
      %v1340 = vlaneseq
      %v1341 = vshrl.u32 %v1340, 7
      %v1342 = vsub.s32 3, %v1341
      %v1343 = vrot.slane %v1176, %v1342
      %v1344 = vlaneseq
      %v1345 = vshrl.u32 %v1344, 7
      %v1346 = vsub.s32 3, %v1345
      %v1347 = vrot.slane %v1177, %v1346
      %v1348 = vmul.f32 %v1201, %v1343
      %v1349 = vmul.f32 %v1201, %v1347
      %v1350 = vadd.f32 %v1338, %v1348
      %v1351 = vadd.f32 %v1339, %v1349
      %v1352 = vlaneseq
      %v1353 = vshrl.u32 %v1352, 7
      %v1354 = vsub.s32 6, %v1353
      %v1355 = vrot.slane %v1176, %v1354
      %v1356 = vlaneseq
      %v1357 = vshrl.u32 %v1356, 7
      %v1358 = vsub.s32 6, %v1357
      %v1359 = vrot.slane %v1177, %v1358
      %v1360 = vmul.f32 %v1217, %v1355
      %v1361 = vmul.f32 %v1217, %v1359
      %v1362 = vadd.f32 %v1350, %v1360
      %v1363 = vadd.f32 %v1351, %v1361
      %v1364 = vlaneseq
      %v1365 = vshrl.u32 %v1364, 7
      %v1366 = vsub.s32 7, %v1365
      %v1367 = vrot.slane %v1176, %v1366
      %v1368 = vlaneseq
      %v1369 = vshrl.u32 %v1368, 7
      %v1370 = vsub.s32 7, %v1369
      %v1371 = vrot.slane %v1177, %v1370
      %v1372 = vmul.f32 %v1233, %v1367
      %v1373 = vmul.f32 %v1233, %v1371
      %v1374 = vadd.f32 %v1362, %v1372
      %v1375 = vadd.f32 %v1363, %v1373
      %v1376 = vadd.f32 %v1374, %v1250
      %v1377 = vadd.f32 %v1375, %v1250
      %v1378 = vsel %vm1254, %v1376, 0.0
      %v1379 = vrot.slane %v1378, 4
      %v1380 = vadd.f32 %v1378, %v1379
      %v1381 = vrot.slane %v1380, 2
      %v1382 = vadd.f32 %v1380, %v1381
      %v1383 = vrot.slane %v1382, 1
      %v1384 = vadd.f32 %v1382, %v1383
      %v1385 = vsel %vm1254, %v1377, 0.0
      %v1386 = vrot.slane %v1385, 4
      %v1387 = vadd.f32 %v1385, %v1386
      %v1388 = vrot.slane %v1387, 2
      %v1389 = vadd.f32 %v1387, %v1388
      %v1390 = vrot.slane %v1389, 1
      %v1391 = vadd.f32 %v1389, %v1390
      %v1392 = vmul.f32 %v1384, %v1269
      %v1393 = vmul.f32 %v1391, %v1269
      %v1394 = vsub.f32 %v1376, %v1392
      %v1395 = vsub.f32 %v1377, %v1393
      %v1396 = vmul.f32 %v1394, %v1394
      %v1397 = vmul.f32 %v1395, %v1395
      %v1398 = vsel %vm1254, %v1396, 0.0
      %v1399 = vrot.slane %v1398, 4
      %v1400 = vadd.f32 %v1398, %v1399
      %v1401 = vrot.slane %v1400, 2
      %v1402 = vadd.f32 %v1400, %v1401
      %v1403 = vrot.slane %v1402, 1
      %v1404 = vadd.f32 %v1402, %v1403
      %v1405 = vsel %vm1254, %v1397, 0.0
      %v1406 = vrot.slane %v1405, 4
      %v1407 = vadd.f32 %v1405, %v1406
      %v1408 = vrot.slane %v1407, 2
      %v1409 = vadd.f32 %v1407, %v1408
      %v1410 = vrot.slane %v1409, 1
      %v1411 = vadd.f32 %v1409, %v1410
      %v1412 = vmul.f32 %v1404, %v1269
      %v1413 = vmul.f32 %v1411, %v1269
      %v1414 = vadd.f32 %v1412, 1e-06
      %v1415 = vadd.f32 %v1413, 1e-06
      %v1416 = vrsqrt.pop %v1414
      %v1417 = vrsqrt.pop %v1415
      %v1418 = vmul.f32 %v1394, %v1416
      %v1419 = vmul.f32 %v1395, %v1417
      %v1420 = vmul.f32 %v1418, %v1301
      %v1421 = vmul.f32 %v1419, %v1301
      %v1422 = vadd.f32 %v1420, %v1308
      %v1423 = vadd.f32 %v1421, %v1308
      %v1424 = vmul.f32 %v1422, 0.5
      %v1425 = vmul.f32 %v1423, 0.5
      %v1426 = vmul.f32 %v1422, 0.044715
      %v1427 = vmul.f32 %v1423, 0.044715
      %v1428 = vmul.f32 %v1426, %v1422
      %v1429 = vmul.f32 %v1427, %v1423
      %v1430 = vmul.f32 %v1428, %v1422
      %v1431 = vmul.f32 %v1429, %v1423
      %v1432 = vadd.f32 %v1422, %v1430
      %v1433 = vadd.f32 %v1423, %v1431
      %v1434 = vmul.f32 %v1432, 0.7978846
      %v1435 = vmul.f32 %v1433, 0.7978846
      %v1436 = vtanh.pop %v1434
      %v1437 = vtanh.pop %v1435
      %v1438 = vadd.f32 %v1436, 1.0
      %v1439 = vadd.f32 %v1437, 1.0
      %v1440 = vmul.f32 %v1424, %v1438
      %v1441 = vmul.f32 %v1425, %v1439
      %v1442 = vlaneseq
      %v1443 = vshrl.u32 %v1442, 7
      %v1444 = vsub.s32 0, %v1443
      %v1445 = vrot.slane %v1178, %v1444
      %v1446 = vlaneseq
      %v1447 = vshrl.u32 %v1446, 7
      %v1448 = vsub.s32 0, %v1447
      %v1449 = vrot.slane %v1179, %v1448
      %v1450 = vmul.f32 %v1187, %v1445
      %v1451 = vmul.f32 %v1187, %v1449
      %v1452 = vlaneseq
      %v1453 = vshrl.u32 %v1452, 7
      %v1454 = vsub.s32 1, %v1453
      %v1455 = vrot.slane %v1178, %v1454
      %v1456 = vlaneseq
      %v1457 = vshrl.u32 %v1456, 7
      %v1458 = vsub.s32 1, %v1457
      %v1459 = vrot.slane %v1179, %v1458
      %v1460 = vmul.f32 %v1201, %v1455
      %v1461 = vmul.f32 %v1201, %v1459
      %v1462 = vadd.f32 %v1450, %v1460
      %v1463 = vadd.f32 %v1451, %v1461
      %v1464 = vlaneseq
      %v1465 = vshrl.u32 %v1464, 7
      %v1466 = vsub.s32 4, %v1465
      %v1467 = vrot.slane %v1178, %v1466
      %v1468 = vlaneseq
      %v1469 = vshrl.u32 %v1468, 7
      %v1470 = vsub.s32 4, %v1469
      %v1471 = vrot.slane %v1179, %v1470
      %v1472 = vmul.f32 %v1217, %v1467
      %v1473 = vmul.f32 %v1217, %v1471
      %v1474 = vadd.f32 %v1462, %v1472
      %v1475 = vadd.f32 %v1463, %v1473
      %v1476 = vlaneseq
      %v1477 = vshrl.u32 %v1476, 7
      %v1478 = vsub.s32 5, %v1477
      %v1479 = vrot.slane %v1178, %v1478
      %v1480 = vlaneseq
      %v1481 = vshrl.u32 %v1480, 7
      %v1482 = vsub.s32 5, %v1481
      %v1483 = vrot.slane %v1179, %v1482
      %v1484 = vmul.f32 %v1233, %v1479
      %v1485 = vmul.f32 %v1233, %v1483
      %v1486 = vadd.f32 %v1474, %v1484
      %v1487 = vadd.f32 %v1475, %v1485
      %v1488 = vadd.f32 %v1486, %v1250
      %v1489 = vadd.f32 %v1487, %v1250
      %v1490 = vsel %vm1254, %v1488, 0.0
      %v1491 = vrot.slane %v1490, 4
      %v1492 = vadd.f32 %v1490, %v1491
      %v1493 = vrot.slane %v1492, 2
      %v1494 = vadd.f32 %v1492, %v1493
      %v1495 = vrot.slane %v1494, 1
      %v1496 = vadd.f32 %v1494, %v1495
      %v1497 = vsel %vm1254, %v1489, 0.0
      %v1498 = vrot.slane %v1497, 4
      %v1499 = vadd.f32 %v1497, %v1498
      %v1500 = vrot.slane %v1499, 2
      %v1501 = vadd.f32 %v1499, %v1500
      %v1502 = vrot.slane %v1501, 1
      %v1503 = vadd.f32 %v1501, %v1502
      %v1504 = vmul.f32 %v1496, %v1269
      %v1505 = vmul.f32 %v1503, %v1269
      %v1506 = vsub.f32 %v1488, %v1504
      %v1507 = vsub.f32 %v1489, %v1505
      %v1508 = vmul.f32 %v1506, %v1506
      %v1509 = vmul.f32 %v1507, %v1507
      %v1510 = vsel %vm1254, %v1508, 0.0
      %v1511 = vrot.slane %v1510, 4
      %v1512 = vadd.f32 %v1510, %v1511
      %v1513 = vrot.slane %v1512, 2
      %v1514 = vadd.f32 %v1512, %v1513
      %v1515 = vrot.slane %v1514, 1
      %v1516 = vadd.f32 %v1514, %v1515
      %v1517 = vsel %vm1254, %v1509, 0.0
      %v1518 = vrot.slane %v1517, 4
      %v1519 = vadd.f32 %v1517, %v1518
      %v1520 = vrot.slane %v1519, 2
      %v1521 = vadd.f32 %v1519, %v1520
      %v1522 = vrot.slane %v1521, 1
      %v1523 = vadd.f32 %v1521, %v1522
      %v1524 = vmul.f32 %v1516, %v1269
      %v1525 = vmul.f32 %v1523, %v1269
      %v1526 = vadd.f32 %v1524, 1e-06
      %v1527 = vadd.f32 %v1525, 1e-06
      %v1528 = vrsqrt.pop %v1526
      %v1529 = vrsqrt.pop %v1527
      %v1530 = vmul.f32 %v1506, %v1528
      %v1531 = vmul.f32 %v1507, %v1529
      %v1532 = vmul.f32 %v1530, %v1301
      %v1533 = vmul.f32 %v1531, %v1301
      %v1534 = vadd.f32 %v1532, %v1308
      %v1535 = vadd.f32 %v1533, %v1308
      %v1536 = vmul.f32 %v1534, 0.5
      %v1537 = vmul.f32 %v1535, 0.5
      %v1538 = vmul.f32 %v1534, 0.044715
      %v1539 = vmul.f32 %v1535, 0.044715
      %v1540 = vmul.f32 %v1538, %v1534
      %v1541 = vmul.f32 %v1539, %v1535
      %v1542 = vmul.f32 %v1540, %v1534
      %v1543 = vmul.f32 %v1541, %v1535
      %v1544 = vadd.f32 %v1534, %v1542
      %v1545 = vadd.f32 %v1535, %v1543
      %v1546 = vmul.f32 %v1544, 0.7978846
      %v1547 = vmul.f32 %v1545, 0.7978846
      %v1548 = vtanh.pop %v1546
      %v1549 = vtanh.pop %v1547
      %v1550 = vadd.f32 %v1548, 1.0
      %v1551 = vadd.f32 %v1549, 1.0
      %v1552 = vmul.f32 %v1536, %v1550
      %v1553 = vmul.f32 %v1537, %v1551
      %v1554 = vlaneseq
      %v1555 = vshrl.u32 %v1554, 7
      %v1556 = vsub.s32 2, %v1555
      %v1557 = vrot.slane %v1178, %v1556
      %v1558 = vlaneseq
      %v1559 = vshrl.u32 %v1558, 7
      %v1560 = vsub.s32 2, %v1559
      %v1561 = vrot.slane %v1179, %v1560
      %v1562 = vmul.f32 %v1187, %v1557
      %v1563 = vmul.f32 %v1187, %v1561
      %v1564 = vlaneseq
      %v1565 = vshrl.u32 %v1564, 7
      %v1566 = vsub.s32 3, %v1565
      %v1567 = vrot.slane %v1178, %v1566
      %v1568 = vlaneseq
      %v1569 = vshrl.u32 %v1568, 7
      %v1570 = vsub.s32 3, %v1569
      %v1571 = vrot.slane %v1179, %v1570
      %v1572 = vmul.f32 %v1201, %v1567
      %v1573 = vmul.f32 %v1201, %v1571
      %v1574 = vadd.f32 %v1562, %v1572
      %v1575 = vadd.f32 %v1563, %v1573
      %v1576 = vlaneseq
      %v1577 = vshrl.u32 %v1576, 7
      %v1578 = vsub.s32 6, %v1577
      %v1579 = vrot.slane %v1178, %v1578
      %v1580 = vlaneseq
      %v1581 = vshrl.u32 %v1580, 7
      %v1582 = vsub.s32 6, %v1581
      %v1583 = vrot.slane %v1179, %v1582
      %v1584 = vmul.f32 %v1217, %v1579
      %v1585 = vmul.f32 %v1217, %v1583
      %v1586 = vadd.f32 %v1574, %v1584
      %v1587 = vadd.f32 %v1575, %v1585
      %v1588 = vlaneseq
      %v1589 = vshrl.u32 %v1588, 7
      %v1590 = vsub.s32 7, %v1589
      %v1591 = vrot.slane %v1178, %v1590
      %v1592 = vlaneseq
      %v1593 = vshrl.u32 %v1592, 7
      %v1594 = vsub.s32 7, %v1593
      %v1595 = vrot.slane %v1179, %v1594
      %v1596 = vmul.f32 %v1233, %v1591
      %v1597 = vmul.f32 %v1233, %v1595
      %v1598 = vadd.f32 %v1586, %v1596
      %v1599 = vadd.f32 %v1587, %v1597
      %v1600 = vadd.f32 %v1598, %v1250
      %v1601 = vadd.f32 %v1599, %v1250
      %v1602 = vsel %vm1254, %v1600, 0.0
      %v1603 = vrot.slane %v1602, 4
      %v1604 = vadd.f32 %v1602, %v1603
      %v1605 = vrot.slane %v1604, 2
      %v1606 = vadd.f32 %v1604, %v1605
      %v1607 = vrot.slane %v1606, 1
      %v1608 = vadd.f32 %v1606, %v1607
      %v1609 = vsel %vm1254, %v1601, 0.0
      %v1610 = vrot.slane %v1609, 4
      %v1611 = vadd.f32 %v1609, %v1610
      %v1612 = vrot.slane %v1611, 2
      %v1613 = vadd.f32 %v1611, %v1612
      %v1614 = vrot.slane %v1613, 1
      %v1615 = vadd.f32 %v1613, %v1614
      %v1616 = vmul.f32 %v1608, %v1269
      %v1617 = vmul.f32 %v1615, %v1269
      %v1618 = vsub.f32 %v1600, %v1616
      %v1619 = vsub.f32 %v1601, %v1617
      %v1620 = vmul.f32 %v1618, %v1618
      %v1621 = vmul.f32 %v1619, %v1619
      %v1622 = vsel %vm1254, %v1620, 0.0
      %v1623 = vrot.slane %v1622, 4
      %v1624 = vadd.f32 %v1622, %v1623
      %v1625 = vrot.slane %v1624, 2
      %v1626 = vadd.f32 %v1624, %v1625
      %v1627 = vrot.slane %v1626, 1
      %v1628 = vadd.f32 %v1626, %v1627
      %v1629 = vsel %vm1254, %v1621, 0.0
      %v1630 = vrot.slane %v1629, 4
      %v1631 = vadd.f32 %v1629, %v1630
      %v1632 = vrot.slane %v1631, 2
      %v1633 = vadd.f32 %v1631, %v1632
      %v1634 = vrot.slane %v1633, 1
      %v1635 = vadd.f32 %v1633, %v1634
      %v1636 = vmul.f32 %v1628, %v1269
      %v1637 = vmul.f32 %v1635, %v1269
      %v1638 = vadd.f32 %v1636, 1e-06
      %v1639 = vadd.f32 %v1637, 1e-06
      %v1640 = vrsqrt.pop %v1638
      %v1641 = vrsqrt.pop %v1639
      %v1642 = vmul.f32 %v1618, %v1640
      %v1643 = vmul.f32 %v1619, %v1641
      %v1644 = vmul.f32 %v1642, %v1301
      %v1645 = vmul.f32 %v1643, %v1301
      %v1646 = vadd.f32 %v1644, %v1308
      %v1647 = vadd.f32 %v1645, %v1308
      %v1648 = vmul.f32 %v1646, 0.5
      %v1649 = vmul.f32 %v1647, 0.5
      %v1650 = vmul.f32 %v1646, 0.044715
      %v1651 = vmul.f32 %v1647, 0.044715
      %v1652 = vmul.f32 %v1650, %v1646
      %v1653 = vmul.f32 %v1651, %v1647
      %v1654 = vmul.f32 %v1652, %v1646
      %v1655 = vmul.f32 %v1653, %v1647
      %v1656 = vadd.f32 %v1646, %v1654
      %v1657 = vadd.f32 %v1647, %v1655
      %v1658 = vmul.f32 %v1656, 0.7978846
      %v1659 = vmul.f32 %v1657, 0.7978846
      %v1660 = vtanh.pop %v1658
      %v1661 = vtanh.pop %v1659
      %v1662 = vadd.f32 %v1660, 1.0
      %v1663 = vadd.f32 %v1661, 1.0
      %v1664 = vmul.f32 %v1648, %v1662
      %v1665 = vmul.f32 %v1649, %v1663
      %v1666 = vld [vmem:[%s9] sm:$0xff]
      %v1667 = vld [vmem:[%s9 + $0x8] sm:$0xff]
      %1669 = vset.pattern.permute.xlu0 0
      %1670 = vperm.xlu0 %1669, %v1666
      %v1671 = vpop.permute.xlu0 %1670
      %1674 = vset.pattern.permute.xlu0 0
      %1675 = vperm.xlu0 %1674, %v1667
      %v1676 = vpop.permute.xlu0 %1675
      %v1678 = vlaneseq
      %v1679 = vshrl.u32 %v1678, 7
      %v1680 = vsub.s32 0, %v1679
      %v1681 = vrot.slane %v1328, %v1680
      %v1682 = vlaneseq
      %v1683 = vshrl.u32 %v1682, 7
      %v1684 = vsub.s32 0, %v1683
      %v1685 = vrot.slane %v1329, %v1684
      %v1686 = vmul.f32 %v1671, %v1681
      %v1687 = vmul.f32 %v1671, %v1685
      %v1688 = vmul.f32 %v1676, %v1681
      %v1689 = vmul.f32 %v1676, %v1685
      %1690 = vset.pattern.permute.xlu0 1
      %1691 = vperm.xlu0 %1690, %v1666
      %v1692 = vpop.permute.xlu0 %1691
      %1694 = vset.pattern.permute.xlu0 1
      %1695 = vperm.xlu0 %1694, %v1667
      %v1696 = vpop.permute.xlu0 %1695
      %v1698 = vlaneseq
      %v1699 = vshrl.u32 %v1698, 7
      %v1700 = vsub.s32 1, %v1699
      %v1701 = vrot.slane %v1328, %v1700
      %v1702 = vlaneseq
      %v1703 = vshrl.u32 %v1702, 7
      %v1704 = vsub.s32 1, %v1703
      %v1705 = vrot.slane %v1329, %v1704
      %v1706 = vmul.f32 %v1692, %v1701
      %v1707 = vmul.f32 %v1692, %v1705
      %v1708 = vmul.f32 %v1696, %v1701
      %v1709 = vmul.f32 %v1696, %v1705
      %v1710 = vadd.f32 %v1686, %v1706
      %v1711 = vadd.f32 %v1687, %v1707
      %v1712 = vadd.f32 %v1688, %v1708
      %v1713 = vadd.f32 %v1689, %v1709
      %1714 = vset.pattern.permute.xlu0 2
      %1715 = vperm.xlu0 %1714, %v1666
      %v1716 = vpop.permute.xlu0 %1715
      %1718 = vset.pattern.permute.xlu0 2
      %1719 = vperm.xlu0 %1718, %v1667
      %v1720 = vpop.permute.xlu0 %1719
      %v1722 = vlaneseq
      %v1723 = vshrl.u32 %v1722, 7
      %v1724 = vsub.s32 2, %v1723
      %v1725 = vrot.slane %v1328, %v1724
      %v1726 = vlaneseq
      %v1727 = vshrl.u32 %v1726, 7
      %v1728 = vsub.s32 2, %v1727
      %v1729 = vrot.slane %v1329, %v1728
      %v1730 = vmul.f32 %v1716, %v1725
      %v1731 = vmul.f32 %v1716, %v1729
      %v1732 = vmul.f32 %v1720, %v1725
      %v1733 = vmul.f32 %v1720, %v1729
      %v1734 = vadd.f32 %v1710, %v1730
      %v1735 = vadd.f32 %v1711, %v1731
      %v1736 = vadd.f32 %v1712, %v1732
      %v1737 = vadd.f32 %v1713, %v1733
      %1738 = vset.pattern.permute.xlu0 3
      %1739 = vperm.xlu0 %1738, %v1666
      %v1740 = vpop.permute.xlu0 %1739
      %1742 = vset.pattern.permute.xlu0 3
      %1743 = vperm.xlu0 %1742, %v1667
      %v1744 = vpop.permute.xlu0 %1743
      %v1746 = vlaneseq
      %v1747 = vshrl.u32 %v1746, 7
      %v1748 = vsub.s32 3, %v1747
      %v1749 = vrot.slane %v1328, %v1748
      %v1750 = vlaneseq
      %v1751 = vshrl.u32 %v1750, 7
      %v1752 = vsub.s32 3, %v1751
      %v1753 = vrot.slane %v1329, %v1752
      %v1754 = vmul.f32 %v1740, %v1749
      %v1755 = vmul.f32 %v1740, %v1753
      %v1756 = vmul.f32 %v1744, %v1749
      %v1757 = vmul.f32 %v1744, %v1753
      %v1758 = vadd.f32 %v1734, %v1754
      %v1759 = vadd.f32 %v1735, %v1755
      %v1760 = vadd.f32 %v1736, %v1756
      %v1761 = vadd.f32 %v1737, %v1757
      %1762 = vset.pattern.permute.xlu0 4
      %1763 = vperm.xlu0 %1762, %v1666
      %v1764 = vpop.permute.xlu0 %1763
      %1766 = vset.pattern.permute.xlu0 4
      %1767 = vperm.xlu0 %1766, %v1667
      %v1768 = vpop.permute.xlu0 %1767
      %v1770 = vlaneseq
      %v1771 = vshrl.u32 %v1770, 7
      %v1772 = vsub.s32 0, %v1771
      %v1773 = vrot.slane %v1440, %v1772
      %v1774 = vlaneseq
      %v1775 = vshrl.u32 %v1774, 7
      %v1776 = vsub.s32 0, %v1775
      %v1777 = vrot.slane %v1441, %v1776
      %v1778 = vmul.f32 %v1764, %v1773
      %v1779 = vmul.f32 %v1764, %v1777
      %v1780 = vmul.f32 %v1768, %v1773
      %v1781 = vmul.f32 %v1768, %v1777
      %v1782 = vadd.f32 %v1758, %v1778
      %v1783 = vadd.f32 %v1759, %v1779
      %v1784 = vadd.f32 %v1760, %v1780
      %v1785 = vadd.f32 %v1761, %v1781
      %1786 = vset.pattern.permute.xlu0 5
      %1787 = vperm.xlu0 %1786, %v1666
      %v1788 = vpop.permute.xlu0 %1787
      %1790 = vset.pattern.permute.xlu0 5
      %1791 = vperm.xlu0 %1790, %v1667
      %v1792 = vpop.permute.xlu0 %1791
      %v1794 = vlaneseq
      %v1795 = vshrl.u32 %v1794, 7
      %v1796 = vsub.s32 1, %v1795
      %v1797 = vrot.slane %v1440, %v1796
      %v1798 = vlaneseq
      %v1799 = vshrl.u32 %v1798, 7
      %v1800 = vsub.s32 1, %v1799
      %v1801 = vrot.slane %v1441, %v1800
      %v1802 = vmul.f32 %v1788, %v1797
      %v1803 = vmul.f32 %v1788, %v1801
      %v1804 = vmul.f32 %v1792, %v1797
      %v1805 = vmul.f32 %v1792, %v1801
      %v1806 = vadd.f32 %v1782, %v1802
      %v1807 = vadd.f32 %v1783, %v1803
      %v1808 = vadd.f32 %v1784, %v1804
      %v1809 = vadd.f32 %v1785, %v1805
      %1810 = vset.pattern.permute.xlu0 6
      %1811 = vperm.xlu0 %1810, %v1666
      %v1812 = vpop.permute.xlu0 %1811
      %1814 = vset.pattern.permute.xlu0 6
      %1815 = vperm.xlu0 %1814, %v1667
      %v1816 = vpop.permute.xlu0 %1815
      %v1818 = vlaneseq
      %v1819 = vshrl.u32 %v1818, 7
      %v1820 = vsub.s32 2, %v1819
      %v1821 = vrot.slane %v1440, %v1820
      %v1822 = vlaneseq
      %v1823 = vshrl.u32 %v1822, 7
      %v1824 = vsub.s32 2, %v1823
      %v1825 = vrot.slane %v1441, %v1824
      %v1826 = vmul.f32 %v1812, %v1821
      %v1827 = vmul.f32 %v1812, %v1825
      %v1828 = vmul.f32 %v1816, %v1821
      %v1829 = vmul.f32 %v1816, %v1825
      %v1830 = vadd.f32 %v1806, %v1826
      %v1831 = vadd.f32 %v1807, %v1827
      %v1832 = vadd.f32 %v1808, %v1828
      %v1833 = vadd.f32 %v1809, %v1829
      %1834 = vset.pattern.permute.xlu0 7
      %1835 = vperm.xlu0 %1834, %v1666
      %v1836 = vpop.permute.xlu0 %1835
      %1838 = vset.pattern.permute.xlu0 7
      %1839 = vperm.xlu0 %1838, %v1667
      %v1840 = vpop.permute.xlu0 %1839
      %v1842 = vlaneseq
      %v1843 = vshrl.u32 %v1842, 7
      %v1844 = vsub.s32 3, %v1843
      %v1845 = vrot.slane %v1440, %v1844
      %v1846 = vlaneseq
      %v1847 = vshrl.u32 %v1846, 7
      %v1848 = vsub.s32 3, %v1847
      %v1849 = vrot.slane %v1441, %v1848
      %v1850 = vmul.f32 %v1836, %v1845
      %v1851 = vmul.f32 %v1836, %v1849
      %v1852 = vmul.f32 %v1840, %v1845
      %v1853 = vmul.f32 %v1840, %v1849
      %v1854 = vadd.f32 %v1830, %v1850
      %v1855 = vadd.f32 %v1831, %v1851
      %v1856 = vadd.f32 %v1832, %v1852
      %v1857 = vadd.f32 %v1833, %v1853
      %1858 = vset.pattern.permute.xlu0 8
      %1859 = vperm.xlu0 %1858, %v1666
      %v1860 = vpop.permute.xlu0 %1859
      %1862 = vset.pattern.permute.xlu0 8
      %1863 = vperm.xlu0 %1862, %v1667
      %v1864 = vpop.permute.xlu0 %1863
      %v1866 = vlaneseq
      %v1867 = vshrl.u32 %v1866, 7
      %v1868 = vsub.s32 0, %v1867
      %v1869 = vrot.slane %v1552, %v1868
      %v1870 = vlaneseq
      %v1871 = vshrl.u32 %v1870, 7
      %v1872 = vsub.s32 0, %v1871
      %v1873 = vrot.slane %v1553, %v1872
      %v1874 = vmul.f32 %v1860, %v1869
      %v1875 = vmul.f32 %v1860, %v1873
      %v1876 = vmul.f32 %v1864, %v1869
      %v1877 = vmul.f32 %v1864, %v1873
      %v1878 = vadd.f32 %v1854, %v1874
      %v1879 = vadd.f32 %v1855, %v1875
      %v1880 = vadd.f32 %v1856, %v1876
      %v1881 = vadd.f32 %v1857, %v1877
      %1882 = vset.pattern.permute.xlu0 9
      %1883 = vperm.xlu0 %1882, %v1666
      %v1884 = vpop.permute.xlu0 %1883
      %1886 = vset.pattern.permute.xlu0 9
      %1887 = vperm.xlu0 %1886, %v1667
      %v1888 = vpop.permute.xlu0 %1887
      %v1890 = vlaneseq
      %v1891 = vshrl.u32 %v1890, 7
      %v1892 = vsub.s32 1, %v1891
      %v1893 = vrot.slane %v1552, %v1892
      %v1894 = vlaneseq
      %v1895 = vshrl.u32 %v1894, 7
      %v1896 = vsub.s32 1, %v1895
      %v1897 = vrot.slane %v1553, %v1896
      %v1898 = vmul.f32 %v1884, %v1893
      %v1899 = vmul.f32 %v1884, %v1897
      %v1900 = vmul.f32 %v1888, %v1893
      %v1901 = vmul.f32 %v1888, %v1897
      %v1902 = vadd.f32 %v1878, %v1898
      %v1903 = vadd.f32 %v1879, %v1899
      %v1904 = vadd.f32 %v1880, %v1900
      %v1905 = vadd.f32 %v1881, %v1901
      %1906 = vset.pattern.permute.xlu0 10
      %1907 = vperm.xlu0 %1906, %v1666
      %v1908 = vpop.permute.xlu0 %1907
      %1910 = vset.pattern.permute.xlu0 10
      %1911 = vperm.xlu0 %1910, %v1667
      %v1912 = vpop.permute.xlu0 %1911
      %v1914 = vlaneseq
      %v1915 = vshrl.u32 %v1914, 7
      %v1916 = vsub.s32 2, %v1915
      %v1917 = vrot.slane %v1552, %v1916
      %v1918 = vlaneseq
      %v1919 = vshrl.u32 %v1918, 7
      %v1920 = vsub.s32 2, %v1919
      %v1921 = vrot.slane %v1553, %v1920
      %v1922 = vmul.f32 %v1908, %v1917
      %v1923 = vmul.f32 %v1908, %v1921
      %v1924 = vmul.f32 %v1912, %v1917
      %v1925 = vmul.f32 %v1912, %v1921
      %v1926 = vadd.f32 %v1902, %v1922
      %v1927 = vadd.f32 %v1903, %v1923
      %v1928 = vadd.f32 %v1904, %v1924
      %v1929 = vadd.f32 %v1905, %v1925
      %1930 = vset.pattern.permute.xlu0 11
      %1931 = vperm.xlu0 %1930, %v1666
      %v1932 = vpop.permute.xlu0 %1931
      %1934 = vset.pattern.permute.xlu0 11
      %1935 = vperm.xlu0 %1934, %v1667
      %v1936 = vpop.permute.xlu0 %1935
      %v1938 = vlaneseq
      %v1939 = vshrl.u32 %v1938, 7
      %v1940 = vsub.s32 3, %v1939
      %v1941 = vrot.slane %v1552, %v1940
      %v1942 = vlaneseq
      %v1943 = vshrl.u32 %v1942, 7
      %v1944 = vsub.s32 3, %v1943
      %v1945 = vrot.slane %v1553, %v1944
      %v1946 = vmul.f32 %v1932, %v1941
      %v1947 = vmul.f32 %v1932, %v1945
      %v1948 = vmul.f32 %v1936, %v1941
      %v1949 = vmul.f32 %v1936, %v1945
      %v1950 = vadd.f32 %v1926, %v1946
      %v1951 = vadd.f32 %v1927, %v1947
      %v1952 = vadd.f32 %v1928, %v1948
      %v1953 = vadd.f32 %v1929, %v1949
      %1954 = vset.pattern.permute.xlu0 12
      %1955 = vperm.xlu0 %1954, %v1666
      %v1956 = vpop.permute.xlu0 %1955
      %1958 = vset.pattern.permute.xlu0 12
      %1959 = vperm.xlu0 %1958, %v1667
      %v1960 = vpop.permute.xlu0 %1959
      %v1962 = vlaneseq
      %v1963 = vshrl.u32 %v1962, 7
      %v1964 = vsub.s32 0, %v1963
      %v1965 = vrot.slane %v1664, %v1964
      %v1966 = vlaneseq
      %v1967 = vshrl.u32 %v1966, 7
      %v1968 = vsub.s32 0, %v1967
      %v1969 = vrot.slane %v1665, %v1968
      %v1970 = vmul.f32 %v1956, %v1965
      %v1971 = vmul.f32 %v1956, %v1969
      %v1972 = vmul.f32 %v1960, %v1965
      %v1973 = vmul.f32 %v1960, %v1969
      %v1974 = vadd.f32 %v1950, %v1970
      %v1975 = vadd.f32 %v1951, %v1971
      %v1976 = vadd.f32 %v1952, %v1972
      %v1977 = vadd.f32 %v1953, %v1973
      %1978 = vset.pattern.permute.xlu0 13
      %1979 = vperm.xlu0 %1978, %v1666
      %v1980 = vpop.permute.xlu0 %1979
      %1982 = vset.pattern.permute.xlu0 13
      %1983 = vperm.xlu0 %1982, %v1667
      %v1984 = vpop.permute.xlu0 %1983
      %v1986 = vlaneseq
      %v1987 = vshrl.u32 %v1986, 7
      %v1988 = vsub.s32 1, %v1987
      %v1989 = vrot.slane %v1664, %v1988
      %v1990 = vlaneseq
      %v1991 = vshrl.u32 %v1990, 7
      %v1992 = vsub.s32 1, %v1991
      %v1993 = vrot.slane %v1665, %v1992
      %v1994 = vmul.f32 %v1980, %v1989
      %v1995 = vmul.f32 %v1980, %v1993
      %v1996 = vmul.f32 %v1984, %v1989
      %v1997 = vmul.f32 %v1984, %v1993
      %v1998 = vadd.f32 %v1974, %v1994
      %v1999 = vadd.f32 %v1975, %v1995
      %v2000 = vadd.f32 %v1976, %v1996
      %v2001 = vadd.f32 %v1977, %v1997
      %2002 = vset.pattern.permute.xlu0 14
      %2003 = vperm.xlu0 %2002, %v1666
      %v2004 = vpop.permute.xlu0 %2003
      %2006 = vset.pattern.permute.xlu0 14
      %2007 = vperm.xlu0 %2006, %v1667
      %v2008 = vpop.permute.xlu0 %2007
      %v2010 = vlaneseq
      %v2011 = vshrl.u32 %v2010, 7
      %v2012 = vsub.s32 2, %v2011
      %v2013 = vrot.slane %v1664, %v2012
      %v2014 = vlaneseq
      %v2015 = vshrl.u32 %v2014, 7
      %v2016 = vsub.s32 2, %v2015
      %v2017 = vrot.slane %v1665, %v2016
      %v2018 = vmul.f32 %v2004, %v2013
      %v2019 = vmul.f32 %v2004, %v2017
      %v2020 = vmul.f32 %v2008, %v2013
      %v2021 = vmul.f32 %v2008, %v2017
      %v2022 = vadd.f32 %v1998, %v2018
      %v2023 = vadd.f32 %v1999, %v2019
      %v2024 = vadd.f32 %v2000, %v2020
      %v2025 = vadd.f32 %v2001, %v2021
      %2026 = vset.pattern.permute.xlu0 15
      %2027 = vperm.xlu0 %2026, %v1666
      %v2028 = vpop.permute.xlu0 %2027
      %2030 = vset.pattern.permute.xlu0 15
      %2031 = vperm.xlu0 %2030, %v1667
      %v2032 = vpop.permute.xlu0 %2031
      %v2034 = vlaneseq
      %v2035 = vshrl.u32 %v2034, 7
      %v2036 = vsub.s32 3, %v2035
      %v2037 = vrot.slane %v1664, %v2036
      %v2038 = vlaneseq
      %v2039 = vshrl.u32 %v2038, 7
      %v2040 = vsub.s32 3, %v2039
      %v2041 = vrot.slane %v1665, %v2040
      %v2042 = vmul.f32 %v2028, %v2037
      %v2043 = vmul.f32 %v2028, %v2041
      %v2044 = vmul.f32 %v2032, %v2037
      %v2045 = vmul.f32 %v2032, %v2041
      %v2046 = vadd.f32 %v2022, %v2042
      %v2047 = vadd.f32 %v2023, %v2043
      %v2048 = vadd.f32 %v2024, %v2044
      %v2049 = vadd.f32 %v2025, %v2045
      %v2050 = vld [vmem:[%s10] sm:$0xff]
      %v2051 = vld [vmem:[%s10 + $0x8] sm:$0xff]
      %2053 = vset.pattern.permute.xlu0 0
      %2054 = vperm.xlu0 %2053, %v2050
      %v2055 = vpop.permute.xlu0 %2054
      %2058 = vset.pattern.permute.xlu0 0
      %2059 = vperm.xlu0 %2058, %v2051
      %v2060 = vpop.permute.xlu0 %2059
      %v2062 = vadd.f32 %v2046, %v2055
      %v2063 = vadd.f32 %v2047, %v2055
      %v2064 = vadd.f32 %v2048, %v2060
      %v2065 = vadd.f32 %v2049, %v2060
      %v2066 = vld [vmem:[%s11] sm:$0xff]
      %v2067 = vld [vmem:[%s11 + $0x8] sm:$0xff]
      %v2068 = vld [vmem:[%s12] sm:$0xff]
      %v2069 = vld [vmem:[%s12 + $0x8] sm:$0xff]
      %v2070 = vadd.f32 %v2062, %v2064
      %v2071 = vrot.slane %v2070, 4
      %v2072 = vadd.f32 %v2070, %v2071
      %v2073 = vrot.slane %v2072, 2
      %v2074 = vadd.f32 %v2072, %v2073
      %v2075 = vrot.slane %v2074, 1
      %v2076 = vadd.f32 %v2074, %v2075
      %v2077 = vadd.f32 %v2063, %v2065
      %v2078 = vrot.slane %v2077, 4
      %v2079 = vadd.f32 %v2077, %v2078
      %v2080 = vrot.slane %v2079, 2
      %v2081 = vadd.f32 %v2079, %v2080
      %v2082 = vrot.slane %v2081, 1
      %v2083 = vadd.f32 %v2081, %v2082
      %v2084 = vrcp.pop 16.0
      %v2085 = vmul.f32 %v2076, %v2084
      %v2086 = vmul.f32 %v2083, %v2084
      %v2087 = vsub.f32 %v2062, %v2085
      %v2088 = vsub.f32 %v2063, %v2086
      %v2089 = vsub.f32 %v2064, %v2085
      %v2090 = vsub.f32 %v2065, %v2086
      %v2091 = vmul.f32 %v2087, %v2087
      %v2092 = vmul.f32 %v2088, %v2088
      %v2093 = vmul.f32 %v2089, %v2089
      %v2094 = vmul.f32 %v2090, %v2090
      %v2095 = vadd.f32 %v2091, %v2093
      %v2096 = vrot.slane %v2095, 4
      %v2097 = vadd.f32 %v2095, %v2096
      %v2098 = vrot.slane %v2097, 2
      %v2099 = vadd.f32 %v2097, %v2098
      %v2100 = vrot.slane %v2099, 1
      %v2101 = vadd.f32 %v2099, %v2100
      %v2102 = vadd.f32 %v2092, %v2094
      %v2103 = vrot.slane %v2102, 4
      %v2104 = vadd.f32 %v2102, %v2103
      %v2105 = vrot.slane %v2104, 2
      %v2106 = vadd.f32 %v2104, %v2105
      %v2107 = vrot.slane %v2106, 1
      %v2108 = vadd.f32 %v2106, %v2107
      %v2109 = vmul.f32 %v2101, %v2084
      %v2110 = vmul.f32 %v2108, %v2084
      %v2111 = vadd.f32 %v2109, 1e-06
      %v2112 = vadd.f32 %v2110, 1e-06
      %v2113 = vrsqrt.pop %v2111
      %v2114 = vrsqrt.pop %v2112
      %v2115 = vmul.f32 %v2087, %v2113
      %v2116 = vmul.f32 %v2088, %v2114
      %v2117 = vmul.f32 %v2089, %v2113
      %v2118 = vmul.f32 %v2090, %v2114
      %2120 = vset.pattern.permute.xlu0 0
      %2121 = vperm.xlu0 %2120, %v2066
      %v2122 = vpop.permute.xlu0 %2121
      %2125 = vset.pattern.permute.xlu0 0
      %2126 = vperm.xlu0 %2125, %v2067
      %v2127 = vpop.permute.xlu0 %2126
      %v2129 = vmul.f32 %v2115, %v2122
      %v2130 = vmul.f32 %v2116, %v2122
      %v2131 = vmul.f32 %v2117, %v2127
      %v2132 = vmul.f32 %v2118, %v2127
      %2134 = vset.pattern.permute.xlu0 0
      %2135 = vperm.xlu0 %2134, %v2068
      %v2136 = vpop.permute.xlu0 %2135
      %2139 = vset.pattern.permute.xlu0 0
      %2140 = vperm.xlu0 %2139, %v2069
      %v2141 = vpop.permute.xlu0 %2140
      %v2143 = vadd.f32 %v2129, %v2136
      %v2144 = vadd.f32 %v2130, %v2136
      %v2145 = vadd.f32 %v2131, %v2141
      %v2146 = vadd.f32 %v2132, %v2141
      %v2147 = vmul.f32 %v2143, 0.5
      %v2148 = vmul.f32 %v2144, 0.5
      %v2149 = vmul.f32 %v2145, 0.5
      %v2150 = vmul.f32 %v2146, 0.5
      %v2151 = vmul.f32 %v2143, 0.044715
      %v2152 = vmul.f32 %v2144, 0.044715
      %v2153 = vmul.f32 %v2145, 0.044715
      %v2154 = vmul.f32 %v2146, 0.044715
      %v2155 = vmul.f32 %v2151, %v2143
      %v2156 = vmul.f32 %v2152, %v2144
      %v2157 = vmul.f32 %v2153, %v2145
      %v2158 = vmul.f32 %v2154, %v2146
      %v2159 = vmul.f32 %v2155, %v2143
      %v2160 = vmul.f32 %v2156, %v2144
      %v2161 = vmul.f32 %v2157, %v2145
      %v2162 = vmul.f32 %v2158, %v2146
      %v2163 = vadd.f32 %v2143, %v2159
      %v2164 = vadd.f32 %v2144, %v2160
      %v2165 = vadd.f32 %v2145, %v2161
      %v2166 = vadd.f32 %v2146, %v2162
      %v2167 = vmul.f32 %v2163, 0.7978846
      %v2168 = vmul.f32 %v2164, 0.7978846
      %v2169 = vmul.f32 %v2165, 0.7978846
      %v2170 = vmul.f32 %v2166, 0.7978846
      %v2171 = vtanh.pop %v2167
      %v2172 = vtanh.pop %v2168
      %v2173 = vtanh.pop %v2169
      %v2174 = vtanh.pop %v2170
      %v2175 = vadd.f32 %v2171, 1.0
      %v2176 = vadd.f32 %v2172, 1.0
      %v2177 = vadd.f32 %v2173, 1.0
      %v2178 = vadd.f32 %v2174, 1.0
      %v2179 = vmul.f32 %v2147, %v2175
      %v2180 = vmul.f32 %v2148, %v2176
      %v2181 = vmul.f32 %v2149, %v2177
      %v2182 = vmul.f32 %v2150, %v2178
      %v2183 = vld [vmem:[%s13] sm:$0xff]
      %v2184 = vld [vmem:[%s13 + $0x8] sm:$0xff]
      %v2185 = vld [vmem:[%s13 + $0x10] sm:$0xff]
      %v2186 = vld [vmem:[%s13 + $0x18] sm:$0xff]
      %2188 = vset.pattern.permute.xlu0 0
      %2189 = vperm.xlu0 %2188, %v2183
      %v2190 = vpop.permute.xlu0 %2189
      %2193 = vset.pattern.permute.xlu0 0
      %2194 = vperm.xlu0 %2193, %v2184
      %v2195 = vpop.permute.xlu0 %2194
      %2198 = vset.pattern.permute.xlu0 0
      %2199 = vperm.xlu0 %2198, %v2185
      %v2200 = vpop.permute.xlu0 %2199
      %2203 = vset.pattern.permute.xlu0 0
      %2204 = vperm.xlu0 %2203, %v2186
      %v2205 = vpop.permute.xlu0 %2204
      %v2207 = vlaneseq
      %v2208 = vshrl.u32 %v2207, 7
      %v2209 = vsub.s32 0, %v2208
      %v2210 = vrot.slane %v2179, %v2209
      %v2211 = vlaneseq
      %v2212 = vshrl.u32 %v2211, 7
      %v2213 = vsub.s32 0, %v2212
      %v2214 = vrot.slane %v2180, %v2213
      %v2215 = vmul.f32 %v2190, %v2210
      %v2216 = vmul.f32 %v2190, %v2214
      %v2217 = vmul.f32 %v2195, %v2210
      %v2218 = vmul.f32 %v2195, %v2214
      %v2219 = vmul.f32 %v2200, %v2210
      %v2220 = vmul.f32 %v2200, %v2214
      %v2221 = vmul.f32 %v2205, %v2210
      %v2222 = vmul.f32 %v2205, %v2214
      %2223 = vset.pattern.permute.xlu0 1
      %2224 = vperm.xlu0 %2223, %v2183
      %v2225 = vpop.permute.xlu0 %2224
      %2227 = vset.pattern.permute.xlu0 1
      %2228 = vperm.xlu0 %2227, %v2184
      %v2229 = vpop.permute.xlu0 %2228
      %2231 = vset.pattern.permute.xlu0 1
      %2232 = vperm.xlu0 %2231, %v2185
      %v2233 = vpop.permute.xlu0 %2232
      %2235 = vset.pattern.permute.xlu0 1
      %2236 = vperm.xlu0 %2235, %v2186
      %v2237 = vpop.permute.xlu0 %2236
      %v2239 = vlaneseq
      %v2240 = vshrl.u32 %v2239, 7
      %v2241 = vsub.s32 1, %v2240
      %v2242 = vrot.slane %v2179, %v2241
      %v2243 = vlaneseq
      %v2244 = vshrl.u32 %v2243, 7
      %v2245 = vsub.s32 1, %v2244
      %v2246 = vrot.slane %v2180, %v2245
      %v2247 = vmul.f32 %v2225, %v2242
      %v2248 = vmul.f32 %v2225, %v2246
      %v2249 = vmul.f32 %v2229, %v2242
      %v2250 = vmul.f32 %v2229, %v2246
      %v2251 = vmul.f32 %v2233, %v2242
      %v2252 = vmul.f32 %v2233, %v2246
      %v2253 = vmul.f32 %v2237, %v2242
      %v2254 = vmul.f32 %v2237, %v2246
      %v2255 = vadd.f32 %v2215, %v2247
      %v2256 = vadd.f32 %v2216, %v2248
      %v2257 = vadd.f32 %v2217, %v2249
      %v2258 = vadd.f32 %v2218, %v2250
      %v2259 = vadd.f32 %v2219, %v2251
      %v2260 = vadd.f32 %v2220, %v2252
      %v2261 = vadd.f32 %v2221, %v2253
      %v2262 = vadd.f32 %v2222, %v2254
      %2263 = vset.pattern.permute.xlu0 2
      %2264 = vperm.xlu0 %2263, %v2183
      %v2265 = vpop.permute.xlu0 %2264
      %2267 = vset.pattern.permute.xlu0 2
      %2268 = vperm.xlu0 %2267, %v2184
      %v2269 = vpop.permute.xlu0 %2268
      %2271 = vset.pattern.permute.xlu0 2
      %2272 = vperm.xlu0 %2271, %v2185
      %v2273 = vpop.permute.xlu0 %2272
      %2275 = vset.pattern.permute.xlu0 2
      %2276 = vperm.xlu0 %2275, %v2186
      %v2277 = vpop.permute.xlu0 %2276
      %v2279 = vlaneseq
      %v2280 = vshrl.u32 %v2279, 7
      %v2281 = vsub.s32 2, %v2280
      %v2282 = vrot.slane %v2179, %v2281
      %v2283 = vlaneseq
      %v2284 = vshrl.u32 %v2283, 7
      %v2285 = vsub.s32 2, %v2284
      %v2286 = vrot.slane %v2180, %v2285
      %v2287 = vmul.f32 %v2265, %v2282
      %v2288 = vmul.f32 %v2265, %v2286
      %v2289 = vmul.f32 %v2269, %v2282
      %v2290 = vmul.f32 %v2269, %v2286
      %v2291 = vmul.f32 %v2273, %v2282
      %v2292 = vmul.f32 %v2273, %v2286
      %v2293 = vmul.f32 %v2277, %v2282
      %v2294 = vmul.f32 %v2277, %v2286
      %v2295 = vadd.f32 %v2255, %v2287
      %v2296 = vadd.f32 %v2256, %v2288
      %v2297 = vadd.f32 %v2257, %v2289
      %v2298 = vadd.f32 %v2258, %v2290
      %v2299 = vadd.f32 %v2259, %v2291
      %v2300 = vadd.f32 %v2260, %v2292
      %v2301 = vadd.f32 %v2261, %v2293
      %v2302 = vadd.f32 %v2262, %v2294
      %2303 = vset.pattern.permute.xlu0 3
      %2304 = vperm.xlu0 %2303, %v2183
      %v2305 = vpop.permute.xlu0 %2304
      %2307 = vset.pattern.permute.xlu0 3
      %2308 = vperm.xlu0 %2307, %v2184
      %v2309 = vpop.permute.xlu0 %2308
      %2311 = vset.pattern.permute.xlu0 3
      %2312 = vperm.xlu0 %2311, %v2185
      %v2313 = vpop.permute.xlu0 %2312
      %2315 = vset.pattern.permute.xlu0 3
      %2316 = vperm.xlu0 %2315, %v2186
      %v2317 = vpop.permute.xlu0 %2316
      %v2319 = vlaneseq
      %v2320 = vshrl.u32 %v2319, 7
      %v2321 = vsub.s32 3, %v2320
      %v2322 = vrot.slane %v2179, %v2321
      %v2323 = vlaneseq
      %v2324 = vshrl.u32 %v2323, 7
      %v2325 = vsub.s32 3, %v2324
      %v2326 = vrot.slane %v2180, %v2325
      %v2327 = vmul.f32 %v2305, %v2322
      %v2328 = vmul.f32 %v2305, %v2326
      %v2329 = vmul.f32 %v2309, %v2322
      %v2330 = vmul.f32 %v2309, %v2326
      %v2331 = vmul.f32 %v2313, %v2322
      %v2332 = vmul.f32 %v2313, %v2326
      %v2333 = vmul.f32 %v2317, %v2322
      %v2334 = vmul.f32 %v2317, %v2326
      %v2335 = vadd.f32 %v2295, %v2327
      %v2336 = vadd.f32 %v2296, %v2328
      %v2337 = vadd.f32 %v2297, %v2329
      %v2338 = vadd.f32 %v2298, %v2330
      %v2339 = vadd.f32 %v2299, %v2331
      %v2340 = vadd.f32 %v2300, %v2332
      %v2341 = vadd.f32 %v2301, %v2333
      %v2342 = vadd.f32 %v2302, %v2334
      %2343 = vset.pattern.permute.xlu0 4
      %2344 = vperm.xlu0 %2343, %v2183
      %v2345 = vpop.permute.xlu0 %2344
      %2347 = vset.pattern.permute.xlu0 4
      %2348 = vperm.xlu0 %2347, %v2184
      %v2349 = vpop.permute.xlu0 %2348
      %2351 = vset.pattern.permute.xlu0 4
      %2352 = vperm.xlu0 %2351, %v2185
      %v2353 = vpop.permute.xlu0 %2352
      %2355 = vset.pattern.permute.xlu0 4
      %2356 = vperm.xlu0 %2355, %v2186
      %v2357 = vpop.permute.xlu0 %2356
      %v2359 = vlaneseq
      %v2360 = vshrl.u32 %v2359, 7
      %v2361 = vsub.s32 4, %v2360
      %v2362 = vrot.slane %v2179, %v2361
      %v2363 = vlaneseq
      %v2364 = vshrl.u32 %v2363, 7
      %v2365 = vsub.s32 4, %v2364
      %v2366 = vrot.slane %v2180, %v2365
      %v2367 = vmul.f32 %v2345, %v2362
      %v2368 = vmul.f32 %v2345, %v2366
      %v2369 = vmul.f32 %v2349, %v2362
      %v2370 = vmul.f32 %v2349, %v2366
      %v2371 = vmul.f32 %v2353, %v2362
      %v2372 = vmul.f32 %v2353, %v2366
      %v2373 = vmul.f32 %v2357, %v2362
      %v2374 = vmul.f32 %v2357, %v2366
      %v2375 = vadd.f32 %v2335, %v2367
      %v2376 = vadd.f32 %v2336, %v2368
      %v2377 = vadd.f32 %v2337, %v2369
      %v2378 = vadd.f32 %v2338, %v2370
      %v2379 = vadd.f32 %v2339, %v2371
      %v2380 = vadd.f32 %v2340, %v2372
      %v2381 = vadd.f32 %v2341, %v2373
      %v2382 = vadd.f32 %v2342, %v2374
      %2383 = vset.pattern.permute.xlu0 5
      %2384 = vperm.xlu0 %2383, %v2183
      %v2385 = vpop.permute.xlu0 %2384
      %2387 = vset.pattern.permute.xlu0 5
      %2388 = vperm.xlu0 %2387, %v2184
      %v2389 = vpop.permute.xlu0 %2388
      %2391 = vset.pattern.permute.xlu0 5
      %2392 = vperm.xlu0 %2391, %v2185
      %v2393 = vpop.permute.xlu0 %2392
      %2395 = vset.pattern.permute.xlu0 5
      %2396 = vperm.xlu0 %2395, %v2186
      %v2397 = vpop.permute.xlu0 %2396
      %v2399 = vlaneseq
      %v2400 = vshrl.u32 %v2399, 7
      %v2401 = vsub.s32 5, %v2400
      %v2402 = vrot.slane %v2179, %v2401
      %v2403 = vlaneseq
      %v2404 = vshrl.u32 %v2403, 7
      %v2405 = vsub.s32 5, %v2404
      %v2406 = vrot.slane %v2180, %v2405
      %v2407 = vmul.f32 %v2385, %v2402
      %v2408 = vmul.f32 %v2385, %v2406
      %v2409 = vmul.f32 %v2389, %v2402
      %v2410 = vmul.f32 %v2389, %v2406
      %v2411 = vmul.f32 %v2393, %v2402
      %v2412 = vmul.f32 %v2393, %v2406
      %v2413 = vmul.f32 %v2397, %v2402
      %v2414 = vmul.f32 %v2397, %v2406
      %v2415 = vadd.f32 %v2375, %v2407
      %v2416 = vadd.f32 %v2376, %v2408
      %v2417 = vadd.f32 %v2377, %v2409
      %v2418 = vadd.f32 %v2378, %v2410
      %v2419 = vadd.f32 %v2379, %v2411
      %v2420 = vadd.f32 %v2380, %v2412
      %v2421 = vadd.f32 %v2381, %v2413
      %v2422 = vadd.f32 %v2382, %v2414
      %2423 = vset.pattern.permute.xlu0 6
      %2424 = vperm.xlu0 %2423, %v2183
      %v2425 = vpop.permute.xlu0 %2424
      %2427 = vset.pattern.permute.xlu0 6
      %2428 = vperm.xlu0 %2427, %v2184
      %v2429 = vpop.permute.xlu0 %2428
      %2431 = vset.pattern.permute.xlu0 6
      %2432 = vperm.xlu0 %2431, %v2185
      %v2433 = vpop.permute.xlu0 %2432
      %2435 = vset.pattern.permute.xlu0 6
      %2436 = vperm.xlu0 %2435, %v2186
      %v2437 = vpop.permute.xlu0 %2436
      %v2439 = vlaneseq
      %v2440 = vshrl.u32 %v2439, 7
      %v2441 = vsub.s32 6, %v2440
      %v2442 = vrot.slane %v2179, %v2441
      %v2443 = vlaneseq
      %v2444 = vshrl.u32 %v2443, 7
      %v2445 = vsub.s32 6, %v2444
      %v2446 = vrot.slane %v2180, %v2445
      %v2447 = vmul.f32 %v2425, %v2442
      %v2448 = vmul.f32 %v2425, %v2446
      %v2449 = vmul.f32 %v2429, %v2442
      %v2450 = vmul.f32 %v2429, %v2446
      %v2451 = vmul.f32 %v2433, %v2442
      %v2452 = vmul.f32 %v2433, %v2446
      %v2453 = vmul.f32 %v2437, %v2442
      %v2454 = vmul.f32 %v2437, %v2446
      %v2455 = vadd.f32 %v2415, %v2447
      %v2456 = vadd.f32 %v2416, %v2448
      %v2457 = vadd.f32 %v2417, %v2449
      %v2458 = vadd.f32 %v2418, %v2450
      %v2459 = vadd.f32 %v2419, %v2451
      %v2460 = vadd.f32 %v2420, %v2452
      %v2461 = vadd.f32 %v2421, %v2453
      %v2462 = vadd.f32 %v2422, %v2454
      %2463 = vset.pattern.permute.xlu0 7
      %2464 = vperm.xlu0 %2463, %v2183
      %v2465 = vpop.permute.xlu0 %2464
      %2467 = vset.pattern.permute.xlu0 7
      %2468 = vperm.xlu0 %2467, %v2184
      %v2469 = vpop.permute.xlu0 %2468
      %2471 = vset.pattern.permute.xlu0 7
      %2472 = vperm.xlu0 %2471, %v2185
      %v2473 = vpop.permute.xlu0 %2472
      %2475 = vset.pattern.permute.xlu0 7
      %2476 = vperm.xlu0 %2475, %v2186
      %v2477 = vpop.permute.xlu0 %2476
      %v2479 = vlaneseq
      %v2480 = vshrl.u32 %v2479, 7
      %v2481 = vsub.s32 7, %v2480
      %v2482 = vrot.slane %v2179, %v2481
      %v2483 = vlaneseq
      %v2484 = vshrl.u32 %v2483, 7
      %v2485 = vsub.s32 7, %v2484
      %v2486 = vrot.slane %v2180, %v2485
      %v2487 = vmul.f32 %v2465, %v2482
      %v2488 = vmul.f32 %v2465, %v2486
      %v2489 = vmul.f32 %v2469, %v2482
      %v2490 = vmul.f32 %v2469, %v2486
      %v2491 = vmul.f32 %v2473, %v2482
      %v2492 = vmul.f32 %v2473, %v2486
      %v2493 = vmul.f32 %v2477, %v2482
      %v2494 = vmul.f32 %v2477, %v2486
      %v2495 = vadd.f32 %v2455, %v2487
      %v2496 = vadd.f32 %v2456, %v2488
      %v2497 = vadd.f32 %v2457, %v2489
      %v2498 = vadd.f32 %v2458, %v2490
      %v2499 = vadd.f32 %v2459, %v2491
      %v2500 = vadd.f32 %v2460, %v2492
      %v2501 = vadd.f32 %v2461, %v2493
      %v2502 = vadd.f32 %v2462, %v2494
      %2503 = vset.pattern.permute.xlu0 8
      %2504 = vperm.xlu0 %2503, %v2183
      %v2505 = vpop.permute.xlu0 %2504
      %2507 = vset.pattern.permute.xlu0 8
      %2508 = vperm.xlu0 %2507, %v2184
      %v2509 = vpop.permute.xlu0 %2508
      %2511 = vset.pattern.permute.xlu0 8
      %2512 = vperm.xlu0 %2511, %v2185
      %v2513 = vpop.permute.xlu0 %2512
      %2515 = vset.pattern.permute.xlu0 8
      %2516 = vperm.xlu0 %2515, %v2186
      %v2517 = vpop.permute.xlu0 %2516
      %v2519 = vlaneseq
      %v2520 = vshrl.u32 %v2519, 7
      %v2521 = vsub.s32 0, %v2520
      %v2522 = vrot.slane %v2181, %v2521
      %v2523 = vlaneseq
      %v2524 = vshrl.u32 %v2523, 7
      %v2525 = vsub.s32 0, %v2524
      %v2526 = vrot.slane %v2182, %v2525
      %v2527 = vmul.f32 %v2505, %v2522
      %v2528 = vmul.f32 %v2505, %v2526
      %v2529 = vmul.f32 %v2509, %v2522
      %v2530 = vmul.f32 %v2509, %v2526
      %v2531 = vmul.f32 %v2513, %v2522
      %v2532 = vmul.f32 %v2513, %v2526
      %v2533 = vmul.f32 %v2517, %v2522
      %v2534 = vmul.f32 %v2517, %v2526
      %v2535 = vadd.f32 %v2495, %v2527
      %v2536 = vadd.f32 %v2496, %v2528
      %v2537 = vadd.f32 %v2497, %v2529
      %v2538 = vadd.f32 %v2498, %v2530
      %v2539 = vadd.f32 %v2499, %v2531
      %v2540 = vadd.f32 %v2500, %v2532
      %v2541 = vadd.f32 %v2501, %v2533
      %v2542 = vadd.f32 %v2502, %v2534
      %2543 = vset.pattern.permute.xlu0 9
      %2544 = vperm.xlu0 %2543, %v2183
      %v2545 = vpop.permute.xlu0 %2544
      %2547 = vset.pattern.permute.xlu0 9
      %2548 = vperm.xlu0 %2547, %v2184
      %v2549 = vpop.permute.xlu0 %2548
      %2551 = vset.pattern.permute.xlu0 9
      %2552 = vperm.xlu0 %2551, %v2185
      %v2553 = vpop.permute.xlu0 %2552
      %2555 = vset.pattern.permute.xlu0 9
      %2556 = vperm.xlu0 %2555, %v2186
      %v2557 = vpop.permute.xlu0 %2556
      %v2559 = vlaneseq
      %v2560 = vshrl.u32 %v2559, 7
      %v2561 = vsub.s32 1, %v2560
      %v2562 = vrot.slane %v2181, %v2561
      %v2563 = vlaneseq
      %v2564 = vshrl.u32 %v2563, 7
      %v2565 = vsub.s32 1, %v2564
      %v2566 = vrot.slane %v2182, %v2565
      %v2567 = vmul.f32 %v2545, %v2562
      %v2568 = vmul.f32 %v2545, %v2566
      %v2569 = vmul.f32 %v2549, %v2562
      %v2570 = vmul.f32 %v2549, %v2566
      %v2571 = vmul.f32 %v2553, %v2562
      %v2572 = vmul.f32 %v2553, %v2566
      %v2573 = vmul.f32 %v2557, %v2562
      %v2574 = vmul.f32 %v2557, %v2566
      %v2575 = vadd.f32 %v2535, %v2567
      %v2576 = vadd.f32 %v2536, %v2568
      %v2577 = vadd.f32 %v2537, %v2569
      %v2578 = vadd.f32 %v2538, %v2570
      %v2579 = vadd.f32 %v2539, %v2571
      %v2580 = vadd.f32 %v2540, %v2572
      %v2581 = vadd.f32 %v2541, %v2573
      %v2582 = vadd.f32 %v2542, %v2574
      %2583 = vset.pattern.permute.xlu0 10
      %2584 = vperm.xlu0 %2583, %v2183
      %v2585 = vpop.permute.xlu0 %2584
      %2587 = vset.pattern.permute.xlu0 10
      %2588 = vperm.xlu0 %2587, %v2184
      %v2589 = vpop.permute.xlu0 %2588
      %2591 = vset.pattern.permute.xlu0 10
      %2592 = vperm.xlu0 %2591, %v2185
      %v2593 = vpop.permute.xlu0 %2592
      %2595 = vset.pattern.permute.xlu0 10
      %2596 = vperm.xlu0 %2595, %v2186
      %v2597 = vpop.permute.xlu0 %2596
      %v2599 = vlaneseq
      %v2600 = vshrl.u32 %v2599, 7
      %v2601 = vsub.s32 2, %v2600
      %v2602 = vrot.slane %v2181, %v2601
      %v2603 = vlaneseq
      %v2604 = vshrl.u32 %v2603, 7
      %v2605 = vsub.s32 2, %v2604
      %v2606 = vrot.slane %v2182, %v2605
      %v2607 = vmul.f32 %v2585, %v2602
      %v2608 = vmul.f32 %v2585, %v2606
      %v2609 = vmul.f32 %v2589, %v2602
      %v2610 = vmul.f32 %v2589, %v2606
      %v2611 = vmul.f32 %v2593, %v2602
      %v2612 = vmul.f32 %v2593, %v2606
      %v2613 = vmul.f32 %v2597, %v2602
      %v2614 = vmul.f32 %v2597, %v2606
      %v2615 = vadd.f32 %v2575, %v2607
      %v2616 = vadd.f32 %v2576, %v2608
      %v2617 = vadd.f32 %v2577, %v2609
      %v2618 = vadd.f32 %v2578, %v2610
      %v2619 = vadd.f32 %v2579, %v2611
      %v2620 = vadd.f32 %v2580, %v2612
      %v2621 = vadd.f32 %v2581, %v2613
      %v2622 = vadd.f32 %v2582, %v2614
      %2623 = vset.pattern.permute.xlu0 11
      %2624 = vperm.xlu0 %2623, %v2183
      %v2625 = vpop.permute.xlu0 %2624
      %2627 = vset.pattern.permute.xlu0 11
      %2628 = vperm.xlu0 %2627, %v2184
      %v2629 = vpop.permute.xlu0 %2628
      %2631 = vset.pattern.permute.xlu0 11
      %2632 = vperm.xlu0 %2631, %v2185
      %v2633 = vpop.permute.xlu0 %2632
      %2635 = vset.pattern.permute.xlu0 11
      %2636 = vperm.xlu0 %2635, %v2186
      %v2637 = vpop.permute.xlu0 %2636
      %v2639 = vlaneseq
      %v2640 = vshrl.u32 %v2639, 7
      %v2641 = vsub.s32 3, %v2640
      %v2642 = vrot.slane %v2181, %v2641
      %v2643 = vlaneseq
      %v2644 = vshrl.u32 %v2643, 7
      %v2645 = vsub.s32 3, %v2644
      %v2646 = vrot.slane %v2182, %v2645
      %v2647 = vmul.f32 %v2625, %v2642
      %v2648 = vmul.f32 %v2625, %v2646
      %v2649 = vmul.f32 %v2629, %v2642
      %v2650 = vmul.f32 %v2629, %v2646
      %v2651 = vmul.f32 %v2633, %v2642
      %v2652 = vmul.f32 %v2633, %v2646
      %v2653 = vmul.f32 %v2637, %v2642
      %v2654 = vmul.f32 %v2637, %v2646
      %v2655 = vadd.f32 %v2615, %v2647
      %v2656 = vadd.f32 %v2616, %v2648
      %v2657 = vadd.f32 %v2617, %v2649
      %v2658 = vadd.f32 %v2618, %v2650
      %v2659 = vadd.f32 %v2619, %v2651
      %v2660 = vadd.f32 %v2620, %v2652
      %v2661 = vadd.f32 %v2621, %v2653
      %v2662 = vadd.f32 %v2622, %v2654
      %2663 = vset.pattern.permute.xlu0 12
      %2664 = vperm.xlu0 %2663, %v2183
      %v2665 = vpop.permute.xlu0 %2664
      %2667 = vset.pattern.permute.xlu0 12
      %2668 = vperm.xlu0 %2667, %v2184
      %v2669 = vpop.permute.xlu0 %2668
      %2671 = vset.pattern.permute.xlu0 12
      %2672 = vperm.xlu0 %2671, %v2185
      %v2673 = vpop.permute.xlu0 %2672
      %2675 = vset.pattern.permute.xlu0 12
      %2676 = vperm.xlu0 %2675, %v2186
      %v2677 = vpop.permute.xlu0 %2676
      %v2679 = vlaneseq
      %v2680 = vshrl.u32 %v2679, 7
      %v2681 = vsub.s32 4, %v2680
      %v2682 = vrot.slane %v2181, %v2681
      %v2683 = vlaneseq
      %v2684 = vshrl.u32 %v2683, 7
      %v2685 = vsub.s32 4, %v2684
      %v2686 = vrot.slane %v2182, %v2685
      %v2687 = vmul.f32 %v2665, %v2682
      %v2688 = vmul.f32 %v2665, %v2686
      %v2689 = vmul.f32 %v2669, %v2682
      %v2690 = vmul.f32 %v2669, %v2686
      %v2691 = vmul.f32 %v2673, %v2682
      %v2692 = vmul.f32 %v2673, %v2686
      %v2693 = vmul.f32 %v2677, %v2682
      %v2694 = vmul.f32 %v2677, %v2686
      %v2695 = vadd.f32 %v2655, %v2687
      %v2696 = vadd.f32 %v2656, %v2688
      %v2697 = vadd.f32 %v2657, %v2689
      %v2698 = vadd.f32 %v2658, %v2690
      %v2699 = vadd.f32 %v2659, %v2691
      %v2700 = vadd.f32 %v2660, %v2692
      %v2701 = vadd.f32 %v2661, %v2693
      %v2702 = vadd.f32 %v2662, %v2694
      %2703 = vset.pattern.permute.xlu0 13
      %2704 = vperm.xlu0 %2703, %v2183
      %v2705 = vpop.permute.xlu0 %2704
      %2707 = vset.pattern.permute.xlu0 13
      %2708 = vperm.xlu0 %2707, %v2184
      %v2709 = vpop.permute.xlu0 %2708
      %2711 = vset.pattern.permute.xlu0 13
      %2712 = vperm.xlu0 %2711, %v2185
      %v2713 = vpop.permute.xlu0 %2712
      %2715 = vset.pattern.permute.xlu0 13
      %2716 = vperm.xlu0 %2715, %v2186
      %v2717 = vpop.permute.xlu0 %2716
      %v2719 = vlaneseq
      %v2720 = vshrl.u32 %v2719, 7
      %v2721 = vsub.s32 5, %v2720
      %v2722 = vrot.slane %v2181, %v2721
      %v2723 = vlaneseq
      %v2724 = vshrl.u32 %v2723, 7
      %v2725 = vsub.s32 5, %v2724
      %v2726 = vrot.slane %v2182, %v2725
      %v2727 = vmul.f32 %v2705, %v2722
      %v2728 = vmul.f32 %v2705, %v2726
      %v2729 = vmul.f32 %v2709, %v2722
      %v2730 = vmul.f32 %v2709, %v2726
      %v2731 = vmul.f32 %v2713, %v2722
      %v2732 = vmul.f32 %v2713, %v2726
      %v2733 = vmul.f32 %v2717, %v2722
      %v2734 = vmul.f32 %v2717, %v2726
      %v2735 = vadd.f32 %v2695, %v2727
      %v2736 = vadd.f32 %v2696, %v2728
      %v2737 = vadd.f32 %v2697, %v2729
      %v2738 = vadd.f32 %v2698, %v2730
      %v2739 = vadd.f32 %v2699, %v2731
      %v2740 = vadd.f32 %v2700, %v2732
      %v2741 = vadd.f32 %v2701, %v2733
      %v2742 = vadd.f32 %v2702, %v2734
      %2743 = vset.pattern.permute.xlu0 14
      %2744 = vperm.xlu0 %2743, %v2183
      %v2745 = vpop.permute.xlu0 %2744
      %2747 = vset.pattern.permute.xlu0 14
      %2748 = vperm.xlu0 %2747, %v2184
      %v2749 = vpop.permute.xlu0 %2748
      %2751 = vset.pattern.permute.xlu0 14
      %2752 = vperm.xlu0 %2751, %v2185
      %v2753 = vpop.permute.xlu0 %2752
      %2755 = vset.pattern.permute.xlu0 14
      %2756 = vperm.xlu0 %2755, %v2186
      %v2757 = vpop.permute.xlu0 %2756
      %v2759 = vlaneseq
      %v2760 = vshrl.u32 %v2759, 7
      %v2761 = vsub.s32 6, %v2760
      %v2762 = vrot.slane %v2181, %v2761
      %v2763 = vlaneseq
      %v2764 = vshrl.u32 %v2763, 7
      %v2765 = vsub.s32 6, %v2764
      %v2766 = vrot.slane %v2182, %v2765
      %v2767 = vmul.f32 %v2745, %v2762
      %v2768 = vmul.f32 %v2745, %v2766
      %v2769 = vmul.f32 %v2749, %v2762
      %v2770 = vmul.f32 %v2749, %v2766
      %v2771 = vmul.f32 %v2753, %v2762
      %v2772 = vmul.f32 %v2753, %v2766
      %v2773 = vmul.f32 %v2757, %v2762
      %v2774 = vmul.f32 %v2757, %v2766
      %v2775 = vadd.f32 %v2735, %v2767
      %v2776 = vadd.f32 %v2736, %v2768
      %v2777 = vadd.f32 %v2737, %v2769
      %v2778 = vadd.f32 %v2738, %v2770
      %v2779 = vadd.f32 %v2739, %v2771
      %v2780 = vadd.f32 %v2740, %v2772
      %v2781 = vadd.f32 %v2741, %v2773
      %v2782 = vadd.f32 %v2742, %v2774
      %2783 = vset.pattern.permute.xlu0 15
      %2784 = vperm.xlu0 %2783, %v2183
      %v2785 = vpop.permute.xlu0 %2784
      %2787 = vset.pattern.permute.xlu0 15
      %2788 = vperm.xlu0 %2787, %v2184
      %v2789 = vpop.permute.xlu0 %2788
      %2791 = vset.pattern.permute.xlu0 15
      %2792 = vperm.xlu0 %2791, %v2185
      %v2793 = vpop.permute.xlu0 %2792
      %2795 = vset.pattern.permute.xlu0 15
      %2796 = vperm.xlu0 %2795, %v2186
      %v2797 = vpop.permute.xlu0 %2796
      %v2799 = vlaneseq
      %v2800 = vshrl.u32 %v2799, 7
      %v2801 = vsub.s32 7, %v2800
      %v2802 = vrot.slane %v2181, %v2801
      %v2803 = vlaneseq
      %v2804 = vshrl.u32 %v2803, 7
      %v2805 = vsub.s32 7, %v2804
      %v2806 = vrot.slane %v2182, %v2805
      %v2807 = vmul.f32 %v2785, %v2802
      %v2808 = vmul.f32 %v2785, %v2806
      %v2809 = vmul.f32 %v2789, %v2802
      %v2810 = vmul.f32 %v2789, %v2806
      %v2811 = vmul.f32 %v2793, %v2802
      %v2812 = vmul.f32 %v2793, %v2806
      %v2813 = vmul.f32 %v2797, %v2802
      %v2814 = vmul.f32 %v2797, %v2806
      %v2815 = vadd.f32 %v2775, %v2807
      %v2816 = vadd.f32 %v2776, %v2808
      %v2817 = vadd.f32 %v2777, %v2809
      %v2818 = vadd.f32 %v2778, %v2810
      %v2819 = vadd.f32 %v2779, %v2811
      %v2820 = vadd.f32 %v2780, %v2812
      %v2821 = vadd.f32 %v2781, %v2813
      %v2822 = vadd.f32 %v2782, %v2814
      %v2823 = vld [vmem:[%s14] sm:$0xff]
      %v2824 = vld [vmem:[%s14 + $0x8] sm:$0xff]
      %v2825 = vld [vmem:[%s14 + $0x10] sm:$0xff]
      %v2826 = vld [vmem:[%s14 + $0x18] sm:$0xff]
      %2828 = vset.pattern.permute.xlu0 0
      %2829 = vperm.xlu0 %2828, %v2823
      %v2830 = vpop.permute.xlu0 %2829
      %2833 = vset.pattern.permute.xlu0 0
      %2834 = vperm.xlu0 %2833, %v2824
      %v2835 = vpop.permute.xlu0 %2834
      %2838 = vset.pattern.permute.xlu0 0
      %2839 = vperm.xlu0 %2838, %v2825
      %v2840 = vpop.permute.xlu0 %2839
      %2843 = vset.pattern.permute.xlu0 0
      %2844 = vperm.xlu0 %2843, %v2826
      %v2845 = vpop.permute.xlu0 %2844
      %v2847 = vadd.f32 %v2815, %v2830
      %v2848 = vadd.f32 %v2816, %v2830
      %v2849 = vadd.f32 %v2817, %v2835
      %v2850 = vadd.f32 %v2818, %v2835
      %v2851 = vadd.f32 %v2819, %v2840
      %v2852 = vadd.f32 %v2820, %v2840
      %v2853 = vadd.f32 %v2821, %v2845
      %v2854 = vadd.f32 %v2822, %v2845
      %2855 = vst [vmem:[%s574] sm:$0xff] %v2847
      %2856 = vst [vmem:[%s574 + $0x8] sm:$0xff] %v2848
      %2857 = vst [vmem:[%s574 + $0x10] sm:$0xff] %v2849
      %2858 = vst [vmem:[%s574 + $0x18] sm:$0xff] %v2850
      %2859 = vst [vmem:[%s574 + $0x20] sm:$0xff] %v2851
      %2860 = vst [vmem:[%s574 + $0x28] sm:$0xff] %v2852
      %2861 = vst [vmem:[%s574 + $0x30] sm:$0xff] %v2853
      %2862 = vst [vmem:[%s574 + $0x38] sm:$0xff] %v2854
      %p2863 = scmp.lt.s32.totalorder %s28, 1
      %s2864 = scalar_select %p2863, %s28, 1
      %s2865 = smul.addr %s2864, 2
      %s2866 = smul.addr %s2865, 8
      %s2867 = scalar_lea.vmem %s15, %s2866
      %p2868 = scmp.lt.s32.totalorder %s28, 1
      %s2869 = scalar_select %p2868, %s28, 1
      %s2870 = smul.addr %s2869, 8
      %s2871 = smul.addr %s2870, 8
      %s2872 = scalar_lea.vmem %s16, %s2871
      // Predicated region
      $region81: #{_lambda_.1} parent=79 // pred_check
        %p2873 = pneg %p376
      $region82: #{_lambda_.1} parent=79 // pred_check_branch
        %2875 = sbr.rel (%p2873) target = $region84
      $region83: #{_lambda_.1} parent=79 // pred_region
        _
      $region84: #{_lambda_.1} parent=79 // pred_fallthru
        _
      // Predicated region
      $region85: #{_lambda_.1} parent=79 // pred_check
        %p2876 = pneg %p402
      $region86: #{_lambda_.1} parent=79 // pred_check_branch
        %2878 = sbr.rel (%p2876) target = $region88
      $region87: #{_lambda_.1} parent=79 // pred_region
        _
      $region88: #{_lambda_.1} parent=79 // pred_fallthru
        _
    $region80: #{_lambda_.1} parent=5 // pred_fallthru
      _
    %p2879 = scmp.le.s32.totalorder 2, %s23
    // Predicated region
    $region89: #{_lambda_.1} parent=5 // pred_check
      %p2880 = pneg %p2879
    $region90: #{_lambda_.1} parent=5 // pred_check_branch
      %2882 = sbr.rel (%p2880) target = $region92
    $region91: #{_lambda_.1} parent=5 // pred_region
      %s2883 = ssub.s32 %s23, 2
      // Predicated region
      $region93: #{_lambda_.1} parent=91 // pred_check
        %p2884 = pneg %p382
      $region94: #{_lambda_.1} parent=91 // pred_check_branch
        %2886 = sbr.rel (%p2884) target = $region96
      $region95: #{_lambda_.1} parent=91 // pred_region
        %p2887 = scmp.lt.s32.totalorder %s29, 1
        %s2888 = scalar_select %p2887, %s29, 1
        %s2889 = smul.addr %s2888, 2
        %s2890 = smul.addr %s2889, 8
        %s2891 = scalar_lea.vmem %s15, %s2890
      $region96: #{_lambda_.1} parent=91 // pred_fallthru
        _
      // Predicated region
      $region97: #{_lambda_.1} parent=91 // pred_check
        %p2892 = pneg %p408
      $region98: #{_lambda_.1} parent=91 // pred_check_branch
        %2894 = sbr.rel (%p2892) target = $region100
      $region99: #{_lambda_.1} parent=91 // pred_region
        %p2895 = scmp.lt.s32.totalorder %s29, 1
        %s2896 = scalar_select %p2895, %s29, 1
        %s2897 = smul.addr %s2896, 8
        %s2898 = smul.addr %s2897, 8
        %s2899 = scalar_lea.vmem %s16, %s2898
      $region100: #{_lambda_.1} parent=91 // pred_fallthru
        _
    $region92: #{_lambda_.1} parent=5 // pred_fallthru
      _
  $region6: #{_lambda_.1} parent=0 // loop_footer
    %s27 = sadd.s32 1, %s23
  $region7: #{_lambda_.1} parent=0 // loop_footer_branch
    %22 = sbr.rel target = $region3
  $region8: #{_lambda_.1} parent=0 // loop_exit
    _

</llo_original>
